<compile_context>
chip_gen: v7x
topology: tpu7x:2x2x1
jax: 0.10.0
libtpu: 0.0.40
codegen_flags: <defaults>
</compile_context>

<pallas_src>
import functools
import math
from collections import namedtuple

import jax
import jax.numpy as jnp
from jax.experimental import pallas as pl
from jax.experimental.pallas import tpu as pltpu


COMPUTE_DTYPE = jnp.bfloat16          # weights + MXU inputs; f32 accumulation
NEG_INF = -1e9


# ----------------------------------------------------------------------------
# small helpers (traced inside kernels)
# ----------------------------------------------------------------------------

def _gelu(x):
    c = math.sqrt(2.0 / math.pi)
    return 0.5 * x * (1.0 + jnp.tanh(c * (x + 0.044715 * x * x * x)))


def _layernorm(y, g, b, eps):
    mean = jnp.mean(y, axis=-1, keepdims=True)
    var = jnp.mean(jnp.square(y - mean), axis=-1, keepdims=True)
    yn = (y - mean) * jax.lax.rsqrt(var + eps)
    return yn * g + b


def _const_spec(a):
    # Weight / bias block: same block for every grid step (resident in VMEM).
    # TODO(synk): on v7x at production sizes pass pipeline_mode=pl.Buffered(1)
    # so constant-index weight tiles are single-buffered (saves scoped VMEM).
    nd = a.ndim
    return pl.BlockSpec(a.shape, lambda b: (0,) * nd)


# ----------------------------------------------------------------------------
# fused transformer layer (per-batch): QKV + MHA + out-proj + LN1 + FFN + LN2
# ----------------------------------------------------------------------------

def _transformer_layer_body(x_ref, bias_ref, qkv_w, qkv_b, o_w, o_b,
                            ln1_g, ln1_b, ff1_w, ff1_b, ff2_w, ff2_b,
                            ln2_g, ln2_b, *, num_heads, eps):
    x = x_ref[0]                                       # (S, D) bf16
    S, D = x.shape
    hd = D // num_heads
    scale = 1.0 / math.sqrt(hd)
    mx = qkv_w.dtype                                   # MXU input dtype (bf16)
    bias = bias_ref[0].astype(jnp.float32)             # (1, S) key-padding bias

    # fused QKV projection: one (D, 3D) MXU push, f32 accumulate
    qkv = jnp.dot(x, qkv_w[...], preferred_element_type=jnp.float32)
    qkv = qkv + qkv_b[...].astype(jnp.float32)         # (S, 3D) f32

    # head-major split (relayouts done in f32), heads batched into one einsum
    q = jnp.transpose(qkv[:, :D].reshape(S, num_heads, hd), (1, 0, 2))
    k = jnp.transpose(qkv[:, D:2 * D].reshape(S, num_heads, hd), (1, 0, 2))
    v = jnp.transpose(qkv[:, 2 * D:].reshape(S, num_heads, hd), (1, 0, 2))

    s = jnp.einsum("hqd,hkd->hqk", q.astype(mx), k.astype(mx),
                   preferred_element_type=jnp.float32)      # (H, S, S) f32
    s = s * scale + bias                                    # bias over keys
    m = jnp.max(s, axis=-1, keepdims=True)
    p = jnp.exp(s - m)
    denom = jnp.sum(p, axis=-1, keepdims=True)
    attn = p * pl.reciprocal(denom, approx=True)             # stays in VMEM

    ctx = jnp.einsum("hqk,hkd->hqd", attn.astype(mx), v.astype(mx),
                     preferred_element_type=jnp.float32)     # (H, S, hd) f32
    ctx = jnp.transpose(ctx, (1, 0, 2)).reshape(S, D)        # (S, D) f32

    # out-projection + residual + LayerNorm1 (elementwise in f32)
    proj = jnp.dot(ctx.astype(mx), o_w[...], preferred_element_type=jnp.float32)
    proj = proj + o_b[...].astype(jnp.float32)
    y = _layernorm(x.astype(jnp.float32) + proj, ln1_g[...], ln1_b[...], eps)

    # FFN (GELU) + residual + LayerNorm2
    h = jnp.dot(y.astype(mx), ff1_w[...], preferred_element_type=jnp.float32)
    h = _gelu(h + ff1_b[...].astype(jnp.float32))
    h = jnp.dot(h.astype(mx), ff2_w[...], preferred_element_type=jnp.float32)
    h = h + ff2_b[...].astype(jnp.float32)
    z = _layernorm(y + h, ln2_g[...], ln2_b[...], eps)
    return z                                                 # (S, D) f32


def _layer_kernel(x_ref, bias_ref, *refs, num_heads, eps):
    o_ref = refs[-1]
    z = _transformer_layer_body(x_ref, bias_ref, *refs[:-1],
                                num_heads=num_heads, eps=eps)
    o_ref[0] = z.astype(o_ref.dtype)


def _layer_out_kernel(x_ref, bias_ref, mask_ref, *refs, num_heads, eps,
                      num_out_layers):
    o_ref = refs[-1]
    layer_refs = refs[:12]
    out_refs = refs[12:-1]
    z = _transformer_layer_body(x_ref, bias_ref, *layer_refs,
                                num_heads=num_heads, eps=eps)
    h = z                                                    # (S, D) f32
    for i in range(num_out_layers):
        w, b = out_refs[2 * i], out_refs[2 * i + 1]
        h32 = jnp.dot(h.astype(w.dtype), w[...],
                      preferred_element_type=jnp.float32)
        h32 = h32 + b[...].astype(jnp.float32)
        h = jnp.maximum(h32, 0.0) if i < num_out_layers - 1 else h32
    out = h * mask_ref[0].astype(jnp.float32)                # zero padded rows
    o_ref[0] = out.astype(o_ref.dtype)


LAYER_KEYS = ("qkv_w", "qkv_b", "o_w", "o_b", "ln1_g", "ln1_b",
              "ff1_w", "ff1_b", "ff2_w", "ff2_b", "ln2_g", "ln2_b")


def pallas_transformer_layer(x, attn_bias, lp, *, num_heads, eps=1e-5):
    B, S, D = x.shape
    weights = [lp[k] for k in LAYER_KEYS]
    in_specs = ([pl.BlockSpec((1, S, D), lambda b: (b, 0, 0)),
                 pl.BlockSpec((1, 1, S), lambda b: (b, 0, 0))]
                + [_const_spec(a) for a in weights])
    return pl.pallas_call(
        functools.partial(_layer_kernel, num_heads=num_heads, eps=eps),
        out_shape=jax.ShapeDtypeStruct((B, S, D), x.dtype),
        grid=(B,),
        in_specs=in_specs,
        out_specs=pl.BlockSpec((1, S, D), lambda b: (b, 0, 0)),
        compiler_params=pltpu.CompilerParams(dimension_semantics=("parallel",)),
    )(x, attn_bias, *weights)


def pallas_transformer_layer_with_output(x, attn_bias, row_mask, lp, out_layers,
                                         *, num_heads, eps=1e-5):
    """Last layer fused with the output MLP + `z * full_mask` row masking."""
    B, S, D = x.shape
    n_out = out_layers[-1][0].shape[1]
    weights = [lp[k] for k in LAYER_KEYS]
    out_wb = [a for wb in out_layers for a in wb]
    in_specs = ([pl.BlockSpec((1, S, D), lambda b: (b, 0, 0)),
                 pl.BlockSpec((1, 1, S), lambda b: (b, 0, 0)),
                 pl.BlockSpec((1, S, 1), lambda b: (b, 0, 0))]
                + [_const_spec(a) for a in weights]
                + [_const_spec(a) for a in out_wb])
    return pl.pallas_call(
        functools.partial(_layer_out_kernel, num_heads=num_heads, eps=eps,
                          num_out_layers=len(out_layers)),
        out_shape=jax.ShapeDtypeStruct((B, S, n_out), jnp.float32),
        grid=(B,),
        in_specs=in_specs,
        out_specs=pl.BlockSpec((1, S, n_out), lambda b: (b, 0, 0)),
        compiler_params=pltpu.CompilerParams(dimension_semantics=("parallel",)),
    )(x, attn_bias, row_mask, *weights, *out_wb)


# ----------------------------------------------------------------------------
# FiLM MLP (per-batch fused kernel)
# ----------------------------------------------------------------------------

def _film_kernel(seeds_ref, latent_ref, *refs, num_hidden):
    o_ref = refs[-1]
    wr = refs[:-1]
    h = seeds_ref[...]                                 # (S, n_in) bf16
    lat = latent_ref[0]                                # (1, latent_dim) bf16
    idx = 0
    for _ in range(num_hidden):
        w, b, fw, fb = wr[idx], wr[idx + 1], wr[idx + 2], wr[idx + 3]
        idx += 4
        h32 = jnp.dot(h, w[...], preferred_element_type=jnp.float32)
        h32 = h32 + b[...].astype(jnp.float32)
        # FiLM conditioning from ONE latent row (latent repeated over S in ref)
        gb = jnp.dot(lat, fw[...], preferred_element_type=jnp.float32)
        gb = gb + fb[...].astype(jnp.float32)          # (1, 2*width) f32
        width = h32.shape[-1]
        h32 = jnp.maximum(gb[:, :width] * h32 + gb[:, width:], 0.0)
        h = h32.astype(seeds_ref.dtype)                # cast only at MXU input
    w, b = wr[idx], wr[idx + 1]
    out = jnp.dot(h, w[...], preferred_element_type=jnp.float32)
    out = out + b[...].astype(jnp.float32)
    o_ref[0] = out.astype(o_ref.dtype)


def pallas_film_mlp(seeds, latent3, film_params, out_dtype=COMPUTE_DTYPE):
    S, n_in = seeds.shape
    B = latent3.shape[0]
    ld = latent3.shape[2]
    hidden = film_params["hidden"]
    wf, bf = film_params["final"]
    d_out = wf.shape[1]
    args = [seeds, latent3]
    in_specs = [pl.BlockSpec((S, n_in), lambda b: (0, 0)),
                pl.BlockSpec((1, 1, ld), lambda b: (b, 0, 0))]
    for wb in hidden:
        for a in wb:
            args.append(a)
            in_specs.append(_const_spec(a))
    for a in (wf, bf):
        args.append(a)
        in_specs.append(_const_spec(a))
    return pl.pallas_call(
        functools.partial(_film_kernel, num_hidden=len(hidden)),
        out_shape=jax.ShapeDtypeStruct((B, S, d_out), out_dtype),
        grid=(B,),
        in_specs=in_specs,
        out_specs=pl.BlockSpec((1, S, d_out), lambda b: (b, 0, 0)),
        compiler_params=pltpu.CompilerParams(dimension_semantics=("parallel",)),
    )(*args)


# ----------------------------------------------------------------------------
# Parameters (deterministic, synthetic) — arrays only
# ----------------------------------------------------------------------------

Config = namedtuple("Config", [
    "n_in", "latent_dim", "fc_dim", "num_heads", "num_layers", "n_out",
    "n_out_lin", "n_hidden", "num_layers_lin", "last_mlp_width",
    "last_mlp_layers", "n_max"])


def _dense(key, din, dout):
    scale = 1.0 / math.sqrt(din)
    w = (jax.random.normal(key, (din, dout), jnp.float32) * scale)
    return w.astype(COMPUTE_DTYPE), jnp.zeros((1, dout), COMPUTE_DTYPE)


def init_params(key, cfg):
    keys = iter(jax.random.split(key, 64))
    p = {}
    # set_generator: learned seed set shared across the batch (see TODO)
    p["gen_seeds"] = (jax.random.normal(next(keys), (cfg.n_max, cfg.n_in),
                                        jnp.float32) * 0.5).astype(COMPUTE_DTYPE)
    # FiLM MLP
    hidden = []
    d_prev = cfg.n_in
    for _ in range(cfg.num_layers_lin - 1):
        w, b = _dense(next(keys), d_prev, cfg.n_hidden)
        fw, fb = _dense(next(keys), cfg.latent_dim, 2 * cfg.n_hidden)
        hidden.append((w, b, fw, fb))
        d_prev = cfg.n_hidden
    p["film"] = {"hidden": hidden, "final": _dense(next(keys), d_prev, cfg.n_out_lin)}
    # transformer layers
    D = cfg.n_out_lin
    layers = []
    for _ in range(cfg.num_layers):
        lp = {}
        lp["qkv_w"], lp["qkv_b"] = _dense(next(keys), D, 3 * D)
        lp["o_w"], lp["o_b"] = _dense(next(keys), D, D)
        lp["ff1_w"], lp["ff1_b"] = _dense(next(keys), D, cfg.fc_dim)
        lp["ff2_w"], lp["ff2_b"] = _dense(next(keys), cfg.fc_dim, D)
        lp["ln1_g"] = jnp.ones((1, D), jnp.float32)
        lp["ln1_b"] = jnp.zeros((1, D), jnp.float32)
        lp["ln2_g"] = jnp.ones((1, D), jnp.float32)
        lp["ln2_b"] = jnp.zeros((1, D), jnp.float32)
        layers.append(lp)
    p["layers"] = layers
    # output MLP (use_conv=False path)
    dims = [cfg.n_out_lin] + [cfg.last_mlp_width] * (cfg.last_mlp_layers - 1) + [cfg.n_out]
    p["out_mlp"] = [_dense(next(keys), dims[i], dims[i + 1])
                    for i in range(len(dims) - 1)]
    return p


# ----------------------------------------------------------------------------
# Forward pass (config captured statically via closure)
# ----------------------------------------------------------------------------

def make_forward(cfg):

    def forward(params, latent, mask):
        B = latent.shape[0]
        S = cfg.n_max

        # _get_full_mask: first mask[i].sum() rows are valid (ones over features)
        counts = jnp.sum(mask, axis=-1).astype(jnp.int32)
        pos = jax.lax.broadcasted_iota(jnp.int32, (B, S), 1)
        row_valid = (pos < counts[:, None]).astype(jnp.float32)        # (B, S)

        # create_padding_mask(full_mask[:, :, 0]): additive key-padding bias
        attn_bias = ((1.0 - row_valid) * NEG_INF).reshape(B, 1, S)

        # FiLM MLP on the generated reference set, conditioned on the latent
        # (one (1, latent_dim) row per batch element; no (B*S, latent) bcast)
        lat3 = latent.astype(COMPUTE_DTYPE).reshape(B, 1, cfg.latent_dim)
        x = pallas_film_mlp(params["gen_seeds"], lat3, params["film"])  # (B,S,D)

        # fused transformer layers; dropout = identity (inference).
        # attention scores are discarded by the reference forward -> never stored
        for lp in params["layers"][:-1]:
            x = pallas_transformer_layer(x, attn_bias, lp,
                                         num_heads=cfg.num_heads)

        # last layer fused with output MLP + final `z * full_mask`
        z = pallas_transformer_layer_with_output(
            x, attn_bias, row_valid.reshape(B, S, 1),
            params["layers"][-1], params["out_mlp"],
            num_heads=cfg.num_heads)
        return z                                                       # (B,S,n_out) f32

    return forward


# ----------------------------------------------------------------------------
# Main
# ----------------------------------------------------------------------------

if __name__ == "__main__":
    cfg = Config(n_in=4, latent_dim=8, fc_dim=64, num_heads=4, num_layers=2,
                 n_out=4, n_out_lin=32, n_hidden=32, num_layers_lin=2,
                 last_mlp_width=32, last_mlp_layers=2, n_max=8)
    B = 2

    key = jax.random.PRNGKey(0)
    kl, kp = jax.random.split(key)
    latent = jax.random.normal(kl, (B, cfg.latent_dim), jnp.float32)
    mask = jnp.array([[1, 1, 1, 1, 1, 1, 0, 0],
                      [1, 1, 1, 1, 1, 1, 1, 1]], dtype=jnp.float32)

    params = init_params(kp, cfg)
    fwd = jax.jit(make_forward(cfg))

    z = fwd(params, latent, mask)
    jax.block_until_ready(z)

    assert z.shape == (B, cfg.n_max, cfg.n_out), z.shape
    assert bool(jnp.all(jnp.isfinite(z)))
    assert bool(jnp.all(z[0, 6:] == 0.0))   # padded positions zeroed by full_mask
    print("KERNEL_OK")
</pallas_src>

<mosaic_0001>
module attributes {stable_mosaic.version = 11 : i64} {
  func.func @_film_kernel(%arg0: i32, %arg1: memref<8x4xbf16, #tpu.memory_space<vmem>>, %arg2: memref<1x1x8xbf16, #tpu.memory_space<vmem>>, %arg3: memref<4x32xbf16, #tpu.memory_space<vmem>>, %arg4: memref<1x32xbf16, #tpu.memory_space<vmem>>, %arg5: memref<8x64xbf16, #tpu.memory_space<vmem>>, %arg6: memref<1x64xbf16, #tpu.memory_space<vmem>>, %arg7: memref<32x32xbf16, #tpu.memory_space<vmem>>, %arg8: memref<1x32xbf16, #tpu.memory_space<vmem>>, %arg9: memref<1x8x32xbf16, #tpu.memory_space<vmem>>) attributes {dimension_semantics = [#tpu.dimension_semantics<parallel>], iteration_bounds = array<i64: 2>, scalar_prefetch = 0 : i64, scratch_operands = 0 : i64, tpu.core_type = #tpu.core_type<tc>, window_params = [{pipeline_mode = #tpu.pipeline_mode<synchronous>, transform_indices = @transform_0, window_bounds = array<i64: 8, 4>}, {transform_indices = @transform_1, window_bounds = array<i64: 1, 1, 8>}, {pipeline_mode = #tpu.pipeline_mode<synchronous>, transform_indices = @transform_2, window_bounds = array<i64: 4, 32>}, {pipeline_mode = #tpu.pipeline_mode<synchronous>, transform_indices = @transform_3, window_bounds = array<i64: 1, 32>}, {pipeline_mode = #tpu.pipeline_mode<synchronous>, transform_indices = @transform_4, window_bounds = array<i64: 8, 64>}, {pipeline_mode = #tpu.pipeline_mode<synchronous>, transform_indices = @transform_5, window_bounds = array<i64: 1, 64>}, {pipeline_mode = #tpu.pipeline_mode<synchronous>, transform_indices = @transform_6, window_bounds = array<i64: 32, 32>}, {pipeline_mode = #tpu.pipeline_mode<synchronous>, transform_indices = @transform_7, window_bounds = array<i64: 1, 32>}, {transform_indices = @transform_8, window_bounds = array<i64: 1, 8, 32>}]} {
    %c0 = arith.constant 0 : index
    %c0_0 = arith.constant 0 : index
    %0 = vector.load %arg1[%c0, %c0_0] : memref<8x4xbf16, #tpu.memory_space<vmem>>, vector<8x4xbf16>
    %c0_1 = arith.constant 0 : index
    %c0_2 = arith.constant 0 : index
    %c0_3 = arith.constant 0 : index
    %1 = vector.load %arg2[%c0_1, %c0_2, %c0_3] : memref<1x1x8xbf16, #tpu.memory_space<vmem>>, vector<1x1x8xbf16>
    %2 = vector.shape_cast %1 : vector<1x1x8xbf16> to vector<1x8xbf16>
    %c0_4 = arith.constant 0 : index
    %c0_5 = arith.constant 0 : index
    %3 = vector.load %arg3[%c0_4, %c0_5] : memref<4x32xbf16, #tpu.memory_space<vmem>>, vector<4x32xbf16>
    %cst = arith.constant dense<0.000000e+00> : vector<8x32xf32>
    %4 = tpu.matmul %0, %3, %cst {dimension_numbers = #tpu.dot_dimension_numbers<[1], [0], [0], [1], [0, 0, 1, 1], [], []>} : vector<8x4xbf16>, vector<4x32xbf16>, vector<8x32xf32> -> vector<8x32xf32>
    %c0_6 = arith.constant 0 : index
    %c0_7 = arith.constant 0 : index
    %5 = vector.load %arg4[%c0_6, %c0_7] : memref<1x32xbf16, #tpu.memory_space<vmem>>, vector<1x32xbf16>
    %6 = arith.extf %5 : vector<1x32xbf16> to vector<1x32xf32>
    %7 = vector.broadcast %6 : vector<1x32xf32> to vector<8x32xf32>
    %8 = arith.addf %4, %7 : vector<8x32xf32>
    %c0_8 = arith.constant 0 : index
    %c0_9 = arith.constant 0 : index
    %9 = vector.load %arg5[%c0_8, %c0_9] : memref<8x64xbf16, #tpu.memory_space<vmem>>, vector<8x64xbf16>
    %cst_10 = arith.constant dense<0.000000e+00> : vector<1x64xf32>
    %10 = tpu.matmul %2, %9, %cst_10 {dimension_numbers = #tpu.dot_dimension_numbers<[1], [0], [0], [1], [0, 0, 1, 1], [], []>} : vector<1x8xbf16>, vector<8x64xbf16>, vector<1x64xf32> -> vector<1x64xf32>
    %c0_11 = arith.constant 0 : index
    %c0_12 = arith.constant 0 : index
    %11 = vector.load %arg6[%c0_11, %c0_12] : memref<1x64xbf16, #tpu.memory_space<vmem>>, vector<1x64xbf16>
    %12 = arith.extf %11 : vector<1x64xbf16> to vector<1x64xf32>
    %13 = arith.addf %10, %12 : vector<1x64xf32>
    %14 = vector.extract_strided_slice %13 {offsets = [0, 0], sizes = [1, 32], strides = [1, 1]} : vector<1x64xf32> to vector<1x32xf32>
    %15 = vector.broadcast %14 : vector<1x32xf32> to vector<8x32xf32>
    %16 = arith.mulf %15, %8 : vector<8x32xf32>
    %17 = vector.extract_strided_slice %13 {offsets = [0, 32], sizes = [1, 32], strides = [1, 1]} : vector<1x64xf32> to vector<1x32xf32>
    %18 = vector.broadcast %17 : vector<1x32xf32> to vector<8x32xf32>
    %19 = arith.addf %16, %18 : vector<8x32xf32>
    %cst_13 = arith.constant 0.000000e+00 : f32
    %20 = vector.broadcast %cst_13 : f32 to vector<8x32xf32>
    %21 = arith.maximumf %19, %20 : vector<8x32xf32>
    %22 = arith.truncf %21 : vector<8x32xf32> to vector<8x32xbf16>
    %c0_14 = arith.constant 0 : index
    %c0_15 = arith.constant 0 : index
    %23 = vector.load %arg7[%c0_14, %c0_15] : memref<32x32xbf16, #tpu.memory_space<vmem>>, vector<32x32xbf16>
    %cst_16 = arith.constant dense<0.000000e+00> : vector<8x32xf32>
    %24 = tpu.matmul %22, %23, %cst_16 {dimension_numbers = #tpu.dot_dimension_numbers<[1], [0], [0], [1], [0, 0, 1, 1], [], []>} : vector<8x32xbf16>, vector<32x32xbf16>, vector<8x32xf32> -> vector<8x32xf32>
    %c0_17 = arith.constant 0 : index
    %c0_18 = arith.constant 0 : index
    %25 = vector.load %arg8[%c0_17, %c0_18] : memref<1x32xbf16, #tpu.memory_space<vmem>>, vector<1x32xbf16>
    %26 = arith.extf %25 : vector<1x32xbf16> to vector<1x32xf32>
    %27 = vector.broadcast %26 : vector<1x32xf32> to vector<8x32xf32>
    %28 = arith.addf %24, %27 : vector<8x32xf32>
    %29 = arith.truncf %28 : vector<8x32xf32> to vector<8x32xbf16>
    %c0_19 = arith.constant 0 : index
    %c0_20 = arith.constant 0 : index
    %c0_21 = arith.constant 0 : index
    %30 = vector.load %arg9[%c0_19, %c0_20, %c0_21] : memref<1x8x32xbf16, #tpu.memory_space<vmem>>, vector<1x8x32xbf16>
    %31 = vector.shape_cast %30 : vector<1x8x32xbf16> to vector<8x32xbf16>
    %32 = vector.shape_cast %29 : vector<8x32xbf16> to vector<1x8x32xbf16>
    tpu.vector_store %arg9[%c0_19, %c0_20, %c0_21], %32 {strides = array<i32>} : memref<1x8x32xbf16, #tpu.memory_space<vmem>>, vector<1x8x32xbf16>,
    return
  }
  func.func @transform_0(%arg0: i32) -> (i32, i32) {
    %c0_i32 = arith.constant 0 : i32
    %c0_i32_0 = arith.constant 0 : i32
    %c0_i32_1 = arith.constant 0 : i32
    return %c0_i32, %c0_i32_0 : i32, i32
  }
  func.func @transform_1(%arg0: i32) -> (i32, i32, i32) {
    %c0_i32 = arith.constant 0 : i32
    %c0_i32_0 = arith.constant 0 : i32
    %c0_i32_1 = arith.constant 0 : i32
    return %arg0, %c0_i32, %c0_i32_0 : i32, i32, i32
  }
  func.func @transform_2(%arg0: i32) -> (i32, i32) {
    %c0_i32 = arith.constant 0 : i32
    %c0_i32_0 = arith.constant 0 : i32
    %c0_i32_1 = arith.constant 0 : i32
    return %c0_i32, %c0_i32_0 : i32, i32
  }
  func.func @transform_3(%arg0: i32) -> (i32, i32) {
    %c0_i32 = arith.constant 0 : i32
    %c0_i32_0 = arith.constant 0 : i32
    %c0_i32_1 = arith.constant 0 : i32
    return %c0_i32, %c0_i32_0 : i32, i32
  }
  func.func @transform_4(%arg0: i32) -> (i32, i32) {
    %c0_i32 = arith.constant 0 : i32
    %c0_i32_0 = arith.constant 0 : i32
    %c0_i32_1 = arith.constant 0 : i32
    return %c0_i32, %c0_i32_0 : i32, i32
  }
  func.func @transform_5(%arg0: i32) -> (i32, i32) {
    %c0_i32 = arith.constant 0 : i32
    %c0_i32_0 = arith.constant 0 : i32
    %c0_i32_1 = arith.constant 0 : i32
    return %c0_i32, %c0_i32_0 : i32, i32
  }
  func.func @transform_6(%arg0: i32) -> (i32, i32) {
    %c0_i32 = arith.constant 0 : i32
    %c0_i32_0 = arith.constant 0 : i32
    %c0_i32_1 = arith.constant 0 : i32
    return %c0_i32, %c0_i32_0 : i32, i32
  }
  func.func @transform_7(%arg0: i32) -> (i32, i32) {
    %c0_i32 = arith.constant 0 : i32
    %c0_i32_0 = arith.constant 0 : i32
    %c0_i32_1 = arith.constant 0 : i32
    return %c0_i32, %c0_i32_0 : i32, i32
  }
  func.func @transform_8(%arg0: i32) -> (i32, i32, i32) {
    %c0_i32 = arith.constant 0 : i32
    %c0_i32_0 = arith.constant 0 : i32
    %c0_i32_1 = arith.constant 0 : i32
    return %arg0, %c0_i32, %c0_i32_0 : i32, i32, i32
  }
}

module attributes {stable_mosaic.version = 11 : i64} {
  func.func @_layer_kernel(%arg0: i32, %arg1: memref<1x8x32xbf16, #tpu.memory_space<vmem>>, %arg2: memref<1x1x8xf32, #tpu.memory_space<vmem>>, %arg3: memref<32x96xbf16, #tpu.memory_space<vmem>>, %arg4: memref<1x96xbf16, #tpu.memory_space<vmem>>, %arg5: memref<32x32xbf16, #tpu.memory_space<vmem>>, %arg6: memref<1x32xbf16, #tpu.memory_space<vmem>>, %arg7: memref<1x32xf32, #tpu.memory_space<vmem>>, %arg8: memref<1x32xf32, #tpu.memory_space<vmem>>, %arg9: memref<32x64xbf16, #tpu.memory_space<vmem>>, %arg10: memref<1x64xbf16, #tpu.memory_space<vmem>>, %arg11: memref<64x32xbf16, #tpu.memory_space<vmem>>, %arg12: memref<1x32xbf16, #tpu.memory_space<vmem>>, %arg13: memref<1x32xf32, #tpu.memory_space<vmem>>, %arg14: memref<1x32xf32, #tpu.memory_space<vmem>>, %arg15: memref<1x8x32xbf16, #tpu.memory_space<vmem>>) attributes {dimension_semantics = [#tpu.dimension_semantics<parallel>], iteration_bounds = array<i64: 2>, scalar_prefetch = 0 : i64, scratch_operands = 0 : i64, tpu.core_type = #tpu.core_type<tc>, window_params = [{transform_indices = @transform_0, window_bounds = array<i64: 1, 8, 32>}, {transform_indices = @transform_1, window_bounds = array<i64: 1, 1, 8>}, {pipeline_mode = #tpu.pipeline_mode<synchronous>, transform_indices = @transform_2, window_bounds = array<i64: 32, 96>}, {pipeline_mode = #tpu.pipeline_mode<synchronous>, transform_indices = @transform_3, window_bounds = array<i64: 1, 96>}, {pipeline_mode = #tpu.pipeline_mode<synchronous>, transform_indices = @transform_4, window_bounds = array<i64: 32, 32>}, {pipeline_mode = #tpu.pipeline_mode<synchronous>, transform_indices = @transform_5, window_bounds = array<i64: 1, 32>}, {pipeline_mode = #tpu.pipeline_mode<synchronous>, transform_indices = @transform_6, window_bounds = array<i64: 1, 32>}, {pipeline_mode = #tpu.pipeline_mode<synchronous>, transform_indices = @transform_7, window_bounds = array<i64: 1, 32>}, {pipeline_mode = #tpu.pipeline_mode<synchronous>, transform_indices = @transform_8, window_bounds = array<i64: 32, 64>}, {pipeline_mode = #tpu.pipeline_mode<synchronous>, transform_indices = @transform_9, window_bounds = array<i64: 1, 64>}, {pipeline_mode = #tpu.pipeline_mode<synchronous>, transform_indices = @transform_10, window_bounds = array<i64: 64, 32>}, {pipeline_mode = #tpu.pipeline_mode<synchronous>, transform_indices = @transform_11, window_bounds = array<i64: 1, 32>}, {pipeline_mode = #tpu.pipeline_mode<synchronous>, transform_indices = @transform_12, window_bounds = array<i64: 1, 32>}, {pipeline_mode = #tpu.pipeline_mode<synchronous>, transform_indices = @transform_13, window_bounds = array<i64: 1, 32>}, {transform_indices = @transform_14, window_bounds = array<i64: 1, 8, 32>}]} {
    %c0 = arith.constant 0 : index
    %c0_0 = arith.constant 0 : index
    %c0_1 = arith.constant 0 : index
    %0 = vector.load %arg1[%c0, %c0_0, %c0_1] : memref<1x8x32xbf16, #tpu.memory_space<vmem>>, vector<1x8x32xbf16>
    %1 = vector.shape_cast %0 : vector<1x8x32xbf16> to vector<8x32xbf16>
    %c0_2 = arith.constant 0 : index
    %c0_3 = arith.constant 0 : index
    %c0_4 = arith.constant 0 : index
    %2 = vector.load %arg2[%c0_2, %c0_3, %c0_4] : memref<1x1x8xf32, #tpu.memory_space<vmem>>, vector<1x1x8xf32>
    %3 = vector.shape_cast %2 : vector<1x1x8xf32> to vector<1x8xf32>
    %c0_5 = arith.constant 0 : index
    %c0_6 = arith.constant 0 : index
    %4 = vector.load %arg3[%c0_5, %c0_6] : memref<32x96xbf16, #tpu.memory_space<vmem>>, vector<32x96xbf16>
    %cst = arith.constant dense<0.000000e+00> : vector<8x96xf32>
    %5 = tpu.matmul %1, %4, %cst {dimension_numbers = #tpu.dot_dimension_numbers<[1], [0], [0], [1], [0, 0, 1, 1], [], []>} : vector<8x32xbf16>, vector<32x96xbf16>, vector<8x96xf32> -> vector<8x96xf32>
    %c0_7 = arith.constant 0 : index
    %c0_8 = arith.constant 0 : index
    %6 = vector.load %arg4[%c0_7, %c0_8] : memref<1x96xbf16, #tpu.memory_space<vmem>>, vector<1x96xbf16>
    %7 = arith.extf %6 : vector<1x96xbf16> to vector<1x96xf32>
    %8 = vector.broadcast %7 : vector<1x96xf32> to vector<8x96xf32>
    %9 = arith.addf %5, %8 : vector<8x96xf32>
    %10 = vector.extract_strided_slice %9 {offsets = [0, 0], sizes = [8, 32], strides = [1, 1]} : vector<8x96xf32> to vector<8x32xf32>
    %11 = vector.shape_cast %10 : vector<8x32xf32> to vector<8x4x8xf32>
    %12 = tpu.transpose %11, [1, 0, 2] : vector<8x4x8xf32> -> vector<4x8x8xf32>
    %13 = vector.extract_strided_slice %9 {offsets = [0, 32], sizes = [8, 32], strides = [1, 1]} : vector<8x96xf32> to vector<8x32xf32>
    %14 = vector.shape_cast %13 : vector<8x32xf32> to vector<8x4x8xf32>
    %15 = tpu.transpose %14, [1, 0, 2] : vector<8x4x8xf32> -> vector<4x8x8xf32>
    %16 = vector.extract_strided_slice %9 {offsets = [0, 64], sizes = [8, 32], strides = [1, 1]} : vector<8x96xf32> to vector<8x32xf32>
    %17 = vector.shape_cast %16 : vector<8x32xf32> to vector<8x4x8xf32>
    %18 = tpu.transpose %17, [1, 0, 2] : vector<8x4x8xf32> -> vector<4x8x8xf32>
    %19 = arith.truncf %12 : vector<4x8x8xf32> to vector<4x8x8xbf16>
    %20 = arith.truncf %15 : vector<4x8x8xf32> to vector<4x8x8xbf16>
    "tpu.trace_start"() <{level = 10 : i32, message = "hqd,hkd->hqk"}> : () -> ()
    %cst_9 = arith.constant dense<0.000000e+00> : vector<4x8x8xf32>
    %21 = tpu.matmul %19, %20, %cst_9 {dimension_numbers = #tpu.dot_dimension_numbers<[2], [2], [1], [1], [0, 0, 0, 1, 1, 1], [0], [0]>} : vector<4x8x8xbf16>, vector<4x8x8xbf16>, vector<4x8x8xf32> -> vector<4x8x8xf32>
    "tpu.trace_stop"() : () -> ()
    %cst_10 = arith.constant 0.353553385 : f32
    %22 = vector.broadcast %cst_10 : f32 to vector<4x8x8xf32>
    %23 = arith.mulf %21, %22 : vector<4x8x8xf32>
    %24 = vector.shape_cast %3 : vector<1x8xf32> to vector<1x1x8xf32>
    %25 = vector.broadcast %24 : vector<1x1x8xf32> to vector<4x8x8xf32>
    %26 = arith.addf %23, %25 : vector<4x8x8xf32>
    %cst_11 = arith.constant dense<0xFF800000> : vector<4x8xf32>
    %27 = vector.multi_reduction <maximumf>, %26, %cst_11 [2] : vector<4x8x8xf32> to vector<4x8xf32>
    %28 = vector.shape_cast %27 : vector<4x8xf32> to vector<4x8x1xf32>
    %29 = vector.broadcast %28 : vector<4x8x1xf32> to vector<4x8x8xf32>
    %30 = arith.subf %26, %29 : vector<4x8x8xf32>
    %31 = math.exp %30 : vector<4x8x8xf32>
    %cst_12 = arith.constant dense<0.000000e+00> : vector<4x8xf32>
    %32 = vector.multi_reduction <add>, %31, %cst_12 [2] : vector<4x8x8xf32> to vector<4x8xf32>
    %33 = vector.shape_cast %32 : vector<4x8xf32> to vector<4x8x1xf32>
    %34 = tpu.reciprocal %33 {approx = true} : vector<4x8x1xf32> -> vector<4x8x1xf32>
    %35 = vector.broadcast %34 : vector<4x8x1xf32> to vector<4x8x8xf32>
    %36 = arith.mulf %31, %35 : vector<4x8x8xf32>
    %37 = arith.truncf %36 : vector<4x8x8xf32> to vector<4x8x8xbf16>
    %38 = arith.truncf %18 : vector<4x8x8xf32> to vector<4x8x8xbf16>
    "tpu.trace_start"() <{level = 10 : i32, message = "hqk,hkd->hqd"}> : () -> ()
    %cst_13 = arith.constant dense<0.000000e+00> : vector<4x8x8xf32>
    %39 = tpu.matmul %37, %38, %cst_13 {dimension_numbers = #tpu.dot_dimension_numbers<[2], [1], [1], [2], [0, 0, 0, 1, 1, 2], [0], [0]>} : vector<4x8x8xbf16>, vector<4x8x8xbf16>, vector<4x8x8xf32> -> vector<4x8x8xf32>
    "tpu.trace_stop"() : () -> ()
    %40 = tpu.transpose %39, [1, 0, 2] : vector<4x8x8xf32> -> vector<8x4x8xf32>
    %41 = vector.shape_cast %40 : vector<8x4x8xf32> to vector<8x32xf32>
    %42 = arith.truncf %41 : vector<8x32xf32> to vector<8x32xbf16>
    %c0_14 = arith.constant 0 : index
    %c0_15 = arith.constant 0 : index
    %43 = vector.load %arg5[%c0_14, %c0_15] : memref<32x32xbf16, #tpu.memory_space<vmem>>, vector<32x32xbf16>
    %cst_16 = arith.constant dense<0.000000e+00> : vector<8x32xf32>
    %44 = tpu.matmul %42, %43, %cst_16 {dimension_numbers = #tpu.dot_dimension_numbers<[1], [0], [0], [1], [0, 0, 1, 1], [], []>} : vector<8x32xbf16>, vector<32x32xbf16>, vector<8x32xf32> -> vector<8x32xf32>
    %c0_17 = arith.constant 0 : index
    %c0_18 = arith.constant 0 : index
    %45 = vector.load %arg6[%c0_17, %c0_18] : memref<1x32xbf16, #tpu.memory_space<vmem>>, vector<1x32xbf16>
    %46 = arith.extf %45 : vector<1x32xbf16> to vector<1x32xf32>
    %47 = vector.broadcast %46 : vector<1x32xf32> to vector<8x32xf32>
    %48 = arith.addf %44, %47 : vector<8x32xf32>
    %49 = arith.extf %1 : vector<8x32xbf16> to vector<8x32xf32>
    %50 = arith.addf %49, %48 : vector<8x32xf32>
    %c0_19 = arith.constant 0 : index
    %c0_20 = arith.constant 0 : index
    %51 = vector.load %arg7[%c0_19, %c0_20] : memref<1x32xf32, #tpu.memory_space<vmem>>, vector<1x32xf32>
    %c0_21 = arith.constant 0 : index
    %c0_22 = arith.constant 0 : index
    %52 = vector.load %arg8[%c0_21, %c0_22] : memref<1x32xf32, #tpu.memory_space<vmem>>, vector<1x32xf32>
    %cst_23 = arith.constant dense<0.000000e+00> : vector<8xf32>
    %53 = vector.multi_reduction <add>, %50, %cst_23 [1] : vector<8x32xf32> to vector<8xf32>
    %54 = vector.shape_cast %53 : vector<8xf32> to vector<8x1xf32>
    %cst_24 = arith.constant 3.200000e+01 : f32
    %55 = vector.broadcast %cst_24 : f32 to vector<8x1xf32>
    %56 = arith.divf %54, %55 : vector<8x1xf32>
    %57 = vector.broadcast %56 : vector<8x1xf32> to vector<8x32xf32>
    %58 = arith.subf %50, %57 : vector<8x32xf32>
    %59 = arith.mulf %58, %58 : vector<8x32xf32>
    %cst_25 = arith.constant dense<0.000000e+00> : vector<8xf32>
    %60 = vector.multi_reduction <add>, %59, %cst_25 [1] : vector<8x32xf32> to vector<8xf32>
    %61 = vector.shape_cast %60 : vector<8xf32> to vector<8x1xf32>
    %cst_26 = arith.constant 3.200000e+01 : f32
    %62 = vector.broadcast %cst_26 : f32 to vector<8x1xf32>
    %63 = arith.divf %61, %62 : vector<8x1xf32>
    %64 = vector.broadcast %56 : vector<8x1xf32> to vector<8x32xf32>
    %65 = arith.subf %50, %64 : vector<8x32xf32>
    %cst_27 = arith.constant 9.99999974E-6 : f32
    %66 = vector.broadcast %cst_27 : f32 to vector<8x1xf32>
    %67 = arith.addf %63, %66 : vector<8x1xf32>
    %68 = math.rsqrt %67 : vector<8x1xf32>
    %69 = vector.broadcast %68 : vector<8x1xf32> to vector<8x32xf32>
    %70 = arith.mulf %65, %69 : vector<8x32xf32>
    %71 = vector.broadcast %51 : vector<1x32xf32> to vector<8x32xf32>
    %72 = arith.mulf %70, %71 : vector<8x32xf32>
    %73 = vector.broadcast %52 : vector<1x32xf32> to vector<8x32xf32>
    %74 = arith.addf %72, %73 : vector<8x32xf32>
    %75 = arith.truncf %74 : vector<8x32xf32> to vector<8x32xbf16>
    %c0_28 = arith.constant 0 : index
    %c0_29 = arith.constant 0 : index
    %76 = vector.load %arg9[%c0_28, %c0_29] : memref<32x64xbf16, #tpu.memory_space<vmem>>, vector<32x64xbf16>
    %cst_30 = arith.constant dense<0.000000e+00> : vector<8x64xf32>
    %77 = tpu.matmul %75, %76, %cst_30 {dimension_numbers = #tpu.dot_dimension_numbers<[1], [0], [0], [1], [0, 0, 1, 1], [], []>} : vector<8x32xbf16>, vector<32x64xbf16>, vector<8x64xf32> -> vector<8x64xf32>
    %c0_31 = arith.constant 0 : index
    %c0_32 = arith.constant 0 : index
    %78 = vector.load %arg10[%c0_31, %c0_32] : memref<1x64xbf16, #tpu.memory_space<vmem>>, vector<1x64xbf16>
    %79 = arith.extf %78 : vector<1x64xbf16> to vector<1x64xf32>
    %80 = vector.broadcast %79 : vector<1x64xf32> to vector<8x64xf32>
    %81 = arith.addf %77, %80 : vector<8x64xf32>
    %cst_33 = arith.constant 5.000000e-01 : f32
    %82 = vector.broadcast %cst_33 : f32 to vector<8x64xf32>
    %83 = arith.mulf %82, %81 : vector<8x64xf32>
    %cst_34 = arith.constant 4.471500e-02 : f32
    %84 = vector.broadcast %cst_34 : f32 to vector<8x64xf32>
    %85 = arith.mulf %84, %81 : vector<8x64xf32>
    %86 = arith.mulf %85, %81 : vector<8x64xf32>
    %87 = arith.mulf %86, %81 : vector<8x64xf32>
    %88 = arith.addf %81, %87 : vector<8x64xf32>
    %cst_35 = arith.constant 0.797884583 : f32
    %89 = vector.broadcast %cst_35 : f32 to vector<8x64xf32>
    %90 = arith.mulf %89, %88 : vector<8x64xf32>
    %91 = math.tanh %90 : vector<8x64xf32>
    %cst_36 = arith.constant 1.000000e+00 : f32
    %92 = vector.broadcast %cst_36 : f32 to vector<8x64xf32>
    %93 = arith.addf %92, %91 : vector<8x64xf32>
    %94 = arith.mulf %83, %93 : vector<8x64xf32>
    %95 = arith.truncf %94 : vector<8x64xf32> to vector<8x64xbf16>
    %c0_37 = arith.constant 0 : index
    %c0_38 = arith.constant 0 : index
    %96 = vector.load %arg11[%c0_37, %c0_38] : memref<64x32xbf16, #tpu.memory_space<vmem>>, vector<64x32xbf16>
    %cst_39 = arith.constant dense<0.000000e+00> : vector<8x32xf32>
    %97 = tpu.matmul %95, %96, %cst_39 {dimension_numbers = #tpu.dot_dimension_numbers<[1], [0], [0], [1], [0, 0, 1, 1], [], []>} : vector<8x64xbf16>, vector<64x32xbf16>, vector<8x32xf32> -> vector<8x32xf32>
    %c0_40 = arith.constant 0 : index
    %c0_41 = arith.constant 0 : index
    %98 = vector.load %arg12[%c0_40, %c0_41] : memref<1x32xbf16, #tpu.memory_space<vmem>>, vector<1x32xbf16>
    %99 = arith.extf %98 : vector<1x32xbf16> to vector<1x32xf32>
    %100 = vector.broadcast %99 : vector<1x32xf32> to vector<8x32xf32>
    %101 = arith.addf %97, %100 : vector<8x32xf32>
    %102 = arith.addf %74, %101 : vector<8x32xf32>
    %c0_42 = arith.constant 0 : index
    %c0_43 = arith.constant 0 : index
    %103 = vector.load %arg13[%c0_42, %c0_43] : memref<1x32xf32, #tpu.memory_space<vmem>>, vector<1x32xf32>
    %c0_44 = arith.constant 0 : index
    %c0_45 = arith.constant 0 : index
    %104 = vector.load %arg14[%c0_44, %c0_45] : memref<1x32xf32, #tpu.memory_space<vmem>>, vector<1x32xf32>
    %cst_46 = arith.constant dense<0.000000e+00> : vector<8xf32>
    %105 = vector.multi_reduction <add>, %102, %cst_46 [1] : vector<8x32xf32> to vector<8xf32>
    %106 = vector.shape_cast %105 : vector<8xf32> to vector<8x1xf32>
    %cst_47 = arith.constant 3.200000e+01 : f32
    %107 = vector.broadcast %cst_47 : f32 to vector<8x1xf32>
    %108 = arith.divf %106, %107 : vector<8x1xf32>
    %109 = vector.broadcast %108 : vector<8x1xf32> to vector<8x32xf32>
    %110 = arith.subf %102, %109 : vector<8x32xf32>
    %111 = arith.mulf %110, %110 : vector<8x32xf32>
    %cst_48 = arith.constant dense<0.000000e+00> : vector<8xf32>
    %112 = vector.multi_reduction <add>, %111, %cst_48 [1] : vector<8x32xf32> to vector<8xf32>
    %113 = vector.shape_cast %112 : vector<8xf32> to vector<8x1xf32>
    %cst_49 = arith.constant 3.200000e+01 : f32
    %114 = vector.broadcast %cst_49 : f32 to vector<8x1xf32>
    %115 = arith.divf %113, %114 : vector<8x1xf32>
    %116 = vector.broadcast %108 : vector<8x1xf32> to vector<8x32xf32>
    %117 = arith.subf %102, %116 : vector<8x32xf32>
    %cst_50 = arith.constant 9.99999974E-6 : f32
    %118 = vector.broadcast %cst_50 : f32 to vector<8x1xf32>
    %119 = arith.addf %115, %118 : vector<8x1xf32>
    %120 = math.rsqrt %119 : vector<8x1xf32>
    %121 = vector.broadcast %120 : vector<8x1xf32> to vector<8x32xf32>
    %122 = arith.mulf %117, %121 : vector<8x32xf32>
    %123 = vector.broadcast %103 : vector<1x32xf32> to vector<8x32xf32>
    %124 = arith.mulf %122, %123 : vector<8x32xf32>
    %125 = vector.broadcast %104 : vector<1x32xf32> to vector<8x32xf32>
    %126 = arith.addf %124, %125 : vector<8x32xf32>
    %127 = arith.truncf %126 : vector<8x32xf32> to vector<8x32xbf16>
    %c0_51 = arith.constant 0 : index
    %c0_52 = arith.constant 0 : index
    %c0_53 = arith.constant 0 : index
    %128 = vector.load %arg15[%c0_51, %c0_52, %c0_53] : memref<1x8x32xbf16, #tpu.memory_space<vmem>>, vector<1x8x32xbf16>
    %129 = vector.shape_cast %128 : vector<1x8x32xbf16> to vector<8x32xbf16>
    %130 = vector.shape_cast %127 : vector<8x32xbf16> to vector<1x8x32xbf16>
    tpu.vector_store %arg15[%c0_51, %c0_52, %c0_53], %130 {strides = array<i32>} : memref<1x8x32xbf16, #tpu.memory_space<vmem>>, vector<1x8x32xbf16>,
    return
  }
  func.func @transform_0(%arg0: i32) -> (i32, i32, i32) {
    %c0_i32 = arith.constant 0 : i32
    %c0_i32_0 = arith.constant 0 : i32
    %c0_i32_1 = arith.constant 0 : i32
    return %arg0, %c0_i32, %c0_i32_0 : i32, i32, i32
  }
  func.func @transform_1(%arg0: i32) -> (i32, i32, i32) {
    %c0_i32 = arith.constant 0 : i32
    %c0_i32_0 = arith.constant 0 : i32
    %c0_i32_1 = arith.constant 0 : i32
    return %arg0, %c0_i32, %c0_i32_0 : i32, i32, i32
  }
  func.func @transform_2(%arg0: i32) -> (i32, i32) {
    %c0_i32 = arith.constant 0 : i32
    %c0_i32_0 = arith.constant 0 : i32
    %c0_i32_1 = arith.constant 0 : i32
    return %c0_i32, %c0_i32_0 : i32, i32
  }
  func.func @transform_3(%arg0: i32) -> (i32, i32) {
    %c0_i32 = arith.constant 0 : i32
    %c0_i32_0 = arith.constant 0 : i32
    %c0_i32_1 = arith.constant 0 : i32
    return %c0_i32, %c0_i32_0 : i32, i32
  }
  func.func @transform_4(%arg0: i32) -> (i32, i32) {
    %c0_i32 = arith.constant 0 : i32
    %c0_i32_0 = arith.constant 0 : i32
    %c0_i32_1 = arith.constant 0 : i32
    return %c0_i32, %c0_i32_0 : i32, i32
  }
  func.func @transform_5(%arg0: i32) -> (i32, i32) {
    %c0_i32 = arith.constant 0 : i32
    %c0_i32_0 = arith.constant 0 : i32
    %c0_i32_1 = arith.constant 0 : i32
    return %c0_i32, %c0_i32_0 : i32, i32
  }
  func.func @transform_6(%arg0: i32) -> (i32, i32) {
    %c0_i32 = arith.constant 0 : i32
    %c0_i32_0 = arith.constant 0 : i32
    %c0_i32_1 = arith.constant 0 : i32
    return %c0_i32, %c0_i32_0 : i32, i32
  }
  func.func @transform_7(%arg0: i32) -> (i32, i32) {
    %c0_i32 = arith.constant 0 : i32
    %c0_i32_0 = arith.constant 0 : i32
    %c0_i32_1 = arith.constant 0 : i32
    return %c0_i32, %c0_i32_0 : i32, i32
  }
  func.func @transform_8(%arg0: i32) -> (i32, i32) {
    %c0_i32 = arith.constant 0 : i32
    %c0_i32_0 = arith.constant 0 : i32
    %c0_i32_1 = arith.constant 0 : i32
    return %c0_i32, %c0_i32_0 : i32, i32
  }
  func.func @transform_9(%arg0: i32) -> (i32, i32) {
    %c0_i32 = arith.constant 0 : i32
    %c0_i32_0 = arith.constant 0 : i32
    %c0_i32_1 = arith.constant 0 : i32
    return %c0_i32, %c0_i32_0 : i32, i32
  }
  func.func @transform_10(%arg0: i32) -> (i32, i32) {
    %c0_i32 = arith.constant 0 : i32
    %c0_i32_0 = arith.constant 0 : i32
    %c0_i32_1 = arith.constant 0 : i32
    return %c0_i32, %c0_i32_0 : i32, i32
  }
  func.func @transform_11(%arg0: i32) -> (i32, i32) {
    %c0_i32 = arith.constant 0 : i32
    %c0_i32_0 = arith.constant 0 : i32
    %c0_i32_1 = arith.constant 0 : i32
    return %c0_i32, %c0_i32_0 : i32, i32
  }
  func.func @transform_12(%arg0: i32) -> (i32, i32) {
    %c0_i32 = arith.constant 0 : i32
    %c0_i32_0 = arith.constant 0 : i32
    %c0_i32_1 = arith.constant 0 : i32
    return %c0_i32, %c0_i32_0 : i32, i32
  }
  func.func @transform_13(%arg0: i32) -> (i32, i32) {
    %c0_i32 = arith.constant 0 : i32
    %c0_i32_0 = arith.constant 0 : i32
    %c0_i32_1 = arith.constant 0 : i32
    return %c0_i32, %c0_i32_0 : i32, i32
  }
  func.func @transform_14(%arg0: i32) -> (i32, i32, i32) {
    %c0_i32 = arith.constant 0 : i32
    %c0_i32_0 = arith.constant 0 : i32
    %c0_i32_1 = arith.constant 0 : i32
    return %arg0, %c0_i32, %c0_i32_0 : i32, i32, i32
  }
}

module attributes {stable_mosaic.version = 11 : i64} {
  func.func @_layer_out_kernel(%arg0: i32, %arg1: memref<1x8x32xbf16, #tpu.memory_space<vmem>>, %arg2: memref<1x1x8xf32, #tpu.memory_space<vmem>>, %arg3: memref<1x8x1xf32, #tpu.memory_space<vmem>>, %arg4: memref<32x96xbf16, #tpu.memory_space<vmem>>, %arg5: memref<1x96xbf16, #tpu.memory_space<vmem>>, %arg6: memref<32x32xbf16, #tpu.memory_space<vmem>>, %arg7: memref<1x32xbf16, #tpu.memory_space<vmem>>, %arg8: memref<1x32xf32, #tpu.memory_space<vmem>>, %arg9: memref<1x32xf32, #tpu.memory_space<vmem>>, %arg10: memref<32x64xbf16, #tpu.memory_space<vmem>>, %arg11: memref<1x64xbf16, #tpu.memory_space<vmem>>, %arg12: memref<64x32xbf16, #tpu.memory_space<vmem>>, %arg13: memref<1x32xbf16, #tpu.memory_space<vmem>>, %arg14: memref<1x32xf32, #tpu.memory_space<vmem>>, %arg15: memref<1x32xf32, #tpu.memory_space<vmem>>, %arg16: memref<32x32xbf16, #tpu.memory_space<vmem>>, %arg17: memref<1x32xbf16, #tpu.memory_space<vmem>>, %arg18: memref<32x4xbf16, #tpu.memory_space<vmem>>, %arg19: memref<1x4xbf16, #tpu.memory_space<vmem>>, %arg20: memref<1x8x4xf32, #tpu.memory_space<vmem>>) attributes {dimension_semantics = [#tpu.dimension_semantics<parallel>], iteration_bounds = array<i64: 2>, scalar_prefetch = 0 : i64, scratch_operands = 0 : i64, tpu.core_type = #tpu.core_type<tc>, window_params = [{transform_indices = @transform_0, window_bounds = array<i64: 1, 8, 32>}, {transform_indices = @transform_1, window_bounds = array<i64: 1, 1, 8>}, {transform_indices = @transform_2, window_bounds = array<i64: 1, 8, 1>}, {pipeline_mode = #tpu.pipeline_mode<synchronous>, transform_indices = @transform_3, window_bounds = array<i64: 32, 96>}, {pipeline_mode = #tpu.pipeline_mode<synchronous>, transform_indices = @transform_4, window_bounds = array<i64: 1, 96>}, {pipeline_mode = #tpu.pipeline_mode<synchronous>, transform_indices = @transform_5, window_bounds = array<i64: 32, 32>}, {pipeline_mode = #tpu.pipeline_mode<synchronous>, transform_indices = @transform_6, window_bounds = array<i64: 1, 32>}, {pipeline_mode = #tpu.pipeline_mode<synchronous>, transform_indices = @transform_7, window_bounds = array<i64: 1, 32>}, {pipeline_mode = #tpu.pipeline_mode<synchronous>, transform_indices = @transform_8, window_bounds = array<i64: 1, 32>}, {pipeline_mode = #tpu.pipeline_mode<synchronous>, transform_indices = @transform_9, window_bounds = array<i64: 32, 64>}, {pipeline_mode = #tpu.pipeline_mode<synchronous>, transform_indices = @transform_10, window_bounds = array<i64: 1, 64>}, {pipeline_mode = #tpu.pipeline_mode<synchronous>, transform_indices = @transform_11, window_bounds = array<i64: 64, 32>}, {pipeline_mode = #tpu.pipeline_mode<synchronous>, transform_indices = @transform_12, window_bounds = array<i64: 1, 32>}, {pipeline_mode = #tpu.pipeline_mode<synchronous>, transform_indices = @transform_13, window_bounds = array<i64: 1, 32>}, {pipeline_mode = #tpu.pipeline_mode<synchronous>, transform_indices = @transform_14, window_bounds = array<i64: 1, 32>}, {pipeline_mode = #tpu.pipeline_mode<synchronous>, transform_indices = @transform_15, window_bounds = array<i64: 32, 32>}, {pipeline_mode = #tpu.pipeline_mode<synchronous>, transform_indices = @transform_16, window_bounds = array<i64: 1, 32>}, {pipeline_mode = #tpu.pipeline_mode<synchronous>, transform_indices = @transform_17, window_bounds = array<i64: 32, 4>}, {pipeline_mode = #tpu.pipeline_mode<synchronous>, transform_indices = @transform_18, window_bounds = array<i64: 1, 4>}, {transform_indices = @transform_19, window_bounds = array<i64: 1, 8, 4>}]} {
    %c0 = arith.constant 0 : index
    %c0_0 = arith.constant 0 : index
    %c0_1 = arith.constant 0 : index
    %0 = vector.load %arg1[%c0, %c0_0, %c0_1] : memref<1x8x32xbf16, #tpu.memory_space<vmem>>, vector<1x8x32xbf16>
    %1 = vector.shape_cast %0 : vector<1x8x32xbf16> to vector<8x32xbf16>
    %c0_2 = arith.constant 0 : index
    %c0_3 = arith.constant 0 : index
    %c0_4 = arith.constant 0 : index
    %2 = vector.load %arg2[%c0_2, %c0_3, %c0_4] : memref<1x1x8xf32, #tpu.memory_space<vmem>>, vector<1x1x8xf32>
    %3 = vector.shape_cast %2 : vector<1x1x8xf32> to vector<1x8xf32>
    %c0_5 = arith.constant 0 : index
    %c0_6 = arith.constant 0 : index
    %4 = vector.load %arg4[%c0_5, %c0_6] : memref<32x96xbf16, #tpu.memory_space<vmem>>, vector<32x96xbf16>
    %cst = arith.constant dense<0.000000e+00> : vector<8x96xf32>
    %5 = tpu.matmul %1, %4, %cst {dimension_numbers = #tpu.dot_dimension_numbers<[1], [0], [0], [1], [0, 0, 1, 1], [], []>} : vector<8x32xbf16>, vector<32x96xbf16>, vector<8x96xf32> -> vector<8x96xf32>
    %c0_7 = arith.constant 0 : index
    %c0_8 = arith.constant 0 : index
    %6 = vector.load %arg5[%c0_7, %c0_8] : memref<1x96xbf16, #tpu.memory_space<vmem>>, vector<1x96xbf16>
    %7 = arith.extf %6 : vector<1x96xbf16> to vector<1x96xf32>
    %8 = vector.broadcast %7 : vector<1x96xf32> to vector<8x96xf32>
    %9 = arith.addf %5, %8 : vector<8x96xf32>
    %10 = vector.extract_strided_slice %9 {offsets = [0, 0], sizes = [8, 32], strides = [1, 1]} : vector<8x96xf32> to vector<8x32xf32>
    %11 = vector.shape_cast %10 : vector<8x32xf32> to vector<8x4x8xf32>
    %12 = tpu.transpose %11, [1, 0, 2] : vector<8x4x8xf32> -> vector<4x8x8xf32>
    %13 = vector.extract_strided_slice %9 {offsets = [0, 32], sizes = [8, 32], strides = [1, 1]} : vector<8x96xf32> to vector<8x32xf32>
    %14 = vector.shape_cast %13 : vector<8x32xf32> to vector<8x4x8xf32>
    %15 = tpu.transpose %14, [1, 0, 2] : vector<8x4x8xf32> -> vector<4x8x8xf32>
    %16 = vector.extract_strided_slice %9 {offsets = [0, 64], sizes = [8, 32], strides = [1, 1]} : vector<8x96xf32> to vector<8x32xf32>
    %17 = vector.shape_cast %16 : vector<8x32xf32> to vector<8x4x8xf32>
    %18 = tpu.transpose %17, [1, 0, 2] : vector<8x4x8xf32> -> vector<4x8x8xf32>
    %19 = arith.truncf %12 : vector<4x8x8xf32> to vector<4x8x8xbf16>
    %20 = arith.truncf %15 : vector<4x8x8xf32> to vector<4x8x8xbf16>
    "tpu.trace_start"() <{level = 10 : i32, message = "hqd,hkd->hqk"}> : () -> ()
    %cst_9 = arith.constant dense<0.000000e+00> : vector<4x8x8xf32>
    %21 = tpu.matmul %19, %20, %cst_9 {dimension_numbers = #tpu.dot_dimension_numbers<[2], [2], [1], [1], [0, 0, 0, 1, 1, 1], [0], [0]>} : vector<4x8x8xbf16>, vector<4x8x8xbf16>, vector<4x8x8xf32> -> vector<4x8x8xf32>
    "tpu.trace_stop"() : () -> ()
    %cst_10 = arith.constant 0.353553385 : f32
    %22 = vector.broadcast %cst_10 : f32 to vector<4x8x8xf32>
    %23 = arith.mulf %21, %22 : vector<4x8x8xf32>
    %24 = vector.shape_cast %3 : vector<1x8xf32> to vector<1x1x8xf32>
    %25 = vector.broadcast %24 : vector<1x1x8xf32> to vector<4x8x8xf32>
    %26 = arith.addf %23, %25 : vector<4x8x8xf32>
    %cst_11 = arith.constant dense<0xFF800000> : vector<4x8xf32>
    %27 = vector.multi_reduction <maximumf>, %26, %cst_11 [2] : vector<4x8x8xf32> to vector<4x8xf32>
    %28 = vector.shape_cast %27 : vector<4x8xf32> to vector<4x8x1xf32>
    %29 = vector.broadcast %28 : vector<4x8x1xf32> to vector<4x8x8xf32>
    %30 = arith.subf %26, %29 : vector<4x8x8xf32>
    %31 = math.exp %30 : vector<4x8x8xf32>
    %cst_12 = arith.constant dense<0.000000e+00> : vector<4x8xf32>
    %32 = vector.multi_reduction <add>, %31, %cst_12 [2] : vector<4x8x8xf32> to vector<4x8xf32>
    %33 = vector.shape_cast %32 : vector<4x8xf32> to vector<4x8x1xf32>
    %34 = tpu.reciprocal %33 {approx = true} : vector<4x8x1xf32> -> vector<4x8x1xf32>
    %35 = vector.broadcast %34 : vector<4x8x1xf32> to vector<4x8x8xf32>
    %36 = arith.mulf %31, %35 : vector<4x8x8xf32>
    %37 = arith.truncf %36 : vector<4x8x8xf32> to vector<4x8x8xbf16>
    %38 = arith.truncf %18 : vector<4x8x8xf32> to vector<4x8x8xbf16>
    "tpu.trace_start"() <{level = 10 : i32, message = "hqk,hkd->hqd"}> : () -> ()
    %cst_13 = arith.constant dense<0.000000e+00> : vector<4x8x8xf32>
    %39 = tpu.matmul %37, %38, %cst_13 {dimension_numbers = #tpu.dot_dimension_numbers<[2], [1], [1], [2], [0, 0, 0, 1, 1, 2], [0], [0]>} : vector<4x8x8xbf16>, vector<4x8x8xbf16>, vector<4x8x8xf32> -> vector<4x8x8xf32>
    "tpu.trace_stop"() : () -> ()
    %40 = tpu.transpose %39, [1, 0, 2] : vector<4x8x8xf32> -> vector<8x4x8xf32>
    %41 = vector.shape_cast %40 : vector<8x4x8xf32> to vector<8x32xf32>
    %42 = arith.truncf %41 : vector<8x32xf32> to vector<8x32xbf16>
    %c0_14 = arith.constant 0 : index
    %c0_15 = arith.constant 0 : index
    %43 = vector.load %arg6[%c0_14, %c0_15] : memref<32x32xbf16, #tpu.memory_space<vmem>>, vector<32x32xbf16>
    %cst_16 = arith.constant dense<0.000000e+00> : vector<8x32xf32>
    %44 = tpu.matmul %42, %43, %cst_16 {dimension_numbers = #tpu.dot_dimension_numbers<[1], [0], [0], [1], [0, 0, 1, 1], [], []>} : vector<8x32xbf16>, vector<32x32xbf16>, vector<8x32xf32> -> vector<8x32xf32>
    %c0_17 = arith.constant 0 : index
    %c0_18 = arith.constant 0 : index
    %45 = vector.load %arg7[%c0_17, %c0_18] : memref<1x32xbf16, #tpu.memory_space<vmem>>, vector<1x32xbf16>
    %46 = arith.extf %45 : vector<1x32xbf16> to vector<1x32xf32>
    %47 = vector.broadcast %46 : vector<1x32xf32> to vector<8x32xf32>
    %48 = arith.addf %44, %47 : vector<8x32xf32>
    %49 = arith.extf %1 : vector<8x32xbf16> to vector<8x32xf32>
    %50 = arith.addf %49, %48 : vector<8x32xf32>
    %c0_19 = arith.constant 0 : index
    %c0_20 = arith.constant 0 : index
    %51 = vector.load %arg8[%c0_19, %c0_20] : memref<1x32xf32, #tpu.memory_space<vmem>>, vector<1x32xf32>
    %c0_21 = arith.constant 0 : index
    %c0_22 = arith.constant 0 : index
    %52 = vector.load %arg9[%c0_21, %c0_22] : memref<1x32xf32, #tpu.memory_space<vmem>>, vector<1x32xf32>
    %cst_23 = arith.constant dense<0.000000e+00> : vector<8xf32>
    %53 = vector.multi_reduction <add>, %50, %cst_23 [1] : vector<8x32xf32> to vector<8xf32>
    %54 = vector.shape_cast %53 : vector<8xf32> to vector<8x1xf32>
    %cst_24 = arith.constant 3.200000e+01 : f32
    %55 = vector.broadcast %cst_24 : f32 to vector<8x1xf32>
    %56 = arith.divf %54, %55 : vector<8x1xf32>
    %57 = vector.broadcast %56 : vector<8x1xf32> to vector<8x32xf32>
    %58 = arith.subf %50, %57 : vector<8x32xf32>
    %59 = arith.mulf %58, %58 : vector<8x32xf32>
    %cst_25 = arith.constant dense<0.000000e+00> : vector<8xf32>
    %60 = vector.multi_reduction <add>, %59, %cst_25 [1] : vector<8x32xf32> to vector<8xf32>
    %61 = vector.shape_cast %60 : vector<8xf32> to vector<8x1xf32>
    %cst_26 = arith.constant 3.200000e+01 : f32
    %62 = vector.broadcast %cst_26 : f32 to vector<8x1xf32>
    %63 = arith.divf %61, %62 : vector<8x1xf32>
    %64 = vector.broadcast %56 : vector<8x1xf32> to vector<8x32xf32>
    %65 = arith.subf %50, %64 : vector<8x32xf32>
    %cst_27 = arith.constant 9.99999974E-6 : f32
    %66 = vector.broadcast %cst_27 : f32 to vector<8x1xf32>
    %67 = arith.addf %63, %66 : vector<8x1xf32>
    %68 = math.rsqrt %67 : vector<8x1xf32>
    %69 = vector.broadcast %68 : vector<8x1xf32> to vector<8x32xf32>
    %70 = arith.mulf %65, %69 : vector<8x32xf32>
    %71 = vector.broadcast %51 : vector<1x32xf32> to vector<8x32xf32>
    %72 = arith.mulf %70, %71 : vector<8x32xf32>
    %73 = vector.broadcast %52 : vector<1x32xf32> to vector<8x32xf32>
    %74 = arith.addf %72, %73 : vector<8x32xf32>
    %75 = arith.truncf %74 : vector<8x32xf32> to vector<8x32xbf16>
    %c0_28 = arith.constant 0 : index
    %c0_29 = arith.constant 0 : index
    %76 = vector.load %arg10[%c0_28, %c0_29] : memref<32x64xbf16, #tpu.memory_space<vmem>>, vector<32x64xbf16>
    %cst_30 = arith.constant dense<0.000000e+00> : vector<8x64xf32>
    %77 = tpu.matmul %75, %76, %cst_30 {dimension_numbers = #tpu.dot_dimension_numbers<[1], [0], [0], [1], [0, 0, 1, 1], [], []>} : vector<8x32xbf16>, vector<32x64xbf16>, vector<8x64xf32> -> vector<8x64xf32>
    %c0_31 = arith.constant 0 : index
    %c0_32 = arith.constant 0 : index
    %78 = vector.load %arg11[%c0_31, %c0_32] : memref<1x64xbf16, #tpu.memory_space<vmem>>, vector<1x64xbf16>
    %79 = arith.extf %78 : vector<1x64xbf16> to vector<1x64xf32>
    %80 = vector.broadcast %79 : vector<1x64xf32> to vector<8x64xf32>
    %81 = arith.addf %77, %80 : vector<8x64xf32>
    %cst_33 = arith.constant 5.000000e-01 : f32
    %82 = vector.broadcast %cst_33 : f32 to vector<8x64xf32>
    %83 = arith.mulf %82, %81 : vector<8x64xf32>
    %cst_34 = arith.constant 4.471500e-02 : f32
    %84 = vector.broadcast %cst_34 : f32 to vector<8x64xf32>
    %85 = arith.mulf %84, %81 : vector<8x64xf32>
    %86 = arith.mulf %85, %81 : vector<8x64xf32>
    %87 = arith.mulf %86, %81 : vector<8x64xf32>
    %88 = arith.addf %81, %87 : vector<8x64xf32>
    %cst_35 = arith.constant 0.797884583 : f32
    %89 = vector.broadcast %cst_35 : f32 to vector<8x64xf32>
    %90 = arith.mulf %89, %88 : vector<8x64xf32>
    %91 = math.tanh %90 : vector<8x64xf32>
    %cst_36 = arith.constant 1.000000e+00 : f32
    %92 = vector.broadcast %cst_36 : f32 to vector<8x64xf32>
    %93 = arith.addf %92, %91 : vector<8x64xf32>
    %94 = arith.mulf %83, %93 : vector<8x64xf32>
    %95 = arith.truncf %94 : vector<8x64xf32> to vector<8x64xbf16>
    %c0_37 = arith.constant 0 : index
    %c0_38 = arith.constant 0 : index
    %96 = vector.load %arg12[%c0_37, %c0_38] : memref<64x32xbf16, #tpu.memory_space<vmem>>, vector<64x32xbf16>
    %cst_39 = arith.constant dense<0.000000e+00> : vector<8x32xf32>
    %97 = tpu.matmul %95, %96, %cst_39 {dimension_numbers = #tpu.dot_dimension_numbers<[1], [0], [0], [1], [0, 0, 1, 1], [], []>} : vector<8x64xbf16>, vector<64x32xbf16>, vector<8x32xf32> -> vector<8x32xf32>
    %c0_40 = arith.constant 0 : index
    %c0_41 = arith.constant 0 : index
    %98 = vector.load %arg13[%c0_40, %c0_41] : memref<1x32xbf16, #tpu.memory_space<vmem>>, vector<1x32xbf16>
    %99 = arith.extf %98 : vector<1x32xbf16> to vector<1x32xf32>
    %100 = vector.broadcast %99 : vector<1x32xf32> to vector<8x32xf32>
    %101 = arith.addf %97, %100 : vector<8x32xf32>
    %102 = arith.addf %74, %101 : vector<8x32xf32>
    %c0_42 = arith.constant 0 : index
    %c0_43 = arith.constant 0 : index
    %103 = vector.load %arg14[%c0_42, %c0_43] : memref<1x32xf32, #tpu.memory_space<vmem>>, vector<1x32xf32>
    %c0_44 = arith.constant 0 : index
    %c0_45 = arith.constant 0 : index
    %104 = vector.load %arg15[%c0_44, %c0_45] : memref<1x32xf32, #tpu.memory_space<vmem>>, vector<1x32xf32>
    %cst_46 = arith.constant dense<0.000000e+00> : vector<8xf32>
    %105 = vector.multi_reduction <add>, %102, %cst_46 [1] : vector<8x32xf32> to vector<8xf32>
    %106 = vector.shape_cast %105 : vector<8xf32> to vector<8x1xf32>
    %cst_47 = arith.constant 3.200000e+01 : f32
    %107 = vector.broadcast %cst_47 : f32 to vector<8x1xf32>
    %108 = arith.divf %106, %107 : vector<8x1xf32>
    %109 = vector.broadcast %108 : vector<8x1xf32> to vector<8x32xf32>
    %110 = arith.subf %102, %109 : vector<8x32xf32>
    %111 = arith.mulf %110, %110 : vector<8x32xf32>
    %cst_48 = arith.constant dense<0.000000e+00> : vector<8xf32>
    %112 = vector.multi_reduction <add>, %111, %cst_48 [1] : vector<8x32xf32> to vector<8xf32>
    %113 = vector.shape_cast %112 : vector<8xf32> to vector<8x1xf32>
    %cst_49 = arith.constant 3.200000e+01 : f32
    %114 = vector.broadcast %cst_49 : f32 to vector<8x1xf32>
    %115 = arith.divf %113, %114 : vector<8x1xf32>
    %116 = vector.broadcast %108 : vector<8x1xf32> to vector<8x32xf32>
    %117 = arith.subf %102, %116 : vector<8x32xf32>
    %cst_50 = arith.constant 9.99999974E-6 : f32
    %118 = vector.broadcast %cst_50 : f32 to vector<8x1xf32>
    %119 = arith.addf %115, %118 : vector<8x1xf32>
    %120 = math.rsqrt %119 : vector<8x1xf32>
    %121 = vector.broadcast %120 : vector<8x1xf32> to vector<8x32xf32>
    %122 = arith.mulf %117, %121 : vector<8x32xf32>
    %123 = vector.broadcast %103 : vector<1x32xf32> to vector<8x32xf32>
    %124 = arith.mulf %122, %123 : vector<8x32xf32>
    %125 = vector.broadcast %104 : vector<1x32xf32> to vector<8x32xf32>
    %126 = arith.addf %124, %125 : vector<8x32xf32>
    %127 = arith.truncf %126 : vector<8x32xf32> to vector<8x32xbf16>
    %c0_51 = arith.constant 0 : index
    %c0_52 = arith.constant 0 : index
    %128 = vector.load %arg16[%c0_51, %c0_52] : memref<32x32xbf16, #tpu.memory_space<vmem>>, vector<32x32xbf16>
    %cst_53 = arith.constant dense<0.000000e+00> : vector<8x32xf32>
    %129 = tpu.matmul %127, %128, %cst_53 {dimension_numbers = #tpu.dot_dimension_numbers<[1], [0], [0], [1], [0, 0, 1, 1], [], []>} : vector<8x32xbf16>, vector<32x32xbf16>, vector<8x32xf32> -> vector<8x32xf32>
    %c0_54 = arith.constant 0 : index
    %c0_55 = arith.constant 0 : index
    %130 = vector.load %arg17[%c0_54, %c0_55] : memref<1x32xbf16, #tpu.memory_space<vmem>>, vector<1x32xbf16>
    %131 = arith.extf %130 : vector<1x32xbf16> to vector<1x32xf32>
    %132 = vector.broadcast %131 : vector<1x32xf32> to vector<8x32xf32>
    %133 = arith.addf %129, %132 : vector<8x32xf32>
    %cst_56 = arith.constant 0.000000e+00 : f32
    %134 = vector.broadcast %cst_56 : f32 to vector<8x32xf32>
    %135 = arith.maximumf %133, %134 : vector<8x32xf32>
    %136 = arith.truncf %135 : vector<8x32xf32> to vector<8x32xbf16>
    %c0_57 = arith.constant 0 : index
    %c0_58 = arith.constant 0 : index
    %137 = vector.load %arg18[%c0_57, %c0_58] : memref<32x4xbf16, #tpu.memory_space<vmem>>, vector<32x4xbf16>
    %cst_59 = arith.constant dense<0.000000e+00> : vector<8x4xf32>
    %138 = tpu.matmul %136, %137, %cst_59 {dimension_numbers = #tpu.dot_dimension_numbers<[1], [0], [0], [1], [0, 0, 1, 1], [], []>} : vector<8x32xbf16>, vector<32x4xbf16>, vector<8x4xf32> -> vector<8x4xf32>
    %c0_60 = arith.constant 0 : index
    %c0_61 = arith.constant 0 : index
    %139 = vector.load %arg19[%c0_60, %c0_61] : memref<1x4xbf16, #tpu.memory_space<vmem>>, vector<1x4xbf16>
    %140 = arith.extf %139 : vector<1x4xbf16> to vector<1x4xf32>
    %141 = vector.broadcast %140 : vector<1x4xf32> to vector<8x4xf32>
    %142 = arith.addf %138, %141 : vector<8x4xf32>
    %c0_62 = arith.constant 0 : index
    %c0_63 = arith.constant 0 : index
    %c0_64 = arith.constant 0 : index
    %143 = vector.load %arg3[%c0_62, %c0_63, %c0_64] : memref<1x8x1xf32, #tpu.memory_space<vmem>>, vector<1x8x1xf32>
    %144 = vector.shape_cast %143 : vector<1x8x1xf32> to vector<8x1xf32>
    %145 = vector.broadcast %144 : vector<8x1xf32> to vector<8x4xf32>
    %146 = arith.mulf %142, %145 : vector<8x4xf32>
    %c0_65 = arith.constant 0 : index
    %c0_66 = arith.constant 0 : index
    %c0_67 = arith.constant 0 : index
    %147 = vector.load %arg20[%c0_65, %c0_66, %c0_67] : memref<1x8x4xf32, #tpu.memory_space<vmem>>, vector<1x8x4xf32>
    %148 = vector.shape_cast %147 : vector<1x8x4xf32> to vector<8x4xf32>
    %149 = vector.shape_cast %146 : vector<8x4xf32> to vector<1x8x4xf32>
    tpu.vector_store %arg20[%c0_65, %c0_66, %c0_67], %149 {strides = array<i32>} : memref<1x8x4xf32, #tpu.memory_space<vmem>>, vector<1x8x4xf32>,
    return
  }
  func.func @transform_0(%arg0: i32) -> (i32, i32, i32) {
    %c0_i32 = arith.constant 0 : i32
    %c0_i32_0 = arith.constant 0 : i32
    %c0_i32_1 = arith.constant 0 : i32
    return %arg0, %c0_i32, %c0_i32_0 : i32, i32, i32
  }
  func.func @transform_1(%arg0: i32) -> (i32, i32, i32) {
    %c0_i32 = arith.constant 0 : i32
    %c0_i32_0 = arith.constant 0 : i32
    %c0_i32_1 = arith.constant 0 : i32
    return %arg0, %c0_i32, %c0_i32_0 : i32, i32, i32
  }
  func.func @transform_2(%arg0: i32) -> (i32, i32, i32) {
    %c0_i32 = arith.constant 0 : i32
    %c0_i32_0 = arith.constant 0 : i32
    %c0_i32_1 = arith.constant 0 : i32
    return %arg0, %c0_i32, %c0_i32_0 : i32, i32, i32
  }
  func.func @transform_3(%arg0: i32) -> (i32, i32) {
    %c0_i32 = arith.constant 0 : i32
    %c0_i32_0 = arith.constant 0 : i32
    %c0_i32_1 = arith.constant 0 : i32
    return %c0_i32, %c0_i32_0 : i32, i32
  }
  func.func @transform_4(%arg0: i32) -> (i32, i32) {
    %c0_i32 = arith.constant 0 : i32
    %c0_i32_0 = arith.constant 0 : i32
    %c0_i32_1 = arith.constant 0 : i32
    return %c0_i32, %c0_i32_0 : i32, i32
  }
  func.func @transform_5(%arg0: i32) -> (i32, i32) {
    %c0_i32 = arith.constant 0 : i32
    %c0_i32_0 = arith.constant 0 : i32
    %c0_i32_1 = arith.constant 0 : i32
    return %c0_i32, %c0_i32_0 : i32, i32
  }
  func.func @transform_6(%arg0: i32) -> (i32, i32) {
    %c0_i32 = arith.constant 0 : i32
    %c0_i32_0 = arith.constant 0 : i32
    %c0_i32_1 = arith.constant 0 : i32
    return %c0_i32, %c0_i32_0 : i32, i32
  }
  func.func @transform_7(%arg0: i32) -> (i32, i32) {
    %c0_i32 = arith.constant 0 : i32
    %c0_i32_0 = arith.constant 0 : i32
    %c0_i32_1 = arith.constant 0 : i32
    return %c0_i32, %c0_i32_0 : i32, i32
  }
  func.func @transform_8(%arg0: i32) -> (i32, i32) {
    %c0_i32 = arith.constant 0 : i32
    %c0_i32_0 = arith.constant 0 : i32
    %c0_i32_1 = arith.constant 0 : i32
    return %c0_i32, %c0_i32_0 : i32, i32
  }
  func.func @transform_9(%arg0: i32) -> (i32, i32) {
    %c0_i32 = arith.constant 0 : i32
    %c0_i32_0 = arith.constant 0 : i32
    %c0_i32_1 = arith.constant 0 : i32
    return %c0_i32, %c0_i32_0 : i32, i32
  }
  func.func @transform_10(%arg0: i32) -> (i32, i32) {
    %c0_i32 = arith.constant 0 : i32
    %c0_i32_0 = arith.constant 0 : i32
    %c0_i32_1 = arith.constant 0 : i32
    return %c0_i32, %c0_i32_0 : i32, i32
  }
  func.func @transform_11(%arg0: i32) -> (i32, i32) {
    %c0_i32 = arith.constant 0 : i32
    %c0_i32_0 = arith.constant 0 : i32
    %c0_i32_1 = arith.constant 0 : i32
    return %c0_i32, %c0_i32_0 : i32, i32
  }
  func.func @transform_12(%arg0: i32) -> (i32, i32) {
    %c0_i32 = arith.constant 0 : i32
    %c0_i32_0 = arith.constant 0 : i32
    %c0_i32_1 = arith.constant 0 : i32
    return %c0_i32, %c0_i32_0 : i32, i32
  }
  func.func @transform_13(%arg0: i32) -> (i32, i32) {
    %c0_i32 = arith.constant 0 : i32
    %c0_i32_0 = arith.constant 0 : i32
    %c0_i32_1 = arith.constant 0 : i32
    return %c0_i32, %c0_i32_0 : i32, i32
  }
  func.func @transform_14(%arg0: i32) -> (i32, i32) {
    %c0_i32 = arith.constant 0 : i32
    %c0_i32_0 = arith.constant 0 : i32
    %c0_i32_1 = arith.constant 0 : i32
    return %c0_i32, %c0_i32_0 : i32, i32
  }
  func.func @transform_15(%arg0: i32) -> (i32, i32) {
    %c0_i32 = arith.constant 0 : i32
    %c0_i32_0 = arith.constant 0 : i32
    %c0_i32_1 = arith.constant 0 : i32
    return %c0_i32, %c0_i32_0 : i32, i32
  }
  func.func @transform_16(%arg0: i32) -> (i32, i32) {
    %c0_i32 = arith.constant 0 : i32
    %c0_i32_0 = arith.constant 0 : i32
    %c0_i32_1 = arith.constant 0 : i32
    return %c0_i32, %c0_i32_0 : i32, i32
  }
  func.func @transform_17(%arg0: i32) -> (i32, i32) {
    %c0_i32 = arith.constant 0 : i32
    %c0_i32_0 = arith.constant 0 : i32
    %c0_i32_1 = arith.constant 0 : i32
    return %c0_i32, %c0_i32_0 : i32, i32
  }
  func.func @transform_18(%arg0: i32) -> (i32, i32) {
    %c0_i32 = arith.constant 0 : i32
    %c0_i32_0 = arith.constant 0 : i32
    %c0_i32_1 = arith.constant 0 : i32
    return %c0_i32, %c0_i32_0 : i32, i32
  }
  func.func @transform_19(%arg0: i32) -> (i32, i32, i32) {
    %c0_i32 = arith.constant 0 : i32
    %c0_i32_0 = arith.constant 0 : i32
    %c0_i32_1 = arith.constant 0 : i32
    return %arg0, %c0_i32, %c0_i32_0 : i32, i32, i32
  }
}

</mosaic_0001>

<llo_original>
// kernel: forward.3
$region0: #{forward.3}
  #allocation0 [shape = 'u32[]', space=smem, size = 0x4, offset = 0x4, fixed_abs, tag = 'smem constant byte address 0x4 - core index']
  #allocation1 [shape = 'u32[144,128]{1,0:T(1,128)}', space=vmem, size = 0x12000, scoped, tag = 'internal scratch']
  %s0 = inlined_call_operand.vmem [shape: bf16[8,4], index: 0, kind: input, shape index: {}]
  %s1 = inlined_call_operand.vmem [shape: bf16[2,1,8], index: 1, kind: input, shape index: {}]
  %s2 = inlined_call_operand.vmem [shape: bf16[4,32], index: 2, kind: input, shape index: {}]
  %s3 = inlined_call_operand.vmem [shape: bf16[1,32], index: 3, kind: input, shape index: {}]
  %s4 = inlined_call_operand.vmem [shape: bf16[8,64], index: 4, kind: input, shape index: {}]
  %s5 = inlined_call_operand.vmem [shape: bf16[1,64], index: 5, kind: input, shape index: {}]
  %s6 = inlined_call_operand.vmem [shape: bf16[32,32], index: 6, kind: input, shape index: {}]
  %s7 = inlined_call_operand.hbm [shape: bf16[1,32], index: 7, kind: input, shape index: {}]
  %s8 = inlined_call_operand.vmem [shape: bf16[2,8,32], index: 8, kind: output, shape index: {}]
  %s9 = sld [smem:[#allocation0]]
  $region69: #{forward.3} parent=0
    _
  %s11 = ssub.s32 1, %s9
  %s12 = scalar_select 0, %s11, %s9
  $region1: #{forward.3} parent=0
    #allocation2 [shape = 'u8[512]{0}', space=vmem, size = 0x400, scoped, tag = 'input window, operand 7, single buffered']
    #allocation3 [shape = 's32[2]{0}', space=sflag, size = 0x8, scoped, tag = 'scoped memory for forward.3']
    %13 = vsyncpa [#allocation3], 0
    loop: start=0, step=1, limit=4
    $region2: #{forward.3} parent=1 // loop_pre_header
      _
    $region3: #{forward.3} parent=1 // loop_header
      %s15 = sphi 0, %s19
      %p16 = scmp.ge.s32.totalorder %s15, 4
      %s23 = sphi 0, %s23
      %s25 = sphi 0, %s23
      %s26 = sphi 0, %s25
      %s40 = sphi 0, %s26
      %s46 = sphi 0, %s48
      %s49 = sphi 0, %s46
      %s50 = sphi 0, %s49
      %s66 = sphi 0, %s50
      %s70 = sphi 0, %s70
      %s72 = sphi 0, %s70
      %s73 = sphi 0, %s72
      %s87 = sphi 0, %s73
      %s91 = sphi 0, %s91
      %s93 = sphi 0, %s91
      %s94 = sphi 0, %s93
      %s108 = sphi 0, %s94
      %s112 = sphi 0, %s112
      %s114 = sphi 0, %s112
      %s115 = sphi 0, %s114
      %s129 = sphi 0, %s115
      %s133 = sphi 0, %s133
      %s135 = sphi 0, %s133
      %s136 = sphi 0, %s135
      %s150 = sphi 0, %s136
      %s154 = sphi 0, %s154
      %s156 = sphi 0, %s154
      %s157 = sphi 0, %s156
      %s171 = sphi 0, %s157
      %s175 = sphi 0, %s175
      %s177 = sphi 0, %s175
      %s178 = sphi 0, %s177
      %s192 = sphi 0, %s178
      %s198 = sphi 0, %s200
      %s201 = sphi 0, %s198
      %s202 = sphi 0, %s201
      %s218 = sphi 0, %s202
    $region4: #{forward.3} parent=1 // loop_header_branch
      %18 = sbr.rel (%p16) target = $region8
    $region5: #{forward.3} parent=1 // loop_body
      %s20 = ssub.s32 %s15, 1
      %s21 = ssub.s32 %s15, 2
      %s22 = sadd.s32 %s15, 1
      %s24 = sadd.s32 %s23, 1
      %p27 = scmp.eq.s32.totalorder %s15, 1
      %p28 = scmp.ne.s32.totalorder %s23, %s25
      %p29 = scmp.eq.s32.totalorder %s15, 0
      %p30 = por %p28, %p29
      %p31 = scmp.ne.s32.totalorder %s23, %s25
      %p32 = scmp.eq.s32.totalorder %s20, 1
      %p33 = por %p31, %p32
      %p34 = scmp.ne.s32.totalorder %s25, %s26
      %p35 = scmp.eq.s32.totalorder %s20, 0
      %p36 = por %p34, %p35
      %p37 = scmp.ne.s32.totalorder %s25, %s26
      %p38 = scmp.eq.s32.totalorder %s21, 1
      %p39 = por %p37, %p38
      %p41 = scmp.ne.s32.totalorder %s26, %s40
      %p42 = scmp.eq.s32.totalorder %s21, 0
      %p43 = por %p41, %p42
      %s44 = ssub.s32 %s15, %s22
      %p45 = scmp.eq.s32.totalorder %s44, 0
      %s47 = sadd.s32 %s46, 1
      %s48 = scalar_select %p45, %s46, %s47
      %p51 = pneg %p45
      %p52 = scmp.eq.s32.totalorder %s15, 1
      %p53 = por %p51, %p52
      %p54 = scmp.ne.s32.totalorder %s46, %s49
      %p55 = scmp.eq.s32.totalorder %s15, 0
      %p56 = por %p54, %p55
      %p57 = scmp.ne.s32.totalorder %s46, %s49
      %p58 = scmp.eq.s32.totalorder %s20, 1
      %p59 = por %p57, %p58
      %p60 = scmp.ne.s32.totalorder %s49, %s50
      %p61 = scmp.eq.s32.totalorder %s20, 0
      %p62 = por %p60, %p61
      %p63 = scmp.ne.s32.totalorder %s49, %s50
      %p64 = scmp.eq.s32.totalorder %s21, 1
      %p65 = por %p63, %p64
      %p67 = scmp.ne.s32.totalorder %s50, %s66
      %p68 = scmp.eq.s32.totalorder %s21, 0
      %p69 = por %p67, %p68
      %s71 = sadd.s32 %s70, 1
      %p74 = scmp.eq.s32.totalorder %s15, 1
      %p75 = scmp.ne.s32.totalorder %s70, %s72
      %p76 = scmp.eq.s32.totalorder %s15, 0
      %p77 = por %p75, %p76
      %p78 = scmp.ne.s32.totalorder %s70, %s72
      %p79 = scmp.eq.s32.totalorder %s20, 1
      %p80 = por %p78, %p79
      %p81 = scmp.ne.s32.totalorder %s72, %s73
      %p82 = scmp.eq.s32.totalorder %s20, 0
      %p83 = por %p81, %p82
      %p84 = scmp.ne.s32.totalorder %s72, %s73
      %p85 = scmp.eq.s32.totalorder %s21, 1
      %p86 = por %p84, %p85
      %p88 = scmp.ne.s32.totalorder %s73, %s87
      %p89 = scmp.eq.s32.totalorder %s21, 0
      %p90 = por %p88, %p89
      %s92 = sadd.s32 %s91, 1
      %p95 = scmp.eq.s32.totalorder %s15, 1
      %p96 = scmp.ne.s32.totalorder %s91, %s93
      %p97 = scmp.eq.s32.totalorder %s15, 0
      %p98 = por %p96, %p97
      %p99 = scmp.ne.s32.totalorder %s91, %s93
      %p100 = scmp.eq.s32.totalorder %s20, 1
      %p101 = por %p99, %p100
      %p102 = scmp.ne.s32.totalorder %s93, %s94
      %p103 = scmp.eq.s32.totalorder %s20, 0
      %p104 = por %p102, %p103
      %p105 = scmp.ne.s32.totalorder %s93, %s94
      %p106 = scmp.eq.s32.totalorder %s21, 1
      %p107 = por %p105, %p106
      %p109 = scmp.ne.s32.totalorder %s94, %s108
      %p110 = scmp.eq.s32.totalorder %s21, 0
      %p111 = por %p109, %p110
      %s113 = sadd.s32 %s112, 1
      %p116 = scmp.eq.s32.totalorder %s15, 1
      %p117 = scmp.ne.s32.totalorder %s112, %s114
      %p118 = scmp.eq.s32.totalorder %s15, 0
      %p119 = por %p117, %p118
      %p120 = scmp.ne.s32.totalorder %s112, %s114
      %p121 = scmp.eq.s32.totalorder %s20, 1
      %p122 = por %p120, %p121
      %p123 = scmp.ne.s32.totalorder %s114, %s115
      %p124 = scmp.eq.s32.totalorder %s20, 0
      %p125 = por %p123, %p124
      %p126 = scmp.ne.s32.totalorder %s114, %s115
      %p127 = scmp.eq.s32.totalorder %s21, 1
      %p128 = por %p126, %p127
      %p130 = scmp.ne.s32.totalorder %s115, %s129
      %p131 = scmp.eq.s32.totalorder %s21, 0
      %p132 = por %p130, %p131
      %s134 = sadd.s32 %s133, 1
      %p137 = scmp.eq.s32.totalorder %s15, 1
      %p138 = scmp.ne.s32.totalorder %s133, %s135
      %p139 = scmp.eq.s32.totalorder %s15, 0
      %p140 = por %p138, %p139
      %p141 = scmp.ne.s32.totalorder %s133, %s135
      %p142 = scmp.eq.s32.totalorder %s20, 1
      %p143 = por %p141, %p142
      %p144 = scmp.ne.s32.totalorder %s135, %s136
      %p145 = scmp.eq.s32.totalorder %s20, 0
      %p146 = por %p144, %p145
      %p147 = scmp.ne.s32.totalorder %s135, %s136
      %p148 = scmp.eq.s32.totalorder %s21, 1
      %p149 = por %p147, %p148
      %p151 = scmp.ne.s32.totalorder %s136, %s150
      %p152 = scmp.eq.s32.totalorder %s21, 0
      %p153 = por %p151, %p152
      %s155 = sadd.s32 %s154, 1
      %p158 = scmp.eq.s32.totalorder %s15, 1
      %p159 = scmp.ne.s32.totalorder %s154, %s156
      %p160 = scmp.eq.s32.totalorder %s15, 0
      %p161 = por %p159, %p160
      %p162 = scmp.ne.s32.totalorder %s154, %s156
      %p163 = scmp.eq.s32.totalorder %s20, 1
      %p164 = por %p162, %p163
      %p165 = scmp.ne.s32.totalorder %s156, %s157
      %p166 = scmp.eq.s32.totalorder %s20, 0
      %p167 = por %p165, %p166
      %p168 = scmp.ne.s32.totalorder %s156, %s157
      %p169 = scmp.eq.s32.totalorder %s21, 1
      %p170 = por %p168, %p169
      %p172 = scmp.ne.s32.totalorder %s157, %s171
      %p173 = scmp.eq.s32.totalorder %s21, 0
      %p174 = por %p172, %p173
      %s176 = sadd.s32 %s175, 1
      %p179 = scmp.eq.s32.totalorder %s15, 1
      %p180 = scmp.ne.s32.totalorder %s175, %s177
      %p181 = scmp.eq.s32.totalorder %s15, 0
      %p182 = por %p180, %p181
      %p183 = scmp.ne.s32.totalorder %s175, %s177
      %p184 = scmp.eq.s32.totalorder %s20, 1
      %p185 = por %p183, %p184
      %p186 = scmp.ne.s32.totalorder %s177, %s178
      %p187 = scmp.eq.s32.totalorder %s20, 0
      %p188 = por %p186, %p187
      %p189 = scmp.ne.s32.totalorder %s177, %s178
      %p190 = scmp.eq.s32.totalorder %s21, 1
      %p191 = por %p189, %p190
      %p193 = scmp.ne.s32.totalorder %s178, %s192
      %p194 = scmp.eq.s32.totalorder %s21, 0
      %p195 = por %p193, %p194
      %s196 = ssub.s32 %s15, %s22
      %p197 = scmp.eq.s32.totalorder %s196, 0
      %s199 = sadd.s32 %s198, 1
      %s200 = scalar_select %p197, %s198, %s199
      %p203 = pneg %p197
      %p204 = scmp.eq.s32.totalorder %s15, 1
      %p205 = por %p203, %p204
      %p206 = scmp.ne.s32.totalorder %s198, %s201
      %p207 = scmp.eq.s32.totalorder %s15, 0
      %p208 = por %p206, %p207
      %p209 = scmp.ne.s32.totalorder %s198, %s201
      %p210 = scmp.eq.s32.totalorder %s20, 1
      %p211 = por %p209, %p210
      %p212 = scmp.ne.s32.totalorder %s201, %s202
      %p213 = scmp.eq.s32.totalorder %s20, 0
      %p214 = por %p212, %p213
      %p215 = scmp.ne.s32.totalorder %s201, %s202
      %p216 = scmp.eq.s32.totalorder %s21, 1
      %p217 = por %p215, %p216
      %p219 = scmp.ne.s32.totalorder %s202, %s218
      %p220 = scmp.eq.s32.totalorder %s21, 0
      %p221 = por %p219, %p220
      %p222 = scmp.le.s32.totalorder 1, %s15
      %p223 = scmp.lt.s32.totalorder %s15, 3
      %p224 = pnand %p222, %p223
      %p225 = pneg %p224
      // Predicated region
      $region9: #{forward.3} parent=5 // pred_check
        _
      $region10: #{forward.3} parent=5 // pred_check_branch
        %227 = sbr.rel (%p224) target = $region12
      $region11: #{forward.3} parent=5 // pred_region
        %s228 = ssub.s32 %s15, 1
        // Predicated region
        $region13: #{forward.3} parent=11 // pred_check
          %p229 = pneg %p36
        $region14: #{forward.3} parent=11 // pred_check_branch
          %231 = sbr.rel (%p229) target = $region16
        $region15: #{forward.3} parent=11 // pred_region
          _
        $region16: #{forward.3} parent=11 // pred_fallthru
          _
        // Predicated region
        $region17: #{forward.3} parent=11 // pred_check
          %p232 = pneg %p83
        $region18: #{forward.3} parent=11 // pred_check_branch
          %234 = sbr.rel (%p232) target = $region20
        $region19: #{forward.3} parent=11 // pred_region
          _
        $region20: #{forward.3} parent=11 // pred_fallthru
          _
        // Predicated region
        $region21: #{forward.3} parent=11 // pred_check
          %p235 = pneg %p104
        $region22: #{forward.3} parent=11 // pred_check_branch
          %237 = sbr.rel (%p235) target = $region24
        $region23: #{forward.3} parent=11 // pred_region
          _
        $region24: #{forward.3} parent=11 // pred_fallthru
          _
        // Predicated region
        $region25: #{forward.3} parent=11 // pred_check
          %p238 = pneg %p125
        $region26: #{forward.3} parent=11 // pred_check_branch
          %240 = sbr.rel (%p238) target = $region28
        $region27: #{forward.3} parent=11 // pred_region
          _
        $region28: #{forward.3} parent=11 // pred_fallthru
          _
        // Predicated region
        $region29: #{forward.3} parent=11 // pred_check
          %p241 = pneg %p146
        $region30: #{forward.3} parent=11 // pred_check_branch
          %243 = sbr.rel (%p241) target = $region32
        $region31: #{forward.3} parent=11 // pred_region
          _
        $region32: #{forward.3} parent=11 // pred_fallthru
          _
        // Predicated region
        $region33: #{forward.3} parent=11 // pred_check
          %p244 = pneg %p167
        $region34: #{forward.3} parent=11 // pred_check_branch
          %246 = sbr.rel (%p244) target = $region36
        $region35: #{forward.3} parent=11 // pred_region
          _
        $region36: #{forward.3} parent=11 // pred_fallthru
          _
        // Predicated region
        $region37: #{forward.3} parent=11 // pred_check
          %p247 = pneg %p188
        $region38: #{forward.3} parent=11 // pred_check_branch
          %249 = sbr.rel (%p247) target = $region40
        $region39: #{forward.3} parent=11 // pred_region
          %s251 = ssub.s32 16, 16
          %252 = vsyncadd [#allocation3], %s251
          %s254 = sshll.u32 [#allocation2], 4
          %s255 = int_to_ptr.vmem [resolvable:$true] %s254
          %257 = dma.hbm_to_vmem [thread:$0]  %s7, 16, %s255, [#allocation3]
        $region40: #{forward.3} parent=11 // pred_fallthru
          _
      $region12: #{forward.3} parent=5 // pred_fallthru
        _
      %p258 = scmp.lt.s32.totalorder %s15, 2
      // Predicated region
      $region41: #{forward.3} parent=5 // pred_check
        %p259 = pneg %p258
      $region42: #{forward.3} parent=5 // pred_check_branch
        %261 = sbr.rel (%p259) target = $region44
      $region43: #{forward.3} parent=5 // pred_region
        // Predicated region
        $region45: #{forward.3} parent=43 // pred_check
          %p262 = pneg %p56
        $region46: #{forward.3} parent=43 // pred_check_branch
          %264 = sbr.rel (%p262) target = $region48
        $region47: #{forward.3} parent=43 // pred_region
          %p265 = scmp.lt.s32.totalorder %s15, 1
          %s266 = scalar_select %p265, %s15, 1
          %s267 = scalar_lea.vmem %s1, %s266
        $region48: #{forward.3} parent=43 // pred_fallthru
          _
      $region44: #{forward.3} parent=5 // pred_fallthru
        _
      %p268 = scmp.le.s32.totalorder 1, %s15
      %p269 = scmp.lt.s32.totalorder %s15, 3
      %p270 = pnand %p268, %p269
      %p271 = pneg %p270
      // Predicated region
      $region49: #{forward.3} parent=5 // pred_check
        _
      $region50: #{forward.3} parent=5 // pred_check_branch
        %273 = sbr.rel (%p270) target = $region52
      $region51: #{forward.3} parent=5 // pred_region
        %s274 = ssub.s32 %s15, 1
        // Predicated region
        $region53: #{forward.3} parent=51 // pred_check
          %p275 = pneg %p188
        $region54: #{forward.3} parent=51 // pred_check_branch
          %277 = sbr.rel (%p275) target = $region56
        $region55: #{forward.3} parent=51 // pred_region
          %278 = dma.done [#allocation3], 16
        $region56: #{forward.3} parent=51 // pred_fallthru
          _
        %p279 = pneg %p36
        %p280 = pneg %p33
        %p281 = scmp.lt.s32.totalorder %s20, 1
        %s282 = scalar_select %p281, %s20, 1
        %s283 = scalar_lea.vmem %s1, %s282
        %p284 = pneg %p62
        %p285 = pneg %p59
        %p286 = pneg %p83
        %p287 = pneg %p80
        %p288 = pneg %p104
        %p289 = pneg %p101
        %p290 = pneg %p125
        %p291 = pneg %p122
        %p292 = pneg %p146
        %p293 = pneg %p143
        %p294 = pneg %p167
        %p295 = pneg %p164
        %p296 = pneg %p188
        %p297 = pneg %p185
        %p298 = pneg %p214
        %p299 = pneg %p211
        %p300 = scmp.lt.s32.totalorder %s20, 1
        %s301 = scalar_select %p300, %s20, 1
        %s302 = smul.addr %s301, 4
        %s303 = scalar_lea.vmem %s8, %s302
        %p304 = scmp.lt.s32.totalorder %s20, 1
        %s305 = scalar_select %p304, %s20, 1
        %s306 = scalar_lea.vmem %s1, %s305
        %p307 = scmp.lt.s32.totalorder %s20, 1
        %s308 = scalar_select %p307, %s20, 1
        %s309 = smul.addr %s308, 4
        %s310 = scalar_lea.vmem %s8, %s309
        %v312 = vld [vmem:[%s0] sm:$0xf]
        %v313 = vld [vmem:[%s306] sm:$0x1]
        %v314 = vld [vmem:[%s2] sm:$0x3]
        %v315 = vld [vmem:[%s3] sm:$0x1]
        %v316 = vunpack.c.l.bf16 %v315
        %v317 = vlaneseq
        %v318 = vshrl.u32 %v317, 7
        %v319 = vsub.s32 0, %v318
        %v320 = vrot.slane %v316, %v319
        %vm321 = vcmask 31744
        %v323 = vsel %vm321, %v312, 0
        %vm325 = vcmask 1041408
        %v327 = vsel %vm325, %v314, 0
        %329 = vmatprep.subr.bf16.mxu0 0
        %330 = vmatpush1.bf16.msra.mxu0 %v327
        %331 = vmatprep.subr.bf16.mxu0 0
        %332 = vmatpush1.bf16.msra.mxu0 0
        %333 = vmatprep.subr.bf16.mxu0 0
        %334 = vmatpush1.bf16.msra.mxu0 0
        %335 = vmatprep.subr.bf16.mxu0 0
        %336 = vmatpush1.bf16.msra.mxu0 0
        %337 = vmatprep.subr.bf16.mxu0 0
        %338 = vmatpush1.bf16.msra.mxu0 0
        %339 = vmatprep.subr.bf16.mxu0 0
        %340 = vmatpush1.bf16.msra.mxu0 0
        %341 = vmatprep.subr.bf16.mxu0 0
        %342 = vmatpush1.bf16.msra.mxu0 0
        %343 = vmatprep.subr.bf16.mxu0 0
        %344 = vmatpush1.bf16.msra.mxu0 0
        %345 = vmatprep.subr.bf16.mxu0 0
        %346 = vmatpush1.bf16.msra.mxu0 0
        %347 = vmatprep.subr.bf16.mxu0 0
        %348 = vmatpush1.bf16.msra.mxu0 0
        %349 = vmatprep.subr.bf16.mxu0 0
        %350 = vmatpush1.bf16.msra.mxu0 0
        %351 = vmatprep.subr.bf16.mxu0 0
        %352 = vmatpush1.bf16.msra.mxu0 0
        %353 = vmatprep.subr.bf16.mxu0 0
        %354 = vmatpush1.bf16.msra.mxu0 0
        %355 = vmatprep.subr.bf16.mxu0 0
        %356 = vmatpush1.bf16.msra.mxu0 0
        %357 = vmatprep.subr.bf16.mxu0 0
        %358 = vmatpush1.bf16.msra.mxu0 0
        %359 = vmatprep.subr.bf16.mxu0 0
        %360 = vmatpush1.bf16.msra.mxu0 0
        %361 = vmatprep.mubr.bf16.mxu0 0
        %362 = vmatmul.mubr.bf16.gmra.mrb[0].mxu0 %v323
        %v363 = vpop.f32.mrb[0].mxu0
        %v364 = vadd.f32 %v320, %v363
        %v365 = vpop.f32.mrb[0].mxu0
        %v366 = vpop.f32.mrb[0].mxu0
        %v367 = vpop.f32.mrb[0].mxu0
        %368 = vdwg.mxu0
        %v369 = vld [vmem:[%s4] sm:$0xf]
        %v370 = vld [vmem:[%s5] sm:$0x1]
        %v371 = vunpack.c.l.bf16 %v370
        %vm372 = vcmask 64512
        %v374 = vsel %vm372, %v313, 0
        %vm376 = vcmask 1043456
        %v378 = vsel %vm376, %v369, 0
        %380 = vmatprep.subr.bf16.mxu0 0
        %381 = vmatpush1.bf16.msra.mxu0 %v378
        %382 = vmatprep.subr.bf16.mxu0 0
        %383 = vmatpush1.bf16.msra.mxu0 0
        %384 = vmatprep.subr.bf16.mxu0 0
        %385 = vmatpush1.bf16.msra.mxu0 0
        %386 = vmatprep.subr.bf16.mxu0 0
        %387 = vmatpush1.bf16.msra.mxu0 0
        %388 = vmatprep.subr.bf16.mxu0 0
        %389 = vmatpush1.bf16.msra.mxu0 0
        %390 = vmatprep.subr.bf16.mxu0 0
        %391 = vmatpush1.bf16.msra.mxu0 0
        %392 = vmatprep.subr.bf16.mxu0 0
        %393 = vmatpush1.bf16.msra.mxu0 0
        %394 = vmatprep.subr.bf16.mxu0 0
        %395 = vmatpush1.bf16.msra.mxu0 0
        %396 = vmatprep.subr.bf16.mxu0 0
        %397 = vmatpush1.bf16.msra.mxu0 0
        %398 = vmatprep.subr.bf16.mxu0 0
        %399 = vmatpush1.bf16.msra.mxu0 0
        %400 = vmatprep.subr.bf16.mxu0 0
        %401 = vmatpush1.bf16.msra.mxu0 0
        %402 = vmatprep.subr.bf16.mxu0 0
        %403 = vmatpush1.bf16.msra.mxu0 0
        %404 = vmatprep.subr.bf16.mxu0 0
        %405 = vmatpush1.bf16.msra.mxu0 0
        %406 = vmatprep.subr.bf16.mxu0 0
        %407 = vmatpush1.bf16.msra.mxu0 0
        %408 = vmatprep.subr.bf16.mxu0 0
        %409 = vmatpush1.bf16.msra.mxu0 0
        %410 = vmatprep.subr.bf16.mxu0 0
        %411 = vmatpush1.bf16.msra.mxu0 0
        %412 = vmatprep.mubr.bf16.mxu0 0
        %413 = vmatmul.mubr.bf16.gmra.mrb[0].mxu0 %v374
        %v414 = vpop.f32.mrb[0].mxu0
        %v415 = vadd.f32 %v371, %v414
        %v416 = vpop.f32.mrb[0].mxu0
        %v417 = vpop.f32.mrb[0].mxu0
        %v418 = vpop.f32.mrb[0].mxu0
        %419 = vdwg.mxu0
        %v420 = vlaneseq
        %v421 = vshrl.u32 %v420, 7
        %v422 = vsub.s32 0, %v421
        %v423 = vrot.slane %v415, %v422
        %v424 = vmul.f32 %v423, %v364
        %426 = vrot.lane.b32.xlu0 %v423, 96
        %v427 = vpop.permute.xlu0 %426
        %v429 = vadd.f32 %v424, %v427
        %v430 = vmax.f32 %v429, 0.0
        %v431 = vpack.c.bf16 %v430, %v430
        %v432 = vld [vmem:[%s6] sm:$0xf]
        %v433 = vld [vmem:[%s6 + $0x4] sm:$0xf]
        %v434 = vld [vmem:[%s6 + $0x8] sm:$0xf]
        %v435 = vld [vmem:[%s6 + $0xc] sm:$0xf]
        %v436 = vld [vmem:[#allocation2] sm:$0x1]
        %v437 = vunpack.c.l.bf16 %v436
        %v438 = vlaneseq
        %v439 = vshrl.u32 %v438, 7
        %v440 = vsub.s32 0, %v439
        %v441 = vrot.slane %v437, %v440
        %v446 = vunpack.c.l.b16 %v432
        %v447 = vunpack.c.l.b16 %v433
        %v448 = vunpack.c.l.b16 %v434
        %v449 = vunpack.c.l.b16 %v435
        %v450 = vpack.c.b16 %v447, %v446
        %v451 = vpack.c.b16 %v449, %v448
        %vm454 = vcmask 261120
        %v456 = vsel %vm454, %v431, 0
        %458 = vmatprep.subr.bf16.mxu0 0
        %459 = vmatpush1.bf16.msra.mxu0 %v450
        %460 = vmatprep.subr.bf16.mxu0 0
        %461 = vmatpush1.bf16.msra.mxu0 %v451
        %462 = vmatprep.subr.bf16.mxu0 0
        %463 = vmatpush1.bf16.msra.mxu0 0
        %464 = vmatprep.subr.bf16.mxu0 0
        %465 = vmatpush1.bf16.msra.mxu0 0
        %466 = vmatprep.subr.bf16.mxu0 0
        %467 = vmatpush1.bf16.msra.mxu0 0
        %468 = vmatprep.subr.bf16.mxu0 0
        %469 = vmatpush1.bf16.msra.mxu0 0
        %470 = vmatprep.subr.bf16.mxu0 0
        %471 = vmatpush1.bf16.msra.mxu0 0
        %472 = vmatprep.subr.bf16.mxu0 0
        %473 = vmatpush1.bf16.msra.mxu0 0
        %474 = vmatprep.subr.bf16.mxu0 0
        %475 = vmatpush1.bf16.msra.mxu0 0
        %476 = vmatprep.subr.bf16.mxu0 0
        %477 = vmatpush1.bf16.msra.mxu0 0
        %478 = vmatprep.subr.bf16.mxu0 0
        %479 = vmatpush1.bf16.msra.mxu0 0
        %480 = vmatprep.subr.bf16.mxu0 0
        %481 = vmatpush1.bf16.msra.mxu0 0
        %482 = vmatprep.subr.bf16.mxu0 0
        %483 = vmatpush1.bf16.msra.mxu0 0
        %484 = vmatprep.subr.bf16.mxu0 0
        %485 = vmatpush1.bf16.msra.mxu0 0
        %486 = vmatprep.subr.bf16.mxu0 0
        %487 = vmatpush1.bf16.msra.mxu0 0
        %488 = vmatprep.subr.bf16.mxu0 0
        %489 = vmatpush1.bf16.msra.mxu0 0
        %490 = vmatprep.mubr.bf16.mxu0 0
        %491 = vmatmul.mubr.bf16.gmra.mrb[0].mxu0 %v456
        %v492 = vpop.f32.mrb[0].mxu0
        %v493 = vadd.f32 %v441, %v492
        %v494 = vpop.f32.mrb[0].mxu0
        %v495 = vpop.f32.mrb[0].mxu0
        %v496 = vpop.f32.mrb[0].mxu0
        %497 = vdwg.mxu0
        %v498 = vpack.c.bf16 %v493, %v493
        %vm499 = vcmask 257024
        %500 = vst.msk [vmem:[%s310] sm:$0xf] %vm499, %v498
        %p501 = scmp.lt.s32.totalorder %s20, 1
        %s502 = scalar_select %p501, %s20, 1
        %s503 = smul.addr %s502, 4
        %s504 = scalar_lea.vmem %s8, %s503
        // Predicated region
        $region57: #{forward.3} parent=51 // pred_check
          %p505 = pneg %p211
        $region58: #{forward.3} parent=51 // pred_check_branch
          %507 = sbr.rel (%p505) target = $region60
        $region59: #{forward.3} parent=51 // pred_region
          _
        $region60: #{forward.3} parent=51 // pred_fallthru
          _
      $region52: #{forward.3} parent=5 // pred_fallthru
        _
      %p508 = scmp.le.s32.totalorder 2, %s15
      // Predicated region
      $region61: #{forward.3} parent=5 // pred_check
        %p509 = pneg %p508
      $region62: #{forward.3} parent=5 // pred_check_branch
        %511 = sbr.rel (%p509) target = $region64
      $region63: #{forward.3} parent=5 // pred_region
        %s512 = ssub.s32 %s15, 2
        // Predicated region
        $region65: #{forward.3} parent=63 // pred_check
          %p513 = pneg %p217
        $region66: #{forward.3} parent=63 // pred_check_branch
          %515 = sbr.rel (%p513) target = $region68
        $region67: #{forward.3} parent=63 // pred_region
          %p516 = scmp.lt.s32.totalorder %s21, 1
          %s517 = scalar_select %p516, %s21, 1
          %s518 = smul.addr %s517, 4
          %s519 = scalar_lea.vmem %s8, %s518
        $region68: #{forward.3} parent=63 // pred_fallthru
          _
      $region64: #{forward.3} parent=5 // pred_fallthru
        _
    $region6: #{forward.3} parent=1 // loop_footer
      %s19 = sadd.s32 1, %s15
    $region7: #{forward.3} parent=1 // loop_footer_branch
      %14 = sbr.rel target = $region3
    $region8: #{forward.3} parent=1 // loop_exit
      _
    %520 = vsyncpa [#allocation3], 1
    %s521 = scalar_lea.sflag [#allocation3], 1
    %522 = vsyncpa %s521, 1

// kernel: forward.4
$region0: #{forward.4}
  #allocation0 [shape = 'u32[]', space=smem, size = 0x4, offset = 0x4, fixed_abs, tag = 'smem constant byte address 0x4 - core index']
  #allocation1 [shape = 'u32[144,128]{1,0:T(1,128)}', space=vmem, size = 0x12000, scoped, tag = 'internal scratch']
  %s0 = inlined_call_operand.vmem [shape: bf16[2,8,32], index: 0, kind: input, shape index: {}]
  %s1 = inlined_call_operand.vmem [shape: f32[2,1,8], index: 1, kind: input, shape index: {}]
  %s2 = inlined_call_operand.vmem [shape: bf16[32,96], index: 2, kind: input, shape index: {}]
  %s3 = inlined_call_operand.vmem [shape: bf16[1,96], index: 3, kind: input, shape index: {}]
  %s4 = inlined_call_operand.vmem [shape: bf16[32,32], index: 4, kind: input, shape index: {}]
  %s5 = inlined_call_operand.vmem [shape: bf16[1,32], index: 5, kind: input, shape index: {}]
  %s6 = inlined_call_operand.vmem [shape: f32[1,32], index: 6, kind: input, shape index: {}]
  %s7 = inlined_call_operand.vmem [shape: f32[1,32], index: 7, kind: input, shape index: {}]
  %s8 = inlined_call_operand.vmem [shape: bf16[32,64], index: 8, kind: input, shape index: {}]
  %s9 = inlined_call_operand.vmem [shape: bf16[1,64], index: 9, kind: input, shape index: {}]
  %s10 = inlined_call_operand.vmem [shape: bf16[64,32], index: 10, kind: input, shape index: {}]
  %s11 = inlined_call_operand.vmem [shape: bf16[1,32], index: 11, kind: input, shape index: {}]
  %s12 = inlined_call_operand.vmem [shape: f32[1,32], index: 12, kind: input, shape index: {}]
  %s13 = inlined_call_operand.vmem [shape: f32[1,32], index: 13, kind: input, shape index: {}]
  %s14 = inlined_call_operand.vmem [shape: bf16[2,8,32], index: 14, kind: output, shape index: {}]
  %s15 = sld [smem:[#allocation0]]
  $region89: #{forward.4} parent=0
    _
  %s17 = ssub.s32 1, %s15
  %s18 = scalar_select 0, %s17, %s15
  loop: start=0, step=1, limit=4
  $region2: #{forward.4} parent=0 // loop_pre_header
    _
  $region3: #{forward.4} parent=0 // loop_header
    %s20 = sphi 0, %s24
    %p21 = scmp.ge.s32.totalorder %s20, 4
    %s30 = sphi 0, %s32
    %s33 = sphi 0, %s30
    %s34 = sphi 0, %s33
    %s50 = sphi 0, %s34
    %s56 = sphi 0, %s58
    %s59 = sphi 0, %s56
    %s60 = sphi 0, %s59
    %s76 = sphi 0, %s60
    %s80 = sphi 0, %s80
    %s82 = sphi 0, %s80
    %s83 = sphi 0, %s82
    %s97 = sphi 0, %s83
    %s101 = sphi 0, %s101
    %s103 = sphi 0, %s101
    %s104 = sphi 0, %s103
    %s118 = sphi 0, %s104
    %s122 = sphi 0, %s122
    %s124 = sphi 0, %s122
    %s125 = sphi 0, %s124
    %s139 = sphi 0, %s125
    %s143 = sphi 0, %s143
    %s145 = sphi 0, %s143
    %s146 = sphi 0, %s145
    %s160 = sphi 0, %s146
    %s164 = sphi 0, %s164
    %s166 = sphi 0, %s164
    %s167 = sphi 0, %s166
    %s181 = sphi 0, %s167
    %s185 = sphi 0, %s185
    %s187 = sphi 0, %s185
    %s188 = sphi 0, %s187
    %s202 = sphi 0, %s188
    %s206 = sphi 0, %s206
    %s208 = sphi 0, %s206
    %s209 = sphi 0, %s208
    %s223 = sphi 0, %s209
    %s227 = sphi 0, %s227
    %s229 = sphi 0, %s227
    %s230 = sphi 0, %s229
    %s244 = sphi 0, %s230
    %s248 = sphi 0, %s248
    %s250 = sphi 0, %s248
    %s251 = sphi 0, %s250
    %s265 = sphi 0, %s251
    %s269 = sphi 0, %s269
    %s271 = sphi 0, %s269
    %s272 = sphi 0, %s271
    %s286 = sphi 0, %s272
    %s290 = sphi 0, %s290
    %s292 = sphi 0, %s290
    %s293 = sphi 0, %s292
    %s307 = sphi 0, %s293
    %s311 = sphi 0, %s311
    %s313 = sphi 0, %s311
    %s314 = sphi 0, %s313
    %s328 = sphi 0, %s314
    %s334 = sphi 0, %s336
    %s337 = sphi 0, %s334
    %s338 = sphi 0, %s337
    %s354 = sphi 0, %s338
  $region4: #{forward.4} parent=0 // loop_header_branch
    %23 = sbr.rel (%p21) target = $region8
  $region5: #{forward.4} parent=0 // loop_body
    %s25 = ssub.s32 %s20, 1
    %s26 = ssub.s32 %s20, 2
    %s27 = sadd.s32 %s20, 1
    %s28 = ssub.s32 %s20, %s27
    %p29 = scmp.eq.s32.totalorder %s28, 0
    %s31 = sadd.s32 %s30, 1
    %s32 = scalar_select %p29, %s30, %s31
    %p35 = pneg %p29
    %p36 = scmp.eq.s32.totalorder %s20, 1
    %p37 = por %p35, %p36
    %p38 = scmp.ne.s32.totalorder %s30, %s33
    %p39 = scmp.eq.s32.totalorder %s20, 0
    %p40 = por %p38, %p39
    %p41 = scmp.ne.s32.totalorder %s30, %s33
    %p42 = scmp.eq.s32.totalorder %s25, 1
    %p43 = por %p41, %p42
    %p44 = scmp.ne.s32.totalorder %s33, %s34
    %p45 = scmp.eq.s32.totalorder %s25, 0
    %p46 = por %p44, %p45
    %p47 = scmp.ne.s32.totalorder %s33, %s34
    %p48 = scmp.eq.s32.totalorder %s26, 1
    %p49 = por %p47, %p48
    %p51 = scmp.ne.s32.totalorder %s34, %s50
    %p52 = scmp.eq.s32.totalorder %s26, 0
    %p53 = por %p51, %p52
    %s54 = ssub.s32 %s20, %s27
    %p55 = scmp.eq.s32.totalorder %s54, 0
    %s57 = sadd.s32 %s56, 1
    %s58 = scalar_select %p55, %s56, %s57
    %p61 = pneg %p55
    %p62 = scmp.eq.s32.totalorder %s20, 1
    %p63 = por %p61, %p62
    %p64 = scmp.ne.s32.totalorder %s56, %s59
    %p65 = scmp.eq.s32.totalorder %s20, 0
    %p66 = por %p64, %p65
    %p67 = scmp.ne.s32.totalorder %s56, %s59
    %p68 = scmp.eq.s32.totalorder %s25, 1
    %p69 = por %p67, %p68
    %p70 = scmp.ne.s32.totalorder %s59, %s60
    %p71 = scmp.eq.s32.totalorder %s25, 0
    %p72 = por %p70, %p71
    %p73 = scmp.ne.s32.totalorder %s59, %s60
    %p74 = scmp.eq.s32.totalorder %s26, 1
    %p75 = por %p73, %p74
    %p77 = scmp.ne.s32.totalorder %s60, %s76
    %p78 = scmp.eq.s32.totalorder %s26, 0
    %p79 = por %p77, %p78
    %s81 = sadd.s32 %s80, 1
    %p84 = scmp.eq.s32.totalorder %s20, 1
    %p85 = scmp.ne.s32.totalorder %s80, %s82
    %p86 = scmp.eq.s32.totalorder %s20, 0
    %p87 = por %p85, %p86
    %p88 = scmp.ne.s32.totalorder %s80, %s82
    %p89 = scmp.eq.s32.totalorder %s25, 1
    %p90 = por %p88, %p89
    %p91 = scmp.ne.s32.totalorder %s82, %s83
    %p92 = scmp.eq.s32.totalorder %s25, 0
    %p93 = por %p91, %p92
    %p94 = scmp.ne.s32.totalorder %s82, %s83
    %p95 = scmp.eq.s32.totalorder %s26, 1
    %p96 = por %p94, %p95
    %p98 = scmp.ne.s32.totalorder %s83, %s97
    %p99 = scmp.eq.s32.totalorder %s26, 0
    %p100 = por %p98, %p99
    %s102 = sadd.s32 %s101, 1
    %p105 = scmp.eq.s32.totalorder %s20, 1
    %p106 = scmp.ne.s32.totalorder %s101, %s103
    %p107 = scmp.eq.s32.totalorder %s20, 0
    %p108 = por %p106, %p107
    %p109 = scmp.ne.s32.totalorder %s101, %s103
    %p110 = scmp.eq.s32.totalorder %s25, 1
    %p111 = por %p109, %p110
    %p112 = scmp.ne.s32.totalorder %s103, %s104
    %p113 = scmp.eq.s32.totalorder %s25, 0
    %p114 = por %p112, %p113
    %p115 = scmp.ne.s32.totalorder %s103, %s104
    %p116 = scmp.eq.s32.totalorder %s26, 1
    %p117 = por %p115, %p116
    %p119 = scmp.ne.s32.totalorder %s104, %s118
    %p120 = scmp.eq.s32.totalorder %s26, 0
    %p121 = por %p119, %p120
    %s123 = sadd.s32 %s122, 1
    %p126 = scmp.eq.s32.totalorder %s20, 1
    %p127 = scmp.ne.s32.totalorder %s122, %s124
    %p128 = scmp.eq.s32.totalorder %s20, 0
    %p129 = por %p127, %p128
    %p130 = scmp.ne.s32.totalorder %s122, %s124
    %p131 = scmp.eq.s32.totalorder %s25, 1
    %p132 = por %p130, %p131
    %p133 = scmp.ne.s32.totalorder %s124, %s125
    %p134 = scmp.eq.s32.totalorder %s25, 0
    %p135 = por %p133, %p134
    %p136 = scmp.ne.s32.totalorder %s124, %s125
    %p137 = scmp.eq.s32.totalorder %s26, 1
    %p138 = por %p136, %p137
    %p140 = scmp.ne.s32.totalorder %s125, %s139
    %p141 = scmp.eq.s32.totalorder %s26, 0
    %p142 = por %p140, %p141
    %s144 = sadd.s32 %s143, 1
    %p147 = scmp.eq.s32.totalorder %s20, 1
    %p148 = scmp.ne.s32.totalorder %s143, %s145
    %p149 = scmp.eq.s32.totalorder %s20, 0
    %p150 = por %p148, %p149
    %p151 = scmp.ne.s32.totalorder %s143, %s145
    %p152 = scmp.eq.s32.totalorder %s25, 1
    %p153 = por %p151, %p152
    %p154 = scmp.ne.s32.totalorder %s145, %s146
    %p155 = scmp.eq.s32.totalorder %s25, 0
    %p156 = por %p154, %p155
    %p157 = scmp.ne.s32.totalorder %s145, %s146
    %p158 = scmp.eq.s32.totalorder %s26, 1
    %p159 = por %p157, %p158
    %p161 = scmp.ne.s32.totalorder %s146, %s160
    %p162 = scmp.eq.s32.totalorder %s26, 0
    %p163 = por %p161, %p162
    %s165 = sadd.s32 %s164, 1
    %p168 = scmp.eq.s32.totalorder %s20, 1
    %p169 = scmp.ne.s32.totalorder %s164, %s166
    %p170 = scmp.eq.s32.totalorder %s20, 0
    %p171 = por %p169, %p170
    %p172 = scmp.ne.s32.totalorder %s164, %s166
    %p173 = scmp.eq.s32.totalorder %s25, 1
    %p174 = por %p172, %p173
    %p175 = scmp.ne.s32.totalorder %s166, %s167
    %p176 = scmp.eq.s32.totalorder %s25, 0
    %p177 = por %p175, %p176
    %p178 = scmp.ne.s32.totalorder %s166, %s167
    %p179 = scmp.eq.s32.totalorder %s26, 1
    %p180 = por %p178, %p179
    %p182 = scmp.ne.s32.totalorder %s167, %s181
    %p183 = scmp.eq.s32.totalorder %s26, 0
    %p184 = por %p182, %p183
    %s186 = sadd.s32 %s185, 1
    %p189 = scmp.eq.s32.totalorder %s20, 1
    %p190 = scmp.ne.s32.totalorder %s185, %s187
    %p191 = scmp.eq.s32.totalorder %s20, 0
    %p192 = por %p190, %p191
    %p193 = scmp.ne.s32.totalorder %s185, %s187
    %p194 = scmp.eq.s32.totalorder %s25, 1
    %p195 = por %p193, %p194
    %p196 = scmp.ne.s32.totalorder %s187, %s188
    %p197 = scmp.eq.s32.totalorder %s25, 0
    %p198 = por %p196, %p197
    %p199 = scmp.ne.s32.totalorder %s187, %s188
    %p200 = scmp.eq.s32.totalorder %s26, 1
    %p201 = por %p199, %p200
    %p203 = scmp.ne.s32.totalorder %s188, %s202
    %p204 = scmp.eq.s32.totalorder %s26, 0
    %p205 = por %p203, %p204
    %s207 = sadd.s32 %s206, 1
    %p210 = scmp.eq.s32.totalorder %s20, 1
    %p211 = scmp.ne.s32.totalorder %s206, %s208
    %p212 = scmp.eq.s32.totalorder %s20, 0
    %p213 = por %p211, %p212
    %p214 = scmp.ne.s32.totalorder %s206, %s208
    %p215 = scmp.eq.s32.totalorder %s25, 1
    %p216 = por %p214, %p215
    %p217 = scmp.ne.s32.totalorder %s208, %s209
    %p218 = scmp.eq.s32.totalorder %s25, 0
    %p219 = por %p217, %p218
    %p220 = scmp.ne.s32.totalorder %s208, %s209
    %p221 = scmp.eq.s32.totalorder %s26, 1
    %p222 = por %p220, %p221
    %p224 = scmp.ne.s32.totalorder %s209, %s223
    %p225 = scmp.eq.s32.totalorder %s26, 0
    %p226 = por %p224, %p225
    %s228 = sadd.s32 %s227, 1
    %p231 = scmp.eq.s32.totalorder %s20, 1
    %p232 = scmp.ne.s32.totalorder %s227, %s229
    %p233 = scmp.eq.s32.totalorder %s20, 0
    %p234 = por %p232, %p233
    %p235 = scmp.ne.s32.totalorder %s227, %s229
    %p236 = scmp.eq.s32.totalorder %s25, 1
    %p237 = por %p235, %p236
    %p238 = scmp.ne.s32.totalorder %s229, %s230
    %p239 = scmp.eq.s32.totalorder %s25, 0
    %p240 = por %p238, %p239
    %p241 = scmp.ne.s32.totalorder %s229, %s230
    %p242 = scmp.eq.s32.totalorder %s26, 1
    %p243 = por %p241, %p242
    %p245 = scmp.ne.s32.totalorder %s230, %s244
    %p246 = scmp.eq.s32.totalorder %s26, 0
    %p247 = por %p245, %p246
    %s249 = sadd.s32 %s248, 1
    %p252 = scmp.eq.s32.totalorder %s20, 1
    %p253 = scmp.ne.s32.totalorder %s248, %s250
    %p254 = scmp.eq.s32.totalorder %s20, 0
    %p255 = por %p253, %p254
    %p256 = scmp.ne.s32.totalorder %s248, %s250
    %p257 = scmp.eq.s32.totalorder %s25, 1
    %p258 = por %p256, %p257
    %p259 = scmp.ne.s32.totalorder %s250, %s251
    %p260 = scmp.eq.s32.totalorder %s25, 0
    %p261 = por %p259, %p260
    %p262 = scmp.ne.s32.totalorder %s250, %s251
    %p263 = scmp.eq.s32.totalorder %s26, 1
    %p264 = por %p262, %p263
    %p266 = scmp.ne.s32.totalorder %s251, %s265
    %p267 = scmp.eq.s32.totalorder %s26, 0
    %p268 = por %p266, %p267
    %s270 = sadd.s32 %s269, 1
    %p273 = scmp.eq.s32.totalorder %s20, 1
    %p274 = scmp.ne.s32.totalorder %s269, %s271
    %p275 = scmp.eq.s32.totalorder %s20, 0
    %p276 = por %p274, %p275
    %p277 = scmp.ne.s32.totalorder %s269, %s271
    %p278 = scmp.eq.s32.totalorder %s25, 1
    %p279 = por %p277, %p278
    %p280 = scmp.ne.s32.totalorder %s271, %s272
    %p281 = scmp.eq.s32.totalorder %s25, 0
    %p282 = por %p280, %p281
    %p283 = scmp.ne.s32.totalorder %s271, %s272
    %p284 = scmp.eq.s32.totalorder %s26, 1
    %p285 = por %p283, %p284
    %p287 = scmp.ne.s32.totalorder %s272, %s286
    %p288 = scmp.eq.s32.totalorder %s26, 0
    %p289 = por %p287, %p288
    %s291 = sadd.s32 %s290, 1
    %p294 = scmp.eq.s32.totalorder %s20, 1
    %p295 = scmp.ne.s32.totalorder %s290, %s292
    %p296 = scmp.eq.s32.totalorder %s20, 0
    %p297 = por %p295, %p296
    %p298 = scmp.ne.s32.totalorder %s290, %s292
    %p299 = scmp.eq.s32.totalorder %s25, 1
    %p300 = por %p298, %p299
    %p301 = scmp.ne.s32.totalorder %s292, %s293
    %p302 = scmp.eq.s32.totalorder %s25, 0
    %p303 = por %p301, %p302
    %p304 = scmp.ne.s32.totalorder %s292, %s293
    %p305 = scmp.eq.s32.totalorder %s26, 1
    %p306 = por %p304, %p305
    %p308 = scmp.ne.s32.totalorder %s293, %s307
    %p309 = scmp.eq.s32.totalorder %s26, 0
    %p310 = por %p308, %p309
    %s312 = sadd.s32 %s311, 1
    %p315 = scmp.eq.s32.totalorder %s20, 1
    %p316 = scmp.ne.s32.totalorder %s311, %s313
    %p317 = scmp.eq.s32.totalorder %s20, 0
    %p318 = por %p316, %p317
    %p319 = scmp.ne.s32.totalorder %s311, %s313
    %p320 = scmp.eq.s32.totalorder %s25, 1
    %p321 = por %p319, %p320
    %p322 = scmp.ne.s32.totalorder %s313, %s314
    %p323 = scmp.eq.s32.totalorder %s25, 0
    %p324 = por %p322, %p323
    %p325 = scmp.ne.s32.totalorder %s313, %s314
    %p326 = scmp.eq.s32.totalorder %s26, 1
    %p327 = por %p325, %p326
    %p329 = scmp.ne.s32.totalorder %s314, %s328
    %p330 = scmp.eq.s32.totalorder %s26, 0
    %p331 = por %p329, %p330
    %s332 = ssub.s32 %s20, %s27
    %p333 = scmp.eq.s32.totalorder %s332, 0
    %s335 = sadd.s32 %s334, 1
    %s336 = scalar_select %p333, %s334, %s335
    %p339 = pneg %p333
    %p340 = scmp.eq.s32.totalorder %s20, 1
    %p341 = por %p339, %p340
    %p342 = scmp.ne.s32.totalorder %s334, %s337
    %p343 = scmp.eq.s32.totalorder %s20, 0
    %p344 = por %p342, %p343
    %p345 = scmp.ne.s32.totalorder %s334, %s337
    %p346 = scmp.eq.s32.totalorder %s25, 1
    %p347 = por %p345, %p346
    %p348 = scmp.ne.s32.totalorder %s337, %s338
    %p349 = scmp.eq.s32.totalorder %s25, 0
    %p350 = por %p348, %p349
    %p351 = scmp.ne.s32.totalorder %s337, %s338
    %p352 = scmp.eq.s32.totalorder %s26, 1
    %p353 = por %p351, %p352
    %p355 = scmp.ne.s32.totalorder %s338, %s354
    %p356 = scmp.eq.s32.totalorder %s26, 0
    %p357 = por %p355, %p356
    %p358 = scmp.le.s32.totalorder 1, %s20
    %p359 = scmp.lt.s32.totalorder %s20, 3
    %p360 = pnand %p358, %p359
    %p361 = pneg %p360
    // Predicated region
    $region9: #{forward.4} parent=5 // pred_check
      _
    $region10: #{forward.4} parent=5 // pred_check_branch
      %363 = sbr.rel (%p360) target = $region12
    $region11: #{forward.4} parent=5 // pred_region
      %s364 = ssub.s32 %s20, 1
      // Predicated region
      $region13: #{forward.4} parent=11 // pred_check
        %p365 = pneg %p93
      $region14: #{forward.4} parent=11 // pred_check_branch
        %367 = sbr.rel (%p365) target = $region16
      $region15: #{forward.4} parent=11 // pred_region
        _
      $region16: #{forward.4} parent=11 // pred_fallthru
        _
      // Predicated region
      $region17: #{forward.4} parent=11 // pred_check
        %p368 = pneg %p114
      $region18: #{forward.4} parent=11 // pred_check_branch
        %370 = sbr.rel (%p368) target = $region20
      $region19: #{forward.4} parent=11 // pred_region
        _
      $region20: #{forward.4} parent=11 // pred_fallthru
        _
      // Predicated region
      $region21: #{forward.4} parent=11 // pred_check
        %p371 = pneg %p135
      $region22: #{forward.4} parent=11 // pred_check_branch
        %373 = sbr.rel (%p371) target = $region24
      $region23: #{forward.4} parent=11 // pred_region
        _
      $region24: #{forward.4} parent=11 // pred_fallthru
        _
      // Predicated region
      $region25: #{forward.4} parent=11 // pred_check
        %p374 = pneg %p156
      $region26: #{forward.4} parent=11 // pred_check_branch
        %376 = sbr.rel (%p374) target = $region28
      $region27: #{forward.4} parent=11 // pred_region
        _
      $region28: #{forward.4} parent=11 // pred_fallthru
        _
      // Predicated region
      $region29: #{forward.4} parent=11 // pred_check
        %p377 = pneg %p177
      $region30: #{forward.4} parent=11 // pred_check_branch
        %379 = sbr.rel (%p377) target = $region32
      $region31: #{forward.4} parent=11 // pred_region
        _
      $region32: #{forward.4} parent=11 // pred_fallthru
        _
      // Predicated region
      $region33: #{forward.4} parent=11 // pred_check
        %p380 = pneg %p198
      $region34: #{forward.4} parent=11 // pred_check_branch
        %382 = sbr.rel (%p380) target = $region36
      $region35: #{forward.4} parent=11 // pred_region
        _
      $region36: #{forward.4} parent=11 // pred_fallthru
        _
      // Predicated region
      $region37: #{forward.4} parent=11 // pred_check
        %p383 = pneg %p219
      $region38: #{forward.4} parent=11 // pred_check_branch
        %385 = sbr.rel (%p383) target = $region40
      $region39: #{forward.4} parent=11 // pred_region
        _
      $region40: #{forward.4} parent=11 // pred_fallthru
        _
      // Predicated region
      $region41: #{forward.4} parent=11 // pred_check
        %p386 = pneg %p240
      $region42: #{forward.4} parent=11 // pred_check_branch
        %388 = sbr.rel (%p386) target = $region44
      $region43: #{forward.4} parent=11 // pred_region
        _
      $region44: #{forward.4} parent=11 // pred_fallthru
        _
      // Predicated region
      $region45: #{forward.4} parent=11 // pred_check
        %p389 = pneg %p261
      $region46: #{forward.4} parent=11 // pred_check_branch
        %391 = sbr.rel (%p389) target = $region48
      $region47: #{forward.4} parent=11 // pred_region
        _
      $region48: #{forward.4} parent=11 // pred_fallthru
        _
      // Predicated region
      $region49: #{forward.4} parent=11 // pred_check
        %p392 = pneg %p282
      $region50: #{forward.4} parent=11 // pred_check_branch
        %394 = sbr.rel (%p392) target = $region52
      $region51: #{forward.4} parent=11 // pred_region
        _
      $region52: #{forward.4} parent=11 // pred_fallthru
        _
      // Predicated region
      $region53: #{forward.4} parent=11 // pred_check
        %p395 = pneg %p303
      $region54: #{forward.4} parent=11 // pred_check_branch
        %397 = sbr.rel (%p395) target = $region56
      $region55: #{forward.4} parent=11 // pred_region
        _
      $region56: #{forward.4} parent=11 // pred_fallthru
        _
      // Predicated region
      $region57: #{forward.4} parent=11 // pred_check
        %p398 = pneg %p324
      $region58: #{forward.4} parent=11 // pred_check_branch
        %400 = sbr.rel (%p398) target = $region60
      $region59: #{forward.4} parent=11 // pred_region
        _
      $region60: #{forward.4} parent=11 // pred_fallthru
        _
    $region12: #{forward.4} parent=5 // pred_fallthru
      _
    %p401 = scmp.lt.s32.totalorder %s20, 2
    // Predicated region
    $region61: #{forward.4} parent=5 // pred_check
      %p402 = pneg %p401
    $region62: #{forward.4} parent=5 // pred_check_branch
      %404 = sbr.rel (%p402) target = $region64
    $region63: #{forward.4} parent=5 // pred_region
      // Predicated region
      $region65: #{forward.4} parent=63 // pred_check
        %p405 = pneg %p40
      $region66: #{forward.4} parent=63 // pred_check_branch
        %407 = sbr.rel (%p405) target = $region68
      $region67: #{forward.4} parent=63 // pred_region
        %p408 = scmp.lt.s32.totalorder %s20, 1
        %s409 = scalar_select %p408, %s20, 1
        %s410 = smul.addr %s409, 4
        %s411 = scalar_lea.vmem %s0, %s410
      $region68: #{forward.4} parent=63 // pred_fallthru
        _
      // Predicated region
      $region69: #{forward.4} parent=63 // pred_check
        %p412 = pneg %p66
      $region70: #{forward.4} parent=63 // pred_check_branch
        %414 = sbr.rel (%p412) target = $region72
      $region71: #{forward.4} parent=63 // pred_region
        %p415 = scmp.lt.s32.totalorder %s20, 1
        %s416 = scalar_select %p415, %s20, 1
        %s417 = scalar_lea.vmem %s1, %s416
      $region72: #{forward.4} parent=63 // pred_fallthru
        _
    $region64: #{forward.4} parent=5 // pred_fallthru
      _
    %p418 = scmp.le.s32.totalorder 1, %s20
    %p419 = scmp.lt.s32.totalorder %s20, 3
    %p420 = pnand %p418, %p419
    %p421 = pneg %p420
    // Predicated region
    $region73: #{forward.4} parent=5 // pred_check
      _
    $region74: #{forward.4} parent=5 // pred_check_branch
      %423 = sbr.rel (%p420) target = $region76
    $region75: #{forward.4} parent=5 // pred_region
      %s424 = ssub.s32 %s20, 1
      %p425 = scmp.lt.s32.totalorder %s25, 1
      %s426 = scalar_select %p425, %s25, 1
      %s427 = smul.addr %s426, 4
      %s428 = scalar_lea.vmem %s0, %s427
      %p429 = pneg %p46
      %p430 = pneg %p43
      %p431 = scmp.lt.s32.totalorder %s25, 1
      %s432 = scalar_select %p431, %s25, 1
      %s433 = scalar_lea.vmem %s1, %s432
      %p434 = pneg %p72
      %p435 = pneg %p69
      %p436 = pneg %p93
      %p437 = pneg %p90
      %p438 = pneg %p114
      %p439 = pneg %p111
      %p440 = pneg %p135
      %p441 = pneg %p132
      %p442 = pneg %p156
      %p443 = pneg %p153
      %p444 = pneg %p177
      %p445 = pneg %p174
      %p446 = pneg %p198
      %p447 = pneg %p195
      %p448 = pneg %p219
      %p449 = pneg %p216
      %p450 = pneg %p240
      %p451 = pneg %p237
      %p452 = pneg %p261
      %p453 = pneg %p258
      %p454 = pneg %p282
      %p455 = pneg %p279
      %p456 = pneg %p303
      %p457 = pneg %p300
      %p458 = pneg %p324
      %p459 = pneg %p321
      %p460 = pneg %p350
      %p461 = pneg %p347
      %p462 = scmp.lt.s32.totalorder %s25, 1
      %s463 = scalar_select %p462, %s25, 1
      %s464 = smul.addr %s463, 4
      %s465 = scalar_lea.vmem %s14, %s464
      %p466 = scmp.lt.s32.totalorder %s25, 1
      %s467 = scalar_select %p466, %s25, 1
      %s468 = smul.addr %s467, 4
      %s469 = scalar_lea.vmem %s0, %s468
      %p470 = scmp.lt.s32.totalorder %s25, 1
      %s471 = scalar_select %p470, %s25, 1
      %s472 = scalar_lea.vmem %s1, %s471
      %p473 = scmp.lt.s32.totalorder %s25, 1
      %s474 = scalar_select %p473, %s25, 1
      %s475 = smul.addr %s474, 4
      %s476 = scalar_lea.vmem %s14, %s475
      %v478 = vld [vmem:[%s469] sm:$0xf]
      %v479 = vld [vmem:[%s472] sm:$0x1]
      %v480 = vld [vmem:[%s2] sm:$0xf]
      %v481 = vld [vmem:[%s2 + $0x4] sm:$0xf]
      %v482 = vld [vmem:[%s2 + $0x8] sm:$0xf]
      %v483 = vld [vmem:[%s2 + $0xc] sm:$0xf]
      %v484 = vld [vmem:[%s3] sm:$0x1]
      %v485 = vunpack.c.l.bf16 %v484
      %v486 = vlaneseq
      %v487 = vshrl.u32 %v486, 7
      %v488 = vsub.s32 0, %v487
      %v489 = vrot.slane %v485, %v488
      %v494 = vunpack.c.l.b16 %v480
      %v495 = vunpack.c.l.b16 %v481
      %v496 = vunpack.c.l.b16 %v482
      %v497 = vunpack.c.l.b16 %v483
      %v498 = vpack.c.b16 %v495, %v494
      %v499 = vpack.c.b16 %v497, %v496
      %vm502 = vcmask 261120
      %v504 = vsel %vm502, %v478, 0
      %506 = vmatprep.subr.bf16.mxu0 0
      %507 = vmatpush1.bf16.msra.mxu0 %v498
      %508 = vmatprep.subr.bf16.mxu0 0
      %509 = vmatpush1.bf16.msra.mxu0 %v499
      %510 = vmatprep.subr.bf16.mxu0 0
      %511 = vmatpush1.bf16.msra.mxu0 0
      %512 = vmatprep.subr.bf16.mxu0 0
      %513 = vmatpush1.bf16.msra.mxu0 0
      %514 = vmatprep.subr.bf16.mxu0 0
      %515 = vmatpush1.bf16.msra.mxu0 0
      %516 = vmatprep.subr.bf16.mxu0 0
      %517 = vmatpush1.bf16.msra.mxu0 0
      %518 = vmatprep.subr.bf16.mxu0 0
      %519 = vmatpush1.bf16.msra.mxu0 0
      %520 = vmatprep.subr.bf16.mxu0 0
      %521 = vmatpush1.bf16.msra.mxu0 0
      %522 = vmatprep.subr.bf16.mxu0 0
      %523 = vmatpush1.bf16.msra.mxu0 0
      %524 = vmatprep.subr.bf16.mxu0 0
      %525 = vmatpush1.bf16.msra.mxu0 0
      %526 = vmatprep.subr.bf16.mxu0 0
      %527 = vmatpush1.bf16.msra.mxu0 0
      %528 = vmatprep.subr.bf16.mxu0 0
      %529 = vmatpush1.bf16.msra.mxu0 0
      %530 = vmatprep.subr.bf16.mxu0 0
      %531 = vmatpush1.bf16.msra.mxu0 0
      %532 = vmatprep.subr.bf16.mxu0 0
      %533 = vmatpush1.bf16.msra.mxu0 0
      %534 = vmatprep.subr.bf16.mxu0 0
      %535 = vmatpush1.bf16.msra.mxu0 0
      %536 = vmatprep.subr.bf16.mxu0 0
      %537 = vmatpush1.bf16.msra.mxu0 0
      %538 = vmatprep.mubr.bf16.mxu0 0
      %539 = vmatmul.mubr.bf16.gmra.mrb[0].mxu0 %v504
      %v540 = vpop.f32.mrb[0].mxu0
      %v541 = vadd.f32 %v489, %v540
      %v542 = vpop.f32.mrb[0].mxu0
      %v543 = vpop.f32.mrb[0].mxu0
      %v544 = vpop.f32.mrb[0].mxu0
      %545 = vdwg.mxu0
      %547 = vrot.lane.b32.xlu0 %v541, 120
      %v548 = vpop.permute.xlu0 %547
      %550 = vrot.lane.b32.xlu0 %v541, 112
      %v551 = vpop.permute.xlu0 %550
      %553 = vrot.lane.b32.xlu0 %v541, 104
      %v554 = vpop.permute.xlu0 %553
      %v556 = vcombine.low %v541, %v551
      %v557 = vcombine.high %v541, %v551
      %v559 = vunpack.c.l.s4 1983009808
      %v560 = vunpack.c.0.s8 %v559
      %v561 = vlaneseq
      %v562 = vshrl.u32 %v561, 7
      %v563 = vsub.s32 %v560, %v562
      %v564 = vrot.slane %v556, %v563
      %v566 = vunpack.c.l.s4 1983009808
      %v567 = vunpack.c.0.s8 %v566
      %v568 = vlaneseq
      %v569 = vshrl.u32 %v568, 7
      %v570 = vsub.s32 %v567, %v569
      %v571 = vrot.slane %v557, %v570
      %v572 = vcombine.low %v548, %v554
      %v573 = vcombine.high %v548, %v554
      %v575 = vunpack.c.l.s4 1983009808
      %v576 = vunpack.c.0.s8 %v575
      %v577 = vlaneseq
      %v578 = vshrl.u32 %v577, 7
      %v579 = vsub.s32 %v576, %v578
      %v580 = vrot.slane %v572, %v579
      %v582 = vunpack.c.l.s4 1983009808
      %v583 = vunpack.c.0.s8 %v582
      %v584 = vlaneseq
      %v585 = vshrl.u32 %v584, 7
      %v586 = vsub.s32 %v583, %v585
      %v587 = vrot.slane %v573, %v586
      %v588 = vcombine.low %v564, %v580
      %v589 = vcombine.high %v564, %v580
      %v591 = vunpack.c.l.s4 1934713408
      %v592 = vunpack.c.0.s8 %v591
      %v593 = vlaneseq
      %v594 = vshrl.u32 %v593, 7
      %v595 = vsub.s32 %v592, %v594
      %v596 = vrot.slane %v588, %v595
      %v598 = vunpack.c.l.s4 1934713408
      %v599 = vunpack.c.0.s8 %v598
      %v600 = vlaneseq
      %v601 = vshrl.u32 %v600, 7
      %v602 = vsub.s32 %v599, %v601
      %v603 = vrot.slane %v589, %v602
      %v604 = vcombine.low %v571, %v587
      %v605 = vcombine.high %v571, %v587
      %v607 = vunpack.c.l.s4 1934713408
      %v608 = vunpack.c.0.s8 %v607
      %v609 = vlaneseq
      %v610 = vshrl.u32 %v609, 7
      %v611 = vsub.s32 %v608, %v610
      %v612 = vrot.slane %v604, %v611
      %v614 = vunpack.c.l.s4 1934713408
      %v615 = vunpack.c.0.s8 %v614
      %v616 = vlaneseq
      %v617 = vshrl.u32 %v616, 7
      %v618 = vsub.s32 %v615, %v617
      %v619 = vrot.slane %v605, %v618
      %v620 = vcombine.high %v596, 0.0
      %v621 = vcombine.high %v603, 0.0
      %v622 = vcombine.high %v612, 0.0
      %v623 = vcombine.high %v619, 0.0
      %v624 = vcombine.low %v596, %v603
      %v626 = vunpack.c.l.s4 1983009808
      %v627 = vunpack.c.0.s8 %v626
      %v628 = vlaneseq
      %v629 = vshrl.u32 %v628, 7
      %v630 = vsub.s32 %v627, %v629
      %v631 = vrot.slane %v624, %v630
      %v632 = vcombine.low %v620, %v621
      %v634 = vunpack.c.l.s4 1983009808
      %v635 = vunpack.c.0.s8 %v634
      %v636 = vlaneseq
      %v637 = vshrl.u32 %v636, 7
      %v638 = vsub.s32 %v635, %v637
      %v639 = vrot.slane %v632, %v638
      %v640 = vcombine.low %v612, %v619
      %v642 = vunpack.c.l.s4 1983009808
      %v643 = vunpack.c.0.s8 %v642
      %v644 = vlaneseq
      %v645 = vshrl.u32 %v644, 7
      %v646 = vsub.s32 %v643, %v645
      %v647 = vrot.slane %v640, %v646
      %v648 = vcombine.low %v622, %v623
      %v650 = vunpack.c.l.s4 1983009808
      %v651 = vunpack.c.0.s8 %v650
      %v652 = vlaneseq
      %v653 = vshrl.u32 %v652, 7
      %v654 = vsub.s32 %v651, %v653
      %v655 = vrot.slane %v648, %v654
      %v656 = vcombine.low %v631, %v639
      %v657 = vcombine.high %v631, %v639
      %v659 = vunpack.c.l.s4 1934713408
      %v660 = vunpack.c.0.s8 %v659
      %v661 = vlaneseq
      %v662 = vshrl.u32 %v661, 7
      %v663 = vsub.s32 %v660, %v662
      %v664 = vrot.slane %v656, %v663
      %v666 = vunpack.c.l.s4 1934713408
      %v667 = vunpack.c.0.s8 %v666
      %v668 = vlaneseq
      %v669 = vshrl.u32 %v668, 7
      %v670 = vsub.s32 %v667, %v669
      %v671 = vrot.slane %v657, %v670
      %v672 = vcombine.low %v647, %v655
      %v673 = vcombine.high %v647, %v655
      %v675 = vunpack.c.l.s4 1934713408
      %v676 = vunpack.c.0.s8 %v675
      %v677 = vlaneseq
      %v678 = vshrl.u32 %v677, 7
      %v679 = vsub.s32 %v676, %v678
      %v680 = vrot.slane %v672, %v679
      %v682 = vunpack.c.l.s4 1934713408
      %v683 = vunpack.c.0.s8 %v682
      %v684 = vlaneseq
      %v685 = vshrl.u32 %v684, 7
      %v686 = vsub.s32 %v683, %v685
      %v687 = vrot.slane %v673, %v686
      %v688 = vcombine.low %v664, %v680
      %v689 = vcombine.high %v664, %v680
      %v690 = vcombine.low %v671, %v687
      %v691 = vcombine.high %v671, %v687
      %692 = vrot.lane.b32.xlu0 %v541, 96
      %v693 = vpop.permute.xlu0 %692
      %694 = vrot.lane.b32.xlu0 %v548, 96
      %v695 = vpop.permute.xlu0 %694
      %696 = vrot.lane.b32.xlu0 %v551, 96
      %v697 = vpop.permute.xlu0 %696
      %698 = vrot.lane.b32.xlu0 %v554, 96
      %v699 = vpop.permute.xlu0 %698
      %v704 = vcombine.low %v693, %v697
      %v705 = vcombine.high %v693, %v697
      %v707 = vunpack.c.l.s4 1983009808
      %v708 = vunpack.c.0.s8 %v707
      %v709 = vlaneseq
      %v710 = vshrl.u32 %v709, 7
      %v711 = vsub.s32 %v708, %v710
      %v712 = vrot.slane %v704, %v711
      %v714 = vunpack.c.l.s4 1983009808
      %v715 = vunpack.c.0.s8 %v714
      %v716 = vlaneseq
      %v717 = vshrl.u32 %v716, 7
      %v718 = vsub.s32 %v715, %v717
      %v719 = vrot.slane %v705, %v718
      %v720 = vcombine.low %v695, %v699
      %v721 = vcombine.high %v695, %v699
      %v723 = vunpack.c.l.s4 1983009808
      %v724 = vunpack.c.0.s8 %v723
      %v725 = vlaneseq
      %v726 = vshrl.u32 %v725, 7
      %v727 = vsub.s32 %v724, %v726
      %v728 = vrot.slane %v720, %v727
      %v730 = vunpack.c.l.s4 1983009808
      %v731 = vunpack.c.0.s8 %v730
      %v732 = vlaneseq
      %v733 = vshrl.u32 %v732, 7
      %v734 = vsub.s32 %v731, %v733
      %v735 = vrot.slane %v721, %v734
      %v736 = vcombine.low %v712, %v728
      %v737 = vcombine.high %v712, %v728
      %v739 = vunpack.c.l.s4 1934713408
      %v740 = vunpack.c.0.s8 %v739
      %v741 = vlaneseq
      %v742 = vshrl.u32 %v741, 7
      %v743 = vsub.s32 %v740, %v742
      %v744 = vrot.slane %v736, %v743
      %v746 = vunpack.c.l.s4 1934713408
      %v747 = vunpack.c.0.s8 %v746
      %v748 = vlaneseq
      %v749 = vshrl.u32 %v748, 7
      %v750 = vsub.s32 %v747, %v749
      %v751 = vrot.slane %v737, %v750
      %v752 = vcombine.low %v719, %v735
      %v753 = vcombine.high %v719, %v735
      %v755 = vunpack.c.l.s4 1934713408
      %v756 = vunpack.c.0.s8 %v755
      %v757 = vlaneseq
      %v758 = vshrl.u32 %v757, 7
      %v759 = vsub.s32 %v756, %v758
      %v760 = vrot.slane %v752, %v759
      %v762 = vunpack.c.l.s4 1934713408
      %v763 = vunpack.c.0.s8 %v762
      %v764 = vlaneseq
      %v765 = vshrl.u32 %v764, 7
      %v766 = vsub.s32 %v763, %v765
      %v767 = vrot.slane %v753, %v766
      %v768 = vcombine.high %v744, 0.0
      %v769 = vcombine.high %v751, 0.0
      %v770 = vcombine.high %v760, 0.0
      %v771 = vcombine.high %v767, 0.0
      %v772 = vcombine.low %v744, %v751
      %v774 = vunpack.c.l.s4 1983009808
      %v775 = vunpack.c.0.s8 %v774
      %v776 = vlaneseq
      %v777 = vshrl.u32 %v776, 7
      %v778 = vsub.s32 %v775, %v777
      %v779 = vrot.slane %v772, %v778
      %v780 = vcombine.low %v768, %v769
      %v782 = vunpack.c.l.s4 1983009808
      %v783 = vunpack.c.0.s8 %v782
      %v784 = vlaneseq
      %v785 = vshrl.u32 %v784, 7
      %v786 = vsub.s32 %v783, %v785
      %v787 = vrot.slane %v780, %v786
      %v788 = vcombine.low %v760, %v767
      %v790 = vunpack.c.l.s4 1983009808
      %v791 = vunpack.c.0.s8 %v790
      %v792 = vlaneseq
      %v793 = vshrl.u32 %v792, 7
      %v794 = vsub.s32 %v791, %v793
      %v795 = vrot.slane %v788, %v794
      %v796 = vcombine.low %v770, %v771
      %v798 = vunpack.c.l.s4 1983009808
      %v799 = vunpack.c.0.s8 %v798
      %v800 = vlaneseq
      %v801 = vshrl.u32 %v800, 7
      %v802 = vsub.s32 %v799, %v801
      %v803 = vrot.slane %v796, %v802
      %v804 = vcombine.low %v779, %v787
      %v805 = vcombine.high %v779, %v787
      %v807 = vunpack.c.l.s4 1934713408
      %v808 = vunpack.c.0.s8 %v807
      %v809 = vlaneseq
      %v810 = vshrl.u32 %v809, 7
      %v811 = vsub.s32 %v808, %v810
      %v812 = vrot.slane %v804, %v811
      %v814 = vunpack.c.l.s4 1934713408
      %v815 = vunpack.c.0.s8 %v814
      %v816 = vlaneseq
      %v817 = vshrl.u32 %v816, 7
      %v818 = vsub.s32 %v815, %v817
      %v819 = vrot.slane %v805, %v818
      %v820 = vcombine.low %v795, %v803
      %v821 = vcombine.high %v795, %v803
      %v823 = vunpack.c.l.s4 1934713408
      %v824 = vunpack.c.0.s8 %v823
      %v825 = vlaneseq
      %v826 = vshrl.u32 %v825, 7
      %v827 = vsub.s32 %v824, %v826
      %v828 = vrot.slane %v820, %v827
      %v830 = vunpack.c.l.s4 1934713408
      %v831 = vunpack.c.0.s8 %v830
      %v832 = vlaneseq
      %v833 = vshrl.u32 %v832, 7
      %v834 = vsub.s32 %v831, %v833
      %v835 = vrot.slane %v821, %v834
      %v836 = vcombine.low %v812, %v828
      %v837 = vcombine.high %v812, %v828
      %v838 = vcombine.low %v819, %v835
      %v839 = vcombine.high %v819, %v835
      %840 = vrot.lane.b32.xlu0 %v541, 64
      %v841 = vpop.permute.xlu0 %840
      %842 = vrot.lane.b32.xlu0 %v548, 64
      %v843 = vpop.permute.xlu0 %842
      %844 = vrot.lane.b32.xlu0 %v551, 64
      %v845 = vpop.permute.xlu0 %844
      %846 = vrot.lane.b32.xlu0 %v554, 64
      %v847 = vpop.permute.xlu0 %846
      %v852 = vcombine.low %v841, %v845
      %v853 = vcombine.high %v841, %v845
      %v855 = vunpack.c.l.s4 1983009808
      %v856 = vunpack.c.0.s8 %v855
      %v857 = vlaneseq
      %v858 = vshrl.u32 %v857, 7
      %v859 = vsub.s32 %v856, %v858
      %v860 = vrot.slane %v852, %v859
      %v862 = vunpack.c.l.s4 1983009808
      %v863 = vunpack.c.0.s8 %v862
      %v864 = vlaneseq
      %v865 = vshrl.u32 %v864, 7
      %v866 = vsub.s32 %v863, %v865
      %v867 = vrot.slane %v853, %v866
      %v868 = vcombine.low %v843, %v847
      %v869 = vcombine.high %v843, %v847
      %v871 = vunpack.c.l.s4 1983009808
      %v872 = vunpack.c.0.s8 %v871
      %v873 = vlaneseq
      %v874 = vshrl.u32 %v873, 7
      %v875 = vsub.s32 %v872, %v874
      %v876 = vrot.slane %v868, %v875
      %v878 = vunpack.c.l.s4 1983009808
      %v879 = vunpack.c.0.s8 %v878
      %v880 = vlaneseq
      %v881 = vshrl.u32 %v880, 7
      %v882 = vsub.s32 %v879, %v881
      %v883 = vrot.slane %v869, %v882
      %v884 = vcombine.low %v860, %v876
      %v885 = vcombine.high %v860, %v876
      %v887 = vunpack.c.l.s4 1934713408
      %v888 = vunpack.c.0.s8 %v887
      %v889 = vlaneseq
      %v890 = vshrl.u32 %v889, 7
      %v891 = vsub.s32 %v888, %v890
      %v892 = vrot.slane %v884, %v891
      %v894 = vunpack.c.l.s4 1934713408
      %v895 = vunpack.c.0.s8 %v894
      %v896 = vlaneseq
      %v897 = vshrl.u32 %v896, 7
      %v898 = vsub.s32 %v895, %v897
      %v899 = vrot.slane %v885, %v898
      %v900 = vcombine.low %v867, %v883
      %v901 = vcombine.high %v867, %v883
      %v903 = vunpack.c.l.s4 1934713408
      %v904 = vunpack.c.0.s8 %v903
      %v905 = vlaneseq
      %v906 = vshrl.u32 %v905, 7
      %v907 = vsub.s32 %v904, %v906
      %v908 = vrot.slane %v900, %v907
      %v910 = vunpack.c.l.s4 1934713408
      %v911 = vunpack.c.0.s8 %v910
      %v912 = vlaneseq
      %v913 = vshrl.u32 %v912, 7
      %v914 = vsub.s32 %v911, %v913
      %v915 = vrot.slane %v901, %v914
      %v916 = vcombine.high %v892, 0.0
      %v917 = vcombine.high %v899, 0.0
      %v918 = vcombine.high %v908, 0.0
      %v919 = vcombine.high %v915, 0.0
      %v920 = vcombine.low %v892, %v899
      %v922 = vunpack.c.l.s4 1983009808
      %v923 = vunpack.c.0.s8 %v922
      %v924 = vlaneseq
      %v925 = vshrl.u32 %v924, 7
      %v926 = vsub.s32 %v923, %v925
      %v927 = vrot.slane %v920, %v926
      %v928 = vcombine.low %v916, %v917
      %v930 = vunpack.c.l.s4 1983009808
      %v931 = vunpack.c.0.s8 %v930
      %v932 = vlaneseq
      %v933 = vshrl.u32 %v932, 7
      %v934 = vsub.s32 %v931, %v933
      %v935 = vrot.slane %v928, %v934
      %v936 = vcombine.low %v908, %v915
      %v938 = vunpack.c.l.s4 1983009808
      %v939 = vunpack.c.0.s8 %v938
      %v940 = vlaneseq
      %v941 = vshrl.u32 %v940, 7
      %v942 = vsub.s32 %v939, %v941
      %v943 = vrot.slane %v936, %v942
      %v944 = vcombine.low %v918, %v919
      %v946 = vunpack.c.l.s4 1983009808
      %v947 = vunpack.c.0.s8 %v946
      %v948 = vlaneseq
      %v949 = vshrl.u32 %v948, 7
      %v950 = vsub.s32 %v947, %v949
      %v951 = vrot.slane %v944, %v950
      %v952 = vcombine.low %v927, %v935
      %v953 = vcombine.high %v927, %v935
      %v955 = vunpack.c.l.s4 1934713408
      %v956 = vunpack.c.0.s8 %v955
      %v957 = vlaneseq
      %v958 = vshrl.u32 %v957, 7
      %v959 = vsub.s32 %v956, %v958
      %v960 = vrot.slane %v952, %v959
      %v962 = vunpack.c.l.s4 1934713408
      %v963 = vunpack.c.0.s8 %v962
      %v964 = vlaneseq
      %v965 = vshrl.u32 %v964, 7
      %v966 = vsub.s32 %v963, %v965
      %v967 = vrot.slane %v953, %v966
      %v968 = vcombine.low %v943, %v951
      %v969 = vcombine.high %v943, %v951
      %v971 = vunpack.c.l.s4 1934713408
      %v972 = vunpack.c.0.s8 %v971
      %v973 = vlaneseq
      %v974 = vshrl.u32 %v973, 7
      %v975 = vsub.s32 %v972, %v974
      %v976 = vrot.slane %v968, %v975
      %v978 = vunpack.c.l.s4 1934713408
      %v979 = vunpack.c.0.s8 %v978
      %v980 = vlaneseq
      %v981 = vshrl.u32 %v980, 7
      %v982 = vsub.s32 %v979, %v981
      %v983 = vrot.slane %v969, %v982
      %v984 = vcombine.low %v960, %v976
      %v985 = vcombine.high %v960, %v976
      %v986 = vcombine.low %v967, %v983
      %v987 = vcombine.high %v967, %v983
      %v988 = vpack.c.bf16 %v688, %v688
      %v989 = vpack.c.bf16 %v689, %v689
      %v990 = vpack.c.bf16 %v690, %v690
      %v991 = vpack.c.bf16 %v691, %v691
      %v992 = vpack.c.bf16 %v836, %v836
      %v993 = vpack.c.bf16 %v837, %v837
      %v994 = vpack.c.bf16 %v838, %v838
      %v995 = vpack.c.bf16 %v839, %v839
      %vm996 = vcmask 64512
      %v998 = vsel %vm996, %v988, 0
      %v1001 = vsel %vm996, %v992, 0
      %1003 = vmatprep.subr.bf16.mxu0 0
      %1004 = vmatpush1.bf16.xpose.msra.mxu0 %v1001
      %1005 = vmatprep.subr.bf16.mxu0 0
      %1006 = vmatpush1.bf16.xpose.msra.mxu0 0
      %1007 = vmatprep.subr.bf16.mxu0 0
      %1008 = vmatpush1.bf16.xpose.msra.mxu0 0
      %1009 = vmatprep.subr.bf16.mxu0 0
      %1010 = vmatpush1.bf16.xpose.msra.mxu0 0
      %1011 = vmatprep.subr.bf16.mxu0 0
      %1012 = vmatpush1.bf16.xpose.msra.mxu0 0
      %1013 = vmatprep.subr.bf16.mxu0 0
      %1014 = vmatpush1.bf16.xpose.msra.mxu0 0
      %1015 = vmatprep.subr.bf16.mxu0 0
      %1016 = vmatpush1.bf16.xpose.msra.mxu0 0
      %1017 = vmatprep.subr.bf16.mxu0 0
      %1018 = vmatpush1.bf16.xpose.msra.mxu0 0
      %1019 = vmatprep.subr.bf16.mxu0 0
      %1020 = vmatpush1.bf16.xpose.msra.mxu0 0
      %1021 = vmatprep.subr.bf16.mxu0 0
      %1022 = vmatpush1.bf16.xpose.msra.mxu0 0
      %1023 = vmatprep.subr.bf16.mxu0 0
      %1024 = vmatpush1.bf16.xpose.msra.mxu0 0
      %1025 = vmatprep.subr.bf16.mxu0 0
      %1026 = vmatpush1.bf16.xpose.msra.mxu0 0
      %1027 = vmatprep.subr.bf16.mxu0 0
      %1028 = vmatpush1.bf16.xpose.msra.mxu0 0
      %1029 = vmatprep.subr.bf16.mxu0 0
      %1030 = vmatpush1.bf16.xpose.msra.mxu0 0
      %1031 = vmatprep.subr.bf16.mxu0 0
      %1032 = vmatpush1.bf16.xpose.msra.mxu0 0
      %1033 = vmatprep.subr.bf16.mxu0 0
      %1034 = vmatpush1.bf16.xpose.msra.mxu0 0
      %1035 = vmatprep.mubr.bf16.mxu0 0
      %1036 = vmatmul.mubr.bf16.gmra.mrb[0].mxu0 %v998
      %v1037 = vpop.f32.mrb[0].mxu0
      %v1038 = vadd.f32 0.0, %v1037
      %v1039 = vpop.f32.mrb[0].mxu0
      %v1040 = vpop.f32.mrb[0].mxu0
      %v1041 = vpop.f32.mrb[0].mxu0
      %1042 = vdwg.mxu0
      %v1044 = vsel %vm996, %v989, 0
      %v1047 = vsel %vm996, %v993, 0
      %1049 = vmatprep.subr.bf16.mxu0 0
      %1050 = vmatpush1.bf16.xpose.msra.mxu0 %v1047
      %1051 = vmatprep.subr.bf16.mxu0 0
      %1052 = vmatpush1.bf16.xpose.msra.mxu0 0
      %1053 = vmatprep.subr.bf16.mxu0 0
      %1054 = vmatpush1.bf16.xpose.msra.mxu0 0
      %1055 = vmatprep.subr.bf16.mxu0 0
      %1056 = vmatpush1.bf16.xpose.msra.mxu0 0
      %1057 = vmatprep.subr.bf16.mxu0 0
      %1058 = vmatpush1.bf16.xpose.msra.mxu0 0
      %1059 = vmatprep.subr.bf16.mxu0 0
      %1060 = vmatpush1.bf16.xpose.msra.mxu0 0
      %1061 = vmatprep.subr.bf16.mxu0 0
      %1062 = vmatpush1.bf16.xpose.msra.mxu0 0
      %1063 = vmatprep.subr.bf16.mxu0 0
      %1064 = vmatpush1.bf16.xpose.msra.mxu0 0
      %1065 = vmatprep.subr.bf16.mxu0 0
      %1066 = vmatpush1.bf16.xpose.msra.mxu0 0
      %1067 = vmatprep.subr.bf16.mxu0 0
      %1068 = vmatpush1.bf16.xpose.msra.mxu0 0
      %1069 = vmatprep.subr.bf16.mxu0 0
      %1070 = vmatpush1.bf16.xpose.msra.mxu0 0
      %1071 = vmatprep.subr.bf16.mxu0 0
      %1072 = vmatpush1.bf16.xpose.msra.mxu0 0
      %1073 = vmatprep.subr.bf16.mxu0 0
      %1074 = vmatpush1.bf16.xpose.msra.mxu0 0
      %1075 = vmatprep.subr.bf16.mxu0 0
      %1076 = vmatpush1.bf16.xpose.msra.mxu0 0
      %1077 = vmatprep.subr.bf16.mxu0 0
      %1078 = vmatpush1.bf16.xpose.msra.mxu0 0
      %1079 = vmatprep.subr.bf16.mxu0 0
      %1080 = vmatpush1.bf16.xpose.msra.mxu0 0
      %1081 = vmatprep.mubr.bf16.mxu0 0
      %1082 = vmatmul.mubr.bf16.gmra.mrb[0].mxu0 %v1044
      %v1083 = vpop.f32.mrb[0].mxu0
      %v1084 = vadd.f32 0.0, %v1083
      %v1085 = vpop.f32.mrb[0].mxu0
      %v1086 = vpop.f32.mrb[0].mxu0
      %v1087 = vpop.f32.mrb[0].mxu0
      %1088 = vdwg.mxu0
      %v1090 = vsel %vm996, %v990, 0
      %v1093 = vsel %vm996, %v994, 0
      %1095 = vmatprep.subr.bf16.mxu0 0
      %1096 = vmatpush1.bf16.xpose.msra.mxu0 %v1093
      %1097 = vmatprep.subr.bf16.mxu0 0
      %1098 = vmatpush1.bf16.xpose.msra.mxu0 0
      %1099 = vmatprep.subr.bf16.mxu0 0
      %1100 = vmatpush1.bf16.xpose.msra.mxu0 0
      %1101 = vmatprep.subr.bf16.mxu0 0
      %1102 = vmatpush1.bf16.xpose.msra.mxu0 0
      %1103 = vmatprep.subr.bf16.mxu0 0
      %1104 = vmatpush1.bf16.xpose.msra.mxu0 0
      %1105 = vmatprep.subr.bf16.mxu0 0
      %1106 = vmatpush1.bf16.xpose.msra.mxu0 0
      %1107 = vmatprep.subr.bf16.mxu0 0
      %1108 = vmatpush1.bf16.xpose.msra.mxu0 0
      %1109 = vmatprep.subr.bf16.mxu0 0
      %1110 = vmatpush1.bf16.xpose.msra.mxu0 0
      %1111 = vmatprep.subr.bf16.mxu0 0
      %1112 = vmatpush1.bf16.xpose.msra.mxu0 0
      %1113 = vmatprep.subr.bf16.mxu0 0
      %1114 = vmatpush1.bf16.xpose.msra.mxu0 0
      %1115 = vmatprep.subr.bf16.mxu0 0
      %1116 = vmatpush1.bf16.xpose.msra.mxu0 0
      %1117 = vmatprep.subr.bf16.mxu0 0
      %1118 = vmatpush1.bf16.xpose.msra.mxu0 0
      %1119 = vmatprep.subr.bf16.mxu0 0
      %1120 = vmatpush1.bf16.xpose.msra.mxu0 0
      %1121 = vmatprep.subr.bf16.mxu0 0
      %1122 = vmatpush1.bf16.xpose.msra.mxu0 0
      %1123 = vmatprep.subr.bf16.mxu0 0
      %1124 = vmatpush1.bf16.xpose.msra.mxu0 0
      %1125 = vmatprep.subr.bf16.mxu0 0
      %1126 = vmatpush1.bf16.xpose.msra.mxu0 0
      %1127 = vmatprep.mubr.bf16.mxu0 0
      %1128 = vmatmul.mubr.bf16.gmra.mrb[0].mxu0 %v1090
      %v1129 = vpop.f32.mrb[0].mxu0
      %v1130 = vadd.f32 0.0, %v1129
      %v1131 = vpop.f32.mrb[0].mxu0
      %v1132 = vpop.f32.mrb[0].mxu0
      %v1133 = vpop.f32.mrb[0].mxu0
      %1134 = vdwg.mxu0
      %v1136 = vsel %vm996, %v991, 0
      %v1139 = vsel %vm996, %v995, 0
      %1141 = vmatprep.subr.bf16.mxu0 0
      %1142 = vmatpush1.bf16.xpose.msra.mxu0 %v1139
      %1143 = vmatprep.subr.bf16.mxu0 0
      %1144 = vmatpush1.bf16.xpose.msra.mxu0 0
      %1145 = vmatprep.subr.bf16.mxu0 0
      %1146 = vmatpush1.bf16.xpose.msra.mxu0 0
      %1147 = vmatprep.subr.bf16.mxu0 0
      %1148 = vmatpush1.bf16.xpose.msra.mxu0 0
      %1149 = vmatprep.subr.bf16.mxu0 0
      %1150 = vmatpush1.bf16.xpose.msra.mxu0 0
      %1151 = vmatprep.subr.bf16.mxu0 0
      %1152 = vmatpush1.bf16.xpose.msra.mxu0 0
      %1153 = vmatprep.subr.bf16.mxu0 0
      %1154 = vmatpush1.bf16.xpose.msra.mxu0 0
      %1155 = vmatprep.subr.bf16.mxu0 0
      %1156 = vmatpush1.bf16.xpose.msra.mxu0 0
      %1157 = vmatprep.subr.bf16.mxu0 0
      %1158 = vmatpush1.bf16.xpose.msra.mxu0 0
      %1159 = vmatprep.subr.bf16.mxu0 0
      %1160 = vmatpush1.bf16.xpose.msra.mxu0 0
      %1161 = vmatprep.subr.bf16.mxu0 0
      %1162 = vmatpush1.bf16.xpose.msra.mxu0 0
      %1163 = vmatprep.subr.bf16.mxu0 0
      %1164 = vmatpush1.bf16.xpose.msra.mxu0 0
      %1165 = vmatprep.subr.bf16.mxu0 0
      %1166 = vmatpush1.bf16.xpose.msra.mxu0 0
      %1167 = vmatprep.subr.bf16.mxu0 0
      %1168 = vmatpush1.bf16.xpose.msra.mxu0 0
      %1169 = vmatprep.subr.bf16.mxu0 0
      %1170 = vmatpush1.bf16.xpose.msra.mxu0 0
      %1171 = vmatprep.subr.bf16.mxu0 0
      %1172 = vmatpush1.bf16.xpose.msra.mxu0 0
      %1173 = vmatprep.mubr.bf16.mxu0 0
      %1174 = vmatmul.mubr.bf16.gmra.mrb[0].mxu0 %v1136
      %v1175 = vpop.f32.mrb[0].mxu0
      %v1176 = vadd.f32 0.0, %v1175
      %v1177 = vpop.f32.mrb[0].mxu0
      %v1178 = vpop.f32.mrb[0].mxu0
      %v1179 = vpop.f32.mrb[0].mxu0
      %1180 = vdwg.mxu0
      %v1181 = vmul.f32 %v1038, 0.35355338
      %v1182 = vmul.f32 %v1084, 0.35355338
      %v1183 = vmul.f32 %v1130, 0.35355338
      %v1184 = vmul.f32 %v1176, 0.35355338
      %v1186 = vlaneseq
      %v1187 = vshrl.u32 %v1186, 7
      %v1188 = vsub.s32 0, %v1187
      %v1189 = vrot.slane %v479, %v1188
      %v1191 = vadd.f32 %v1181, %v1189
      %v1192 = vadd.f32 %v1182, %v1189
      %v1193 = vadd.f32 %v1183, %v1189
      %v1194 = vadd.f32 %v1184, %v1189
      %v1195 = vsel %vm996, %v1191, -inf
      %1196 = vmax.xlane.f32.xlu0 %v1195
      %v1197 = vpop.xlane.xlu0 %1196
      %v1198 = vsel %vm996, %v1192, -inf
      %1199 = vmax.xlane.f32.xlu0 %v1198
      %v1200 = vpop.xlane.xlu0 %1199
      %v1201 = vsel %vm996, %v1193, -inf
      %1202 = vmax.xlane.f32.xlu0 %v1201
      %v1203 = vpop.xlane.xlu0 %1202
      %v1204 = vsel %vm996, %v1194, -inf
      %1205 = vmax.xlane.f32.xlu0 %v1204
      %v1206 = vpop.xlane.xlu0 %1205
      %v1207 = vsub.f32 %v1191, %v1197
      %v1208 = vsub.f32 %v1192, %v1200
      %v1209 = vsub.f32 %v1193, %v1203
      %v1210 = vsub.f32 %v1194, %v1206
      %v1211 = vmul.f32 %v1207, 1.442695
      %v1212 = vpow.pop %v1211
      %v1213 = vmul.f32 %v1208, 1.442695
      %v1214 = vpow.pop %v1213
      %v1215 = vmul.f32 %v1209, 1.442695
      %v1216 = vpow.pop %v1215
      %v1217 = vmul.f32 %v1210, 1.442695
      %v1218 = vpow.pop %v1217
      %v1219 = vsel %vm996, %v1212, 0.0
      %1220 = vadd.xlane.f32.xlu0 %v1219
      %v1221 = vpop.xlane.xlu0 %1220
      %v1222 = vsel %vm996, %v1214, 0.0
      %1223 = vadd.xlane.f32.xlu0 %v1222
      %v1224 = vpop.xlane.xlu0 %1223
      %v1225 = vsel %vm996, %v1216, 0.0
      %1226 = vadd.xlane.f32.xlu0 %v1225
      %v1227 = vpop.xlane.xlu0 %1226
      %v1228 = vsel %vm996, %v1218, 0.0
      %1229 = vadd.xlane.f32.xlu0 %v1228
      %v1230 = vpop.xlane.xlu0 %1229
      %v1231 = vrcp.pop %v1221
      %v1232 = vrcp.pop %v1224
      %v1233 = vrcp.pop %v1227
      %v1234 = vrcp.pop %v1230
      %v1235 = vmul.f32 %v1212, %v1231
      %v1236 = vmul.f32 %v1214, %v1232
      %v1237 = vmul.f32 %v1216, %v1233
      %v1238 = vmul.f32 %v1218, %v1234
      %v1239 = vpack.c.bf16 %v1235, %v1235
      %v1240 = vpack.c.bf16 %v1236, %v1236
      %v1241 = vpack.c.bf16 %v1237, %v1237
      %v1242 = vpack.c.bf16 %v1238, %v1238
      %v1243 = vpack.c.bf16 %v984, %v984
      %v1244 = vpack.c.bf16 %v985, %v985
      %v1245 = vpack.c.bf16 %v986, %v986
      %v1246 = vpack.c.bf16 %v987, %v987
      %v1248 = vsel %vm996, %v1239, 0
      %vm1250 = vcmask 1043456
      %v1252 = vsel %vm1250, %v1243, 0
      %1254 = vmatprep.subr.bf16.mxu0 0
      %1255 = vmatpush1.bf16.msra.mxu0 %v1252
      %1256 = vmatprep.subr.bf16.mxu0 0
      %1257 = vmatpush1.bf16.msra.mxu0 0
      %1258 = vmatprep.subr.bf16.mxu0 0
      %1259 = vmatpush1.bf16.msra.mxu0 0
      %1260 = vmatprep.subr.bf16.mxu0 0
      %1261 = vmatpush1.bf16.msra.mxu0 0
      %1262 = vmatprep.subr.bf16.mxu0 0
      %1263 = vmatpush1.bf16.msra.mxu0 0
      %1264 = vmatprep.subr.bf16.mxu0 0
      %1265 = vmatpush1.bf16.msra.mxu0 0
      %1266 = vmatprep.subr.bf16.mxu0 0
      %1267 = vmatpush1.bf16.msra.mxu0 0
      %1268 = vmatprep.subr.bf16.mxu0 0
      %1269 = vmatpush1.bf16.msra.mxu0 0
      %1270 = vmatprep.subr.bf16.mxu0 0
      %1271 = vmatpush1.bf16.msra.mxu0 0
      %1272 = vmatprep.subr.bf16.mxu0 0
      %1273 = vmatpush1.bf16.msra.mxu0 0
      %1274 = vmatprep.subr.bf16.mxu0 0
      %1275 = vmatpush1.bf16.msra.mxu0 0
      %1276 = vmatprep.subr.bf16.mxu0 0
      %1277 = vmatpush1.bf16.msra.mxu0 0
      %1278 = vmatprep.subr.bf16.mxu0 0
      %1279 = vmatpush1.bf16.msra.mxu0 0
      %1280 = vmatprep.subr.bf16.mxu0 0
      %1281 = vmatpush1.bf16.msra.mxu0 0
      %1282 = vmatprep.subr.bf16.mxu0 0
      %1283 = vmatpush1.bf16.msra.mxu0 0
      %1284 = vmatprep.subr.bf16.mxu0 0
      %1285 = vmatpush1.bf16.msra.mxu0 0
      %1286 = vmatprep.mubr.bf16.mxu0 0
      %1287 = vmatmul.mubr.bf16.gmra.mrb[0].mxu0 %v1248
      %v1288 = vpop.f32.mrb[0].mxu0
      %v1289 = vadd.f32 0.0, %v1288
      %v1290 = vpop.f32.mrb[0].mxu0
      %v1291 = vpop.f32.mrb[0].mxu0
      %v1292 = vpop.f32.mrb[0].mxu0
      %1293 = vdwg.mxu0
      %v1295 = vsel %vm996, %v1240, 0
      %v1298 = vsel %vm1250, %v1244, 0
      %1300 = vmatprep.subr.bf16.mxu0 0
      %1301 = vmatpush1.bf16.msra.mxu0 %v1298
      %1302 = vmatprep.subr.bf16.mxu0 0
      %1303 = vmatpush1.bf16.msra.mxu0 0
      %1304 = vmatprep.subr.bf16.mxu0 0
      %1305 = vmatpush1.bf16.msra.mxu0 0
      %1306 = vmatprep.subr.bf16.mxu0 0
      %1307 = vmatpush1.bf16.msra.mxu0 0
      %1308 = vmatprep.subr.bf16.mxu0 0
      %1309 = vmatpush1.bf16.msra.mxu0 0
      %1310 = vmatprep.subr.bf16.mxu0 0
      %1311 = vmatpush1.bf16.msra.mxu0 0
      %1312 = vmatprep.subr.bf16.mxu0 0
      %1313 = vmatpush1.bf16.msra.mxu0 0
      %1314 = vmatprep.subr.bf16.mxu0 0
      %1315 = vmatpush1.bf16.msra.mxu0 0
      %1316 = vmatprep.subr.bf16.mxu0 0
      %1317 = vmatpush1.bf16.msra.mxu0 0
      %1318 = vmatprep.subr.bf16.mxu0 0
      %1319 = vmatpush1.bf16.msra.mxu0 0
      %1320 = vmatprep.subr.bf16.mxu0 0
      %1321 = vmatpush1.bf16.msra.mxu0 0
      %1322 = vmatprep.subr.bf16.mxu0 0
      %1323 = vmatpush1.bf16.msra.mxu0 0
      %1324 = vmatprep.subr.bf16.mxu0 0
      %1325 = vmatpush1.bf16.msra.mxu0 0
      %1326 = vmatprep.subr.bf16.mxu0 0
      %1327 = vmatpush1.bf16.msra.mxu0 0
      %1328 = vmatprep.subr.bf16.mxu0 0
      %1329 = vmatpush1.bf16.msra.mxu0 0
      %1330 = vmatprep.subr.bf16.mxu0 0
      %1331 = vmatpush1.bf16.msra.mxu0 0
      %1332 = vmatprep.mubr.bf16.mxu0 0
      %1333 = vmatmul.mubr.bf16.gmra.mrb[0].mxu0 %v1295
      %v1334 = vpop.f32.mrb[0].mxu0
      %v1335 = vadd.f32 0.0, %v1334
      %v1336 = vpop.f32.mrb[0].mxu0
      %v1337 = vpop.f32.mrb[0].mxu0
      %v1338 = vpop.f32.mrb[0].mxu0
      %1339 = vdwg.mxu0
      %v1341 = vsel %vm996, %v1241, 0
      %v1344 = vsel %vm1250, %v1245, 0
      %1346 = vmatprep.subr.bf16.mxu0 0
      %1347 = vmatpush1.bf16.msra.mxu0 %v1344
      %1348 = vmatprep.subr.bf16.mxu0 0
      %1349 = vmatpush1.bf16.msra.mxu0 0
      %1350 = vmatprep.subr.bf16.mxu0 0
      %1351 = vmatpush1.bf16.msra.mxu0 0
      %1352 = vmatprep.subr.bf16.mxu0 0
      %1353 = vmatpush1.bf16.msra.mxu0 0
      %1354 = vmatprep.subr.bf16.mxu0 0
      %1355 = vmatpush1.bf16.msra.mxu0 0
      %1356 = vmatprep.subr.bf16.mxu0 0
      %1357 = vmatpush1.bf16.msra.mxu0 0
      %1358 = vmatprep.subr.bf16.mxu0 0
      %1359 = vmatpush1.bf16.msra.mxu0 0
      %1360 = vmatprep.subr.bf16.mxu0 0
      %1361 = vmatpush1.bf16.msra.mxu0 0
      %1362 = vmatprep.subr.bf16.mxu0 0
      %1363 = vmatpush1.bf16.msra.mxu0 0
      %1364 = vmatprep.subr.bf16.mxu0 0
      %1365 = vmatpush1.bf16.msra.mxu0 0
      %1366 = vmatprep.subr.bf16.mxu0 0
      %1367 = vmatpush1.bf16.msra.mxu0 0
      %1368 = vmatprep.subr.bf16.mxu0 0
      %1369 = vmatpush1.bf16.msra.mxu0 0
      %1370 = vmatprep.subr.bf16.mxu0 0
      %1371 = vmatpush1.bf16.msra.mxu0 0
      %1372 = vmatprep.subr.bf16.mxu0 0
      %1373 = vmatpush1.bf16.msra.mxu0 0
      %1374 = vmatprep.subr.bf16.mxu0 0
      %1375 = vmatpush1.bf16.msra.mxu0 0
      %1376 = vmatprep.subr.bf16.mxu0 0
      %1377 = vmatpush1.bf16.msra.mxu0 0
      %1378 = vmatprep.mubr.bf16.mxu0 0
      %1379 = vmatmul.mubr.bf16.gmra.mrb[0].mxu0 %v1341
      %v1380 = vpop.f32.mrb[0].mxu0
      %v1381 = vadd.f32 0.0, %v1380
      %v1382 = vpop.f32.mrb[0].mxu0
      %v1383 = vpop.f32.mrb[0].mxu0
      %v1384 = vpop.f32.mrb[0].mxu0
      %1385 = vdwg.mxu0
      %v1387 = vsel %vm996, %v1242, 0
      %v1390 = vsel %vm1250, %v1246, 0
      %1392 = vmatprep.subr.bf16.mxu0 0
      %1393 = vmatpush1.bf16.msra.mxu0 %v1390
      %1394 = vmatprep.subr.bf16.mxu0 0
      %1395 = vmatpush1.bf16.msra.mxu0 0
      %1396 = vmatprep.subr.bf16.mxu0 0
      %1397 = vmatpush1.bf16.msra.mxu0 0
      %1398 = vmatprep.subr.bf16.mxu0 0
      %1399 = vmatpush1.bf16.msra.mxu0 0
      %1400 = vmatprep.subr.bf16.mxu0 0
      %1401 = vmatpush1.bf16.msra.mxu0 0
      %1402 = vmatprep.subr.bf16.mxu0 0
      %1403 = vmatpush1.bf16.msra.mxu0 0
      %1404 = vmatprep.subr.bf16.mxu0 0
      %1405 = vmatpush1.bf16.msra.mxu0 0
      %1406 = vmatprep.subr.bf16.mxu0 0
      %1407 = vmatpush1.bf16.msra.mxu0 0
      %1408 = vmatprep.subr.bf16.mxu0 0
      %1409 = vmatpush1.bf16.msra.mxu0 0
      %1410 = vmatprep.subr.bf16.mxu0 0
      %1411 = vmatpush1.bf16.msra.mxu0 0
      %1412 = vmatprep.subr.bf16.mxu0 0
      %1413 = vmatpush1.bf16.msra.mxu0 0
      %1414 = vmatprep.subr.bf16.mxu0 0
      %1415 = vmatpush1.bf16.msra.mxu0 0
      %1416 = vmatprep.subr.bf16.mxu0 0
      %1417 = vmatpush1.bf16.msra.mxu0 0
      %1418 = vmatprep.subr.bf16.mxu0 0
      %1419 = vmatpush1.bf16.msra.mxu0 0
      %1420 = vmatprep.subr.bf16.mxu0 0
      %1421 = vmatpush1.bf16.msra.mxu0 0
      %1422 = vmatprep.subr.bf16.mxu0 0
      %1423 = vmatpush1.bf16.msra.mxu0 0
      %1424 = vmatprep.mubr.bf16.mxu0 0
      %1425 = vmatmul.mubr.bf16.gmra.mrb[0].mxu0 %v1387
      %v1426 = vpop.f32.mrb[0].mxu0
      %v1427 = vadd.f32 0.0, %v1426
      %v1428 = vpop.f32.mrb[0].mxu0
      %v1429 = vpop.f32.mrb[0].mxu0
      %v1430 = vpop.f32.mrb[0].mxu0
      %1431 = vdwg.mxu0
      %v1432 = vcombine.low %v1289, %v1381
      %v1433 = vcombine.high %v1289, %v1381
      %v1435 = vunpack.c.l.s4 1983009808
      %v1436 = vunpack.c.0.s8 %v1435
      %v1437 = vlaneseq
      %v1438 = vshrl.u32 %v1437, 7
      %v1439 = vsub.s32 %v1436, %v1438
      %v1440 = vrot.slane %v1432, %v1439
      %v1442 = vunpack.c.l.s4 1983009808
      %v1443 = vunpack.c.0.s8 %v1442
      %v1444 = vlaneseq
      %v1445 = vshrl.u32 %v1444, 7
      %v1446 = vsub.s32 %v1443, %v1445
      %v1447 = vrot.slane %v1433, %v1446
      %v1448 = vcombine.low %v1335, %v1427
      %v1449 = vcombine.high %v1335, %v1427
      %v1451 = vunpack.c.l.s4 1983009808
      %v1452 = vunpack.c.0.s8 %v1451
      %v1453 = vlaneseq
      %v1454 = vshrl.u32 %v1453, 7
      %v1455 = vsub.s32 %v1452, %v1454
      %v1456 = vrot.slane %v1448, %v1455
      %v1458 = vunpack.c.l.s4 1983009808
      %v1459 = vunpack.c.0.s8 %v1458
      %v1460 = vlaneseq
      %v1461 = vshrl.u32 %v1460, 7
      %v1462 = vsub.s32 %v1459, %v1461
      %v1463 = vrot.slane %v1449, %v1462
      %v1464 = vcombine.low %v1440, %v1456
      %v1465 = vcombine.high %v1440, %v1456
      %v1467 = vunpack.c.l.s4 1934713408
      %v1468 = vunpack.c.0.s8 %v1467
      %v1469 = vlaneseq
      %v1470 = vshrl.u32 %v1469, 7
      %v1471 = vsub.s32 %v1468, %v1470
      %v1472 = vrot.slane %v1464, %v1471
      %v1474 = vunpack.c.l.s4 1934713408
      %v1475 = vunpack.c.0.s8 %v1474
      %v1476 = vlaneseq
      %v1477 = vshrl.u32 %v1476, 7
      %v1478 = vsub.s32 %v1475, %v1477
      %v1479 = vrot.slane %v1465, %v1478
      %v1480 = vcombine.low %v1447, %v1463
      %v1481 = vcombine.high %v1447, %v1463
      %v1483 = vunpack.c.l.s4 1934713408
      %v1484 = vunpack.c.0.s8 %v1483
      %v1485 = vlaneseq
      %v1486 = vshrl.u32 %v1485, 7
      %v1487 = vsub.s32 %v1484, %v1486
      %v1488 = vrot.slane %v1480, %v1487
      %v1490 = vunpack.c.l.s4 1934713408
      %v1491 = vunpack.c.0.s8 %v1490
      %v1492 = vlaneseq
      %v1493 = vshrl.u32 %v1492, 7
      %v1494 = vsub.s32 %v1491, %v1493
      %v1495 = vrot.slane %v1481, %v1494
      %v1496 = vcombine.high %v1472, 0.0
      %v1497 = vcombine.high %v1479, 0.0
      %v1498 = vcombine.high %v1488, 0.0
      %v1499 = vcombine.high %v1495, 0.0
      %v1500 = vcombine.low %v1472, %v1479
      %v1502 = vunpack.c.l.s4 1983009808
      %v1503 = vunpack.c.0.s8 %v1502
      %v1504 = vlaneseq
      %v1505 = vshrl.u32 %v1504, 7
      %v1506 = vsub.s32 %v1503, %v1505
      %v1507 = vrot.slane %v1500, %v1506
      %v1508 = vcombine.low %v1496, %v1497
      %v1510 = vunpack.c.l.s4 1983009808
      %v1511 = vunpack.c.0.s8 %v1510
      %v1512 = vlaneseq
      %v1513 = vshrl.u32 %v1512, 7
      %v1514 = vsub.s32 %v1511, %v1513
      %v1515 = vrot.slane %v1508, %v1514
      %v1516 = vcombine.low %v1488, %v1495
      %v1518 = vunpack.c.l.s4 1983009808
      %v1519 = vunpack.c.0.s8 %v1518
      %v1520 = vlaneseq
      %v1521 = vshrl.u32 %v1520, 7
      %v1522 = vsub.s32 %v1519, %v1521
      %v1523 = vrot.slane %v1516, %v1522
      %v1524 = vcombine.low %v1498, %v1499
      %v1526 = vunpack.c.l.s4 1983009808
      %v1527 = vunpack.c.0.s8 %v1526
      %v1528 = vlaneseq
      %v1529 = vshrl.u32 %v1528, 7
      %v1530 = vsub.s32 %v1527, %v1529
      %v1531 = vrot.slane %v1524, %v1530
      %v1532 = vcombine.low %v1507, %v1515
      %v1533 = vcombine.high %v1507, %v1515
      %v1535 = vunpack.c.l.s4 1934713408
      %v1536 = vunpack.c.0.s8 %v1535
      %v1537 = vlaneseq
      %v1538 = vshrl.u32 %v1537, 7
      %v1539 = vsub.s32 %v1536, %v1538
      %v1540 = vrot.slane %v1532, %v1539
      %v1542 = vunpack.c.l.s4 1934713408
      %v1543 = vunpack.c.0.s8 %v1542
      %v1544 = vlaneseq
      %v1545 = vshrl.u32 %v1544, 7
      %v1546 = vsub.s32 %v1543, %v1545
      %v1547 = vrot.slane %v1533, %v1546
      %v1548 = vcombine.low %v1523, %v1531
      %v1549 = vcombine.high %v1523, %v1531
      %v1551 = vunpack.c.l.s4 1934713408
      %v1552 = vunpack.c.0.s8 %v1551
      %v1553 = vlaneseq
      %v1554 = vshrl.u32 %v1553, 7
      %v1555 = vsub.s32 %v1552, %v1554
      %v1556 = vrot.slane %v1548, %v1555
      %v1558 = vunpack.c.l.s4 1934713408
      %v1559 = vunpack.c.0.s8 %v1558
      %v1560 = vlaneseq
      %v1561 = vshrl.u32 %v1560, 7
      %v1562 = vsub.s32 %v1559, %v1561
      %v1563 = vrot.slane %v1549, %v1562
      %v1564 = vcombine.low %v1540, %v1556
      %v1565 = vcombine.high %v1540, %v1556
      %v1566 = vcombine.low %v1547, %v1563
      %v1567 = vcombine.high %v1547, %v1563
      %1569 = vrot.lane.b32.xlu0 %v1565, 8
      %v1570 = vpop.permute.xlu0 %1569
      %1573 = vrot.lane.b32.xlu0 %v1566, 16
      %v1574 = vpop.permute.xlu0 %1573
      %1577 = vrot.lane.b32.xlu0 %v1567, 24
      %v1578 = vpop.permute.xlu0 %1577
      %v1580 = vsel %vm996, %v1564, %v1570
      %vm1581 = vcmask 130048
      %v1582 = vsel %vm1581, %v1580, %v1574
      %vm1583 = vcmask 195584
      %v1584 = vsel %vm1583, %v1582, %v1578
      %v1585 = vpack.c.bf16 %v1584, %v1584
      %v1586 = vld [vmem:[%s4] sm:$0xf]
      %v1587 = vld [vmem:[%s4 + $0x4] sm:$0xf]
      %v1588 = vld [vmem:[%s4 + $0x8] sm:$0xf]
      %v1589 = vld [vmem:[%s4 + $0xc] sm:$0xf]
      %v1590 = vld [vmem:[%s5] sm:$0x1]
      %v1591 = vunpack.c.l.bf16 %v1590
      %v1592 = vlaneseq
      %v1593 = vshrl.u32 %v1592, 7
      %v1594 = vsub.s32 0, %v1593
      %v1595 = vrot.slane %v1591, %v1594
      %v1600 = vunpack.c.l.b16 %v1586
      %v1601 = vunpack.c.l.b16 %v1587
      %v1602 = vunpack.c.l.b16 %v1588
      %v1603 = vunpack.c.l.b16 %v1589
      %v1604 = vpack.c.b16 %v1601, %v1600
      %v1605 = vpack.c.b16 %v1603, %v1602
      %v1609 = vsel %vm502, %v1585, 0
      %1611 = vmatprep.subr.bf16.mxu0 0
      %1612 = vmatpush1.bf16.msra.mxu0 %v1604
      %1613 = vmatprep.subr.bf16.mxu0 0
      %1614 = vmatpush1.bf16.msra.mxu0 %v1605
      %1615 = vmatprep.subr.bf16.mxu0 0
      %1616 = vmatpush1.bf16.msra.mxu0 0
      %1617 = vmatprep.subr.bf16.mxu0 0
      %1618 = vmatpush1.bf16.msra.mxu0 0
      %1619 = vmatprep.subr.bf16.mxu0 0
      %1620 = vmatpush1.bf16.msra.mxu0 0
      %1621 = vmatprep.subr.bf16.mxu0 0
      %1622 = vmatpush1.bf16.msra.mxu0 0
      %1623 = vmatprep.subr.bf16.mxu0 0
      %1624 = vmatpush1.bf16.msra.mxu0 0
      %1625 = vmatprep.subr.bf16.mxu0 0
      %1626 = vmatpush1.bf16.msra.mxu0 0
      %1627 = vmatprep.subr.bf16.mxu0 0
      %1628 = vmatpush1.bf16.msra.mxu0 0
      %1629 = vmatprep.subr.bf16.mxu0 0
      %1630 = vmatpush1.bf16.msra.mxu0 0
      %1631 = vmatprep.subr.bf16.mxu0 0
      %1632 = vmatpush1.bf16.msra.mxu0 0
      %1633 = vmatprep.subr.bf16.mxu0 0
      %1634 = vmatpush1.bf16.msra.mxu0 0
      %1635 = vmatprep.subr.bf16.mxu0 0
      %1636 = vmatpush1.bf16.msra.mxu0 0
      %1637 = vmatprep.subr.bf16.mxu0 0
      %1638 = vmatpush1.bf16.msra.mxu0 0
      %1639 = vmatprep.subr.bf16.mxu0 0
      %1640 = vmatpush1.bf16.msra.mxu0 0
      %1641 = vmatprep.subr.bf16.mxu0 0
      %1642 = vmatpush1.bf16.msra.mxu0 0
      %1643 = vmatprep.mubr.bf16.mxu0 0
      %1644 = vmatmul.mubr.bf16.gmra.mrb[0].mxu0 %v1609
      %v1645 = vpop.f32.mrb[0].mxu0
      %v1646 = vadd.f32 %v1595, %v1645
      %v1647 = vpop.f32.mrb[0].mxu0
      %v1648 = vpop.f32.mrb[0].mxu0
      %v1649 = vpop.f32.mrb[0].mxu0
      %1650 = vdwg.mxu0
      %v1651 = vunpack.c.l.bf16 %v478
      %v1652 = vadd.f32 %v1651, %v1646
      %v1653 = vld [vmem:[%s6] sm:$0x1]
      %v1654 = vld [vmem:[%s7] sm:$0x1]
      %v1655 = vsel %vm502, %v1652, 0.0
      %1656 = vadd.xlane.f32.xlu0 %v1655
      %v1657 = vpop.xlane.xlu0 %1656
      %v1658 = vrcp.pop 32.0
      %v1659 = vmul.f32 %v1657, %v1658
      %v1660 = vsub.f32 %v1652, %v1659
      %v1661 = vmul.f32 %v1660, %v1660
      %v1662 = vsel %vm502, %v1661, 0.0
      %1663 = vadd.xlane.f32.xlu0 %v1662
      %v1664 = vpop.xlane.xlu0 %1663
      %v1665 = vmul.f32 %v1664, %v1658
      %v1666 = vadd.f32 %v1665, 1e-05
      %v1667 = vrsqrt.pop %v1666
      %v1668 = vmul.f32 %v1660, %v1667
      %v1670 = vlaneseq
      %v1671 = vshrl.u32 %v1670, 7
      %v1672 = vsub.s32 0, %v1671
      %v1673 = vrot.slane %v1653, %v1672
      %v1675 = vmul.f32 %v1668, %v1673
      %v1677 = vlaneseq
      %v1678 = vshrl.u32 %v1677, 7
      %v1679 = vsub.s32 0, %v1678
      %v1680 = vrot.slane %v1654, %v1679
      %v1682 = vadd.f32 %v1675, %v1680
      %v1683 = vpack.c.bf16 %v1682, %v1682
      %v1684 = vld [vmem:[%s8] sm:$0xf]
      %v1685 = vld [vmem:[%s8 + $0x4] sm:$0xf]
      %v1686 = vld [vmem:[%s8 + $0x8] sm:$0xf]
      %v1687 = vld [vmem:[%s8 + $0xc] sm:$0xf]
      %v1688 = vld [vmem:[%s9] sm:$0x1]
      %v1689 = vunpack.c.l.bf16 %v1688
      %v1690 = vlaneseq
      %v1691 = vshrl.u32 %v1690, 7
      %v1692 = vsub.s32 0, %v1691
      %v1693 = vrot.slane %v1689, %v1692
      %v1698 = vunpack.c.l.b16 %v1684
      %v1699 = vunpack.c.l.b16 %v1685
      %v1700 = vunpack.c.l.b16 %v1686
      %v1701 = vunpack.c.l.b16 %v1687
      %v1702 = vpack.c.b16 %v1699, %v1698
      %v1703 = vpack.c.b16 %v1701, %v1700
      %v1707 = vsel %vm502, %v1683, 0
      %1709 = vmatprep.subr.bf16.mxu0 0
      %1710 = vmatpush1.bf16.msra.mxu0 %v1702
      %1711 = vmatprep.subr.bf16.mxu0 0
      %1712 = vmatpush1.bf16.msra.mxu0 %v1703
      %1713 = vmatprep.subr.bf16.mxu0 0
      %1714 = vmatpush1.bf16.msra.mxu0 0
      %1715 = vmatprep.subr.bf16.mxu0 0
      %1716 = vmatpush1.bf16.msra.mxu0 0
      %1717 = vmatprep.subr.bf16.mxu0 0
      %1718 = vmatpush1.bf16.msra.mxu0 0
      %1719 = vmatprep.subr.bf16.mxu0 0
      %1720 = vmatpush1.bf16.msra.mxu0 0
      %1721 = vmatprep.subr.bf16.mxu0 0
      %1722 = vmatpush1.bf16.msra.mxu0 0
      %1723 = vmatprep.subr.bf16.mxu0 0
      %1724 = vmatpush1.bf16.msra.mxu0 0
      %1725 = vmatprep.subr.bf16.mxu0 0
      %1726 = vmatpush1.bf16.msra.mxu0 0
      %1727 = vmatprep.subr.bf16.mxu0 0
      %1728 = vmatpush1.bf16.msra.mxu0 0
      %1729 = vmatprep.subr.bf16.mxu0 0
      %1730 = vmatpush1.bf16.msra.mxu0 0
      %1731 = vmatprep.subr.bf16.mxu0 0
      %1732 = vmatpush1.bf16.msra.mxu0 0
      %1733 = vmatprep.subr.bf16.mxu0 0
      %1734 = vmatpush1.bf16.msra.mxu0 0
      %1735 = vmatprep.subr.bf16.mxu0 0
      %1736 = vmatpush1.bf16.msra.mxu0 0
      %1737 = vmatprep.subr.bf16.mxu0 0
      %1738 = vmatpush1.bf16.msra.mxu0 0
      %1739 = vmatprep.subr.bf16.mxu0 0
      %1740 = vmatpush1.bf16.msra.mxu0 0
      %1741 = vmatprep.mubr.bf16.mxu0 0
      %1742 = vmatmul.mubr.bf16.gmra.mrb[0].mxu0 %v1707
      %v1743 = vpop.f32.mrb[0].mxu0
      %v1744 = vadd.f32 %v1693, %v1743
      %v1745 = vpop.f32.mrb[0].mxu0
      %v1746 = vpop.f32.mrb[0].mxu0
      %v1747 = vpop.f32.mrb[0].mxu0
      %1748 = vdwg.mxu0
      %v1749 = vmul.f32 %v1744, 0.5
      %v1750 = vmul.f32 %v1744, 0.044715
      %v1751 = vmul.f32 %v1750, %v1744
      %v1752 = vmul.f32 %v1751, %v1744
      %v1753 = vadd.f32 %v1744, %v1752
      %v1754 = vmul.f32 %v1753, 0.7978846
      %v1755 = vtanh.pop %v1754
      %v1756 = vadd.f32 %v1755, 1.0
      %v1757 = vmul.f32 %v1749, %v1756
      %v1758 = vpack.c.bf16 %v1757, %v1757
      %v1759 = vld [vmem:[%s10] sm:$0xf]
      %v1760 = vld [vmem:[%s10 + $0x4] sm:$0xf]
      %v1761 = vld [vmem:[%s10 + $0x8] sm:$0xf]
      %v1762 = vld [vmem:[%s10 + $0xc] sm:$0xf]
      %v1763 = vld [vmem:[%s10 + $0x10] sm:$0xf]
      %v1764 = vld [vmem:[%s10 + $0x14] sm:$0xf]
      %v1765 = vld [vmem:[%s10 + $0x18] sm:$0xf]
      %v1766 = vld [vmem:[%s10 + $0x1c] sm:$0xf]
      %v1767 = vld [vmem:[%s11] sm:$0x1]
      %v1768 = vunpack.c.l.bf16 %v1767
      %v1769 = vlaneseq
      %v1770 = vshrl.u32 %v1769, 7
      %v1771 = vsub.s32 0, %v1770
      %v1772 = vrot.slane %v1768, %v1771
      %v1781 = vunpack.c.l.b16 %v1759
      %v1782 = vunpack.c.l.b16 %v1760
      %v1783 = vunpack.c.l.b16 %v1761
      %v1784 = vunpack.c.l.b16 %v1762
      %v1785 = vunpack.c.l.b16 %v1763
      %v1786 = vunpack.c.l.b16 %v1764
      %v1787 = vunpack.c.l.b16 %v1765
      %v1788 = vunpack.c.l.b16 %v1766
      %v1789 = vpack.c.b16 %v1782, %v1781
      %v1790 = vpack.c.b16 %v1784, %v1783
      %v1791 = vpack.c.b16 %v1786, %v1785
      %v1792 = vpack.c.b16 %v1788, %v1787
      %vm1797 = vcmask 523264
      %v1799 = vsel %vm1797, %v1758, 0
      %1801 = vmatprep.subr.bf16.mxu0 0
      %1802 = vmatpush1.bf16.msra.mxu0 %v1789
      %1803 = vmatprep.subr.bf16.mxu0 0
      %1804 = vmatpush1.bf16.msra.mxu0 %v1790
      %1805 = vmatprep.subr.bf16.mxu0 0
      %1806 = vmatpush1.bf16.msra.mxu0 %v1791
      %1807 = vmatprep.subr.bf16.mxu0 0
      %1808 = vmatpush1.bf16.msra.mxu0 %v1792
      %1809 = vmatprep.subr.bf16.mxu0 0
      %1810 = vmatpush1.bf16.msra.mxu0 0
      %1811 = vmatprep.subr.bf16.mxu0 0
      %1812 = vmatpush1.bf16.msra.mxu0 0
      %1813 = vmatprep.subr.bf16.mxu0 0
      %1814 = vmatpush1.bf16.msra.mxu0 0
      %1815 = vmatprep.subr.bf16.mxu0 0
      %1816 = vmatpush1.bf16.msra.mxu0 0
      %1817 = vmatprep.subr.bf16.mxu0 0
      %1818 = vmatpush1.bf16.msra.mxu0 0
      %1819 = vmatprep.subr.bf16.mxu0 0
      %1820 = vmatpush1.bf16.msra.mxu0 0
      %1821 = vmatprep.subr.bf16.mxu0 0
      %1822 = vmatpush1.bf16.msra.mxu0 0
      %1823 = vmatprep.subr.bf16.mxu0 0
      %1824 = vmatpush1.bf16.msra.mxu0 0
      %1825 = vmatprep.subr.bf16.mxu0 0
      %1826 = vmatpush1.bf16.msra.mxu0 0
      %1827 = vmatprep.subr.bf16.mxu0 0
      %1828 = vmatpush1.bf16.msra.mxu0 0
      %1829 = vmatprep.subr.bf16.mxu0 0
      %1830 = vmatpush1.bf16.msra.mxu0 0
      %1831 = vmatprep.subr.bf16.mxu0 0
      %1832 = vmatpush1.bf16.msra.mxu0 0
      %1833 = vmatprep.mubr.bf16.mxu0 0
      %1834 = vmatmul.mubr.bf16.gmra.mrb[0].mxu0 %v1799
      %v1835 = vpop.f32.mrb[0].mxu0
      %v1836 = vadd.f32 %v1772, %v1835
      %v1837 = vpop.f32.mrb[0].mxu0
      %v1838 = vpop.f32.mrb[0].mxu0
      %v1839 = vpop.f32.mrb[0].mxu0
      %1840 = vdwg.mxu0
      %v1841 = vadd.f32 %v1682, %v1836
      %v1842 = vld [vmem:[%s12] sm:$0x1]
      %v1843 = vld [vmem:[%s13] sm:$0x1]
      %v1844 = vsel %vm502, %v1841, 0.0
      %1845 = vadd.xlane.f32.xlu0 %v1844
      %v1846 = vpop.xlane.xlu0 %1845
      %v1847 = vmul.f32 %v1846, %v1658
      %v1848 = vsub.f32 %v1841, %v1847
      %v1849 = vmul.f32 %v1848, %v1848
      %v1850 = vsel %vm502, %v1849, 0.0
      %1851 = vadd.xlane.f32.xlu0 %v1850
      %v1852 = vpop.xlane.xlu0 %1851
      %v1853 = vmul.f32 %v1852, %v1658
      %v1854 = vadd.f32 %v1853, 1e-05
      %v1855 = vrsqrt.pop %v1854
      %v1856 = vmul.f32 %v1848, %v1855
      %v1858 = vlaneseq
      %v1859 = vshrl.u32 %v1858, 7
      %v1860 = vsub.s32 0, %v1859
      %v1861 = vrot.slane %v1842, %v1860
      %v1863 = vmul.f32 %v1856, %v1861
      %v1865 = vlaneseq
      %v1866 = vshrl.u32 %v1865, 7
      %v1867 = vsub.s32 0, %v1866
      %v1868 = vrot.slane %v1843, %v1867
      %v1870 = vadd.f32 %v1863, %v1868
      %v1871 = vpack.c.bf16 %v1870, %v1870
      %vm1872 = vcmask 257024
      %1873 = vst.msk [vmem:[%s476] sm:$0xf] %vm1872, %v1871
      %p1874 = scmp.lt.s32.totalorder %s25, 1
      %s1875 = scalar_select %p1874, %s25, 1
      %s1876 = smul.addr %s1875, 4
      %s1877 = scalar_lea.vmem %s14, %s1876
      // Predicated region
      $region77: #{forward.4} parent=75 // pred_check
        %p1878 = pneg %p347
      $region78: #{forward.4} parent=75 // pred_check_branch
        %1880 = sbr.rel (%p1878) target = $region80
      $region79: #{forward.4} parent=75 // pred_region
        _
      $region80: #{forward.4} parent=75 // pred_fallthru
        _
    $region76: #{forward.4} parent=5 // pred_fallthru
      _
    %p1881 = scmp.le.s32.totalorder 2, %s20
    // Predicated region
    $region81: #{forward.4} parent=5 // pred_check
      %p1882 = pneg %p1881
    $region82: #{forward.4} parent=5 // pred_check_branch
      %1884 = sbr.rel (%p1882) target = $region84
    $region83: #{forward.4} parent=5 // pred_region
      %s1885 = ssub.s32 %s20, 2
      // Predicated region
      $region85: #{forward.4} parent=83 // pred_check
        %p1886 = pneg %p353
      $region86: #{forward.4} parent=83 // pred_check_branch
        %1888 = sbr.rel (%p1886) target = $region88
      $region87: #{forward.4} parent=83 // pred_region
        %p1889 = scmp.lt.s32.totalorder %s26, 1
        %s1890 = scalar_select %p1889, %s26, 1
        %s1891 = smul.addr %s1890, 4
        %s1892 = scalar_lea.vmem %s14, %s1891
      $region88: #{forward.4} parent=83 // pred_fallthru
        _
    $region84: #{forward.4} parent=5 // pred_fallthru
      _
  $region6: #{forward.4} parent=0 // loop_footer
    %s24 = sadd.s32 1, %s20
  $region7: #{forward.4} parent=0 // loop_footer_branch
    %19 = sbr.rel target = $region3
  $region8: #{forward.4} parent=0 // loop_exit
    _

// kernel: forward.5
$region0: #{forward.5}
  #allocation0 [shape = 'u32[]', space=smem, size = 0x4, offset = 0x4, fixed_abs, tag = 'smem constant byte address 0x4 - core index']
  #allocation1 [shape = 'u32[144,128]{1,0:T(1,128)}', space=vmem, size = 0x12000, scoped, tag = 'internal scratch']
  %s0 = inlined_call_operand.vmem [shape: bf16[2,8,32], index: 0, kind: input, shape index: {}]
  %s1 = inlined_call_operand.vmem [shape: f32[2,1,8], index: 1, kind: input, shape index: {}]
  %s2 = inlined_call_operand.vmem [shape: f32[2,8,1], index: 2, kind: input, shape index: {}]
  %s3 = inlined_call_operand.vmem [shape: bf16[32,96], index: 3, kind: input, shape index: {}]
  %s4 = inlined_call_operand.vmem [shape: bf16[1,96], index: 4, kind: input, shape index: {}]
  %s5 = inlined_call_operand.vmem [shape: bf16[32,32], index: 5, kind: input, shape index: {}]
  %s6 = inlined_call_operand.vmem [shape: bf16[1,32], index: 6, kind: input, shape index: {}]
  %s7 = inlined_call_operand.vmem [shape: f32[1,32], index: 7, kind: input, shape index: {}]
  %s8 = inlined_call_operand.vmem [shape: f32[1,32], index: 8, kind: input, shape index: {}]
  %s9 = inlined_call_operand.vmem [shape: bf16[32,64], index: 9, kind: input, shape index: {}]
  %s10 = inlined_call_operand.vmem [shape: bf16[1,64], index: 10, kind: input, shape index: {}]
  %s11 = inlined_call_operand.vmem [shape: bf16[64,32], index: 11, kind: input, shape index: {}]
  %s12 = inlined_call_operand.vmem [shape: bf16[1,32], index: 12, kind: input, shape index: {}]
  %s13 = inlined_call_operand.vmem [shape: f32[1,32], index: 13, kind: input, shape index: {}]
  %s14 = inlined_call_operand.vmem [shape: f32[1,32], index: 14, kind: input, shape index: {}]
  %s15 = inlined_call_operand.vmem [shape: bf16[32,32], index: 15, kind: input, shape index: {}]
  %s16 = inlined_call_operand.vmem [shape: bf16[1,32], index: 16, kind: input, shape index: {}]
  %s17 = inlined_call_operand.vmem [shape: bf16[32,4], index: 17, kind: input, shape index: {}]
  %s18 = inlined_call_operand.vmem [shape: bf16[1,4], index: 18, kind: input, shape index: {}]
  %s19 = inlined_call_operand.vmem [shape: f32[2,8,4], index: 19, kind: output, shape index: {}]
  %s20 = sld [smem:[#allocation0]]
  $region109: #{forward.5} parent=0
    _
  %s22 = ssub.s32 1, %s20
  %s23 = scalar_select 0, %s22, %s20
  loop: start=0, step=1, limit=4
  $region2: #{forward.5} parent=0 // loop_pre_header
    _
  $region3: #{forward.5} parent=0 // loop_header
    %s25 = sphi 0, %s29
    %p26 = scmp.ge.s32.totalorder %s25, 4
    %s35 = sphi 0, %s37
    %s38 = sphi 0, %s35
    %s39 = sphi 0, %s38
    %s55 = sphi 0, %s39
    %s61 = sphi 0, %s63
    %s64 = sphi 0, %s61
    %s65 = sphi 0, %s64
    %s81 = sphi 0, %s65
    %s87 = sphi 0, %s89
    %s90 = sphi 0, %s87
    %s91 = sphi 0, %s90
    %s107 = sphi 0, %s91
    %s111 = sphi 0, %s111
    %s113 = sphi 0, %s111
    %s114 = sphi 0, %s113
    %s128 = sphi 0, %s114
    %s132 = sphi 0, %s132
    %s134 = sphi 0, %s132
    %s135 = sphi 0, %s134
    %s149 = sphi 0, %s135
    %s153 = sphi 0, %s153
    %s155 = sphi 0, %s153
    %s156 = sphi 0, %s155
    %s170 = sphi 0, %s156
    %s174 = sphi 0, %s174
    %s176 = sphi 0, %s174
    %s177 = sphi 0, %s176
    %s191 = sphi 0, %s177
    %s195 = sphi 0, %s195
    %s197 = sphi 0, %s195
    %s198 = sphi 0, %s197
    %s212 = sphi 0, %s198
    %s216 = sphi 0, %s216
    %s218 = sphi 0, %s216
    %s219 = sphi 0, %s218
    %s233 = sphi 0, %s219
    %s237 = sphi 0, %s237
    %s239 = sphi 0, %s237
    %s240 = sphi 0, %s239
    %s254 = sphi 0, %s240
    %s258 = sphi 0, %s258
    %s260 = sphi 0, %s258
    %s261 = sphi 0, %s260
    %s275 = sphi 0, %s261
    %s279 = sphi 0, %s279
    %s281 = sphi 0, %s279
    %s282 = sphi 0, %s281
    %s296 = sphi 0, %s282
    %s300 = sphi 0, %s300
    %s302 = sphi 0, %s300
    %s303 = sphi 0, %s302
    %s317 = sphi 0, %s303
    %s321 = sphi 0, %s321
    %s323 = sphi 0, %s321
    %s324 = sphi 0, %s323
    %s338 = sphi 0, %s324
    %s342 = sphi 0, %s342
    %s344 = sphi 0, %s342
    %s345 = sphi 0, %s344
    %s359 = sphi 0, %s345
    %s363 = sphi 0, %s363
    %s365 = sphi 0, %s363
    %s366 = sphi 0, %s365
    %s380 = sphi 0, %s366
    %s384 = sphi 0, %s384
    %s386 = sphi 0, %s384
    %s387 = sphi 0, %s386
    %s401 = sphi 0, %s387
    %s405 = sphi 0, %s405
    %s407 = sphi 0, %s405
    %s408 = sphi 0, %s407
    %s422 = sphi 0, %s408
    %s426 = sphi 0, %s426
    %s428 = sphi 0, %s426
    %s429 = sphi 0, %s428
    %s443 = sphi 0, %s429
    %s449 = sphi 0, %s451
    %s452 = sphi 0, %s449
    %s453 = sphi 0, %s452
    %s469 = sphi 0, %s453
  $region4: #{forward.5} parent=0 // loop_header_branch
    %28 = sbr.rel (%p26) target = $region8
  $region5: #{forward.5} parent=0 // loop_body
    %s30 = ssub.s32 %s25, 1
    %s31 = ssub.s32 %s25, 2
    %s32 = sadd.s32 %s25, 1
    %s33 = ssub.s32 %s25, %s32
    %p34 = scmp.eq.s32.totalorder %s33, 0
    %s36 = sadd.s32 %s35, 1
    %s37 = scalar_select %p34, %s35, %s36
    %p40 = pneg %p34
    %p41 = scmp.eq.s32.totalorder %s25, 1
    %p42 = por %p40, %p41
    %p43 = scmp.ne.s32.totalorder %s35, %s38
    %p44 = scmp.eq.s32.totalorder %s25, 0
    %p45 = por %p43, %p44
    %p46 = scmp.ne.s32.totalorder %s35, %s38
    %p47 = scmp.eq.s32.totalorder %s30, 1
    %p48 = por %p46, %p47
    %p49 = scmp.ne.s32.totalorder %s38, %s39
    %p50 = scmp.eq.s32.totalorder %s30, 0
    %p51 = por %p49, %p50
    %p52 = scmp.ne.s32.totalorder %s38, %s39
    %p53 = scmp.eq.s32.totalorder %s31, 1
    %p54 = por %p52, %p53
    %p56 = scmp.ne.s32.totalorder %s39, %s55
    %p57 = scmp.eq.s32.totalorder %s31, 0
    %p58 = por %p56, %p57
    %s59 = ssub.s32 %s25, %s32
    %p60 = scmp.eq.s32.totalorder %s59, 0
    %s62 = sadd.s32 %s61, 1
    %s63 = scalar_select %p60, %s61, %s62
    %p66 = pneg %p60
    %p67 = scmp.eq.s32.totalorder %s25, 1
    %p68 = por %p66, %p67
    %p69 = scmp.ne.s32.totalorder %s61, %s64
    %p70 = scmp.eq.s32.totalorder %s25, 0
    %p71 = por %p69, %p70
    %p72 = scmp.ne.s32.totalorder %s61, %s64
    %p73 = scmp.eq.s32.totalorder %s30, 1
    %p74 = por %p72, %p73
    %p75 = scmp.ne.s32.totalorder %s64, %s65
    %p76 = scmp.eq.s32.totalorder %s30, 0
    %p77 = por %p75, %p76
    %p78 = scmp.ne.s32.totalorder %s64, %s65
    %p79 = scmp.eq.s32.totalorder %s31, 1
    %p80 = por %p78, %p79
    %p82 = scmp.ne.s32.totalorder %s65, %s81
    %p83 = scmp.eq.s32.totalorder %s31, 0
    %p84 = por %p82, %p83
    %s85 = ssub.s32 %s25, %s32
    %p86 = scmp.eq.s32.totalorder %s85, 0
    %s88 = sadd.s32 %s87, 1
    %s89 = scalar_select %p86, %s87, %s88
    %p92 = pneg %p86
    %p93 = scmp.eq.s32.totalorder %s25, 1
    %p94 = por %p92, %p93
    %p95 = scmp.ne.s32.totalorder %s87, %s90
    %p96 = scmp.eq.s32.totalorder %s25, 0
    %p97 = por %p95, %p96
    %p98 = scmp.ne.s32.totalorder %s87, %s90
    %p99 = scmp.eq.s32.totalorder %s30, 1
    %p100 = por %p98, %p99
    %p101 = scmp.ne.s32.totalorder %s90, %s91
    %p102 = scmp.eq.s32.totalorder %s30, 0
    %p103 = por %p101, %p102
    %p104 = scmp.ne.s32.totalorder %s90, %s91
    %p105 = scmp.eq.s32.totalorder %s31, 1
    %p106 = por %p104, %p105
    %p108 = scmp.ne.s32.totalorder %s91, %s107
    %p109 = scmp.eq.s32.totalorder %s31, 0
    %p110 = por %p108, %p109
    %s112 = sadd.s32 %s111, 1
    %p115 = scmp.eq.s32.totalorder %s25, 1
    %p116 = scmp.ne.s32.totalorder %s111, %s113
    %p117 = scmp.eq.s32.totalorder %s25, 0
    %p118 = por %p116, %p117
    %p119 = scmp.ne.s32.totalorder %s111, %s113
    %p120 = scmp.eq.s32.totalorder %s30, 1
    %p121 = por %p119, %p120
    %p122 = scmp.ne.s32.totalorder %s113, %s114
    %p123 = scmp.eq.s32.totalorder %s30, 0
    %p124 = por %p122, %p123
    %p125 = scmp.ne.s32.totalorder %s113, %s114
    %p126 = scmp.eq.s32.totalorder %s31, 1
    %p127 = por %p125, %p126
    %p129 = scmp.ne.s32.totalorder %s114, %s128
    %p130 = scmp.eq.s32.totalorder %s31, 0
    %p131 = por %p129, %p130
    %s133 = sadd.s32 %s132, 1
    %p136 = scmp.eq.s32.totalorder %s25, 1
    %p137 = scmp.ne.s32.totalorder %s132, %s134
    %p138 = scmp.eq.s32.totalorder %s25, 0
    %p139 = por %p137, %p138
    %p140 = scmp.ne.s32.totalorder %s132, %s134
    %p141 = scmp.eq.s32.totalorder %s30, 1
    %p142 = por %p140, %p141
    %p143 = scmp.ne.s32.totalorder %s134, %s135
    %p144 = scmp.eq.s32.totalorder %s30, 0
    %p145 = por %p143, %p144
    %p146 = scmp.ne.s32.totalorder %s134, %s135
    %p147 = scmp.eq.s32.totalorder %s31, 1
    %p148 = por %p146, %p147
    %p150 = scmp.ne.s32.totalorder %s135, %s149
    %p151 = scmp.eq.s32.totalorder %s31, 0
    %p152 = por %p150, %p151
    %s154 = sadd.s32 %s153, 1
    %p157 = scmp.eq.s32.totalorder %s25, 1
    %p158 = scmp.ne.s32.totalorder %s153, %s155
    %p159 = scmp.eq.s32.totalorder %s25, 0
    %p160 = por %p158, %p159
    %p161 = scmp.ne.s32.totalorder %s153, %s155
    %p162 = scmp.eq.s32.totalorder %s30, 1
    %p163 = por %p161, %p162
    %p164 = scmp.ne.s32.totalorder %s155, %s156
    %p165 = scmp.eq.s32.totalorder %s30, 0
    %p166 = por %p164, %p165
    %p167 = scmp.ne.s32.totalorder %s155, %s156
    %p168 = scmp.eq.s32.totalorder %s31, 1
    %p169 = por %p167, %p168
    %p171 = scmp.ne.s32.totalorder %s156, %s170
    %p172 = scmp.eq.s32.totalorder %s31, 0
    %p173 = por %p171, %p172
    %s175 = sadd.s32 %s174, 1
    %p178 = scmp.eq.s32.totalorder %s25, 1
    %p179 = scmp.ne.s32.totalorder %s174, %s176
    %p180 = scmp.eq.s32.totalorder %s25, 0
    %p181 = por %p179, %p180
    %p182 = scmp.ne.s32.totalorder %s174, %s176
    %p183 = scmp.eq.s32.totalorder %s30, 1
    %p184 = por %p182, %p183
    %p185 = scmp.ne.s32.totalorder %s176, %s177
    %p186 = scmp.eq.s32.totalorder %s30, 0
    %p187 = por %p185, %p186
    %p188 = scmp.ne.s32.totalorder %s176, %s177
    %p189 = scmp.eq.s32.totalorder %s31, 1
    %p190 = por %p188, %p189
    %p192 = scmp.ne.s32.totalorder %s177, %s191
    %p193 = scmp.eq.s32.totalorder %s31, 0
    %p194 = por %p192, %p193
    %s196 = sadd.s32 %s195, 1
    %p199 = scmp.eq.s32.totalorder %s25, 1
    %p200 = scmp.ne.s32.totalorder %s195, %s197
    %p201 = scmp.eq.s32.totalorder %s25, 0
    %p202 = por %p200, %p201
    %p203 = scmp.ne.s32.totalorder %s195, %s197
    %p204 = scmp.eq.s32.totalorder %s30, 1
    %p205 = por %p203, %p204
    %p206 = scmp.ne.s32.totalorder %s197, %s198
    %p207 = scmp.eq.s32.totalorder %s30, 0
    %p208 = por %p206, %p207
    %p209 = scmp.ne.s32.totalorder %s197, %s198
    %p210 = scmp.eq.s32.totalorder %s31, 1
    %p211 = por %p209, %p210
    %p213 = scmp.ne.s32.totalorder %s198, %s212
    %p214 = scmp.eq.s32.totalorder %s31, 0
    %p215 = por %p213, %p214
    %s217 = sadd.s32 %s216, 1
    %p220 = scmp.eq.s32.totalorder %s25, 1
    %p221 = scmp.ne.s32.totalorder %s216, %s218
    %p222 = scmp.eq.s32.totalorder %s25, 0
    %p223 = por %p221, %p222
    %p224 = scmp.ne.s32.totalorder %s216, %s218
    %p225 = scmp.eq.s32.totalorder %s30, 1
    %p226 = por %p224, %p225
    %p227 = scmp.ne.s32.totalorder %s218, %s219
    %p228 = scmp.eq.s32.totalorder %s30, 0
    %p229 = por %p227, %p228
    %p230 = scmp.ne.s32.totalorder %s218, %s219
    %p231 = scmp.eq.s32.totalorder %s31, 1
    %p232 = por %p230, %p231
    %p234 = scmp.ne.s32.totalorder %s219, %s233
    %p235 = scmp.eq.s32.totalorder %s31, 0
    %p236 = por %p234, %p235
    %s238 = sadd.s32 %s237, 1
    %p241 = scmp.eq.s32.totalorder %s25, 1
    %p242 = scmp.ne.s32.totalorder %s237, %s239
    %p243 = scmp.eq.s32.totalorder %s25, 0
    %p244 = por %p242, %p243
    %p245 = scmp.ne.s32.totalorder %s237, %s239
    %p246 = scmp.eq.s32.totalorder %s30, 1
    %p247 = por %p245, %p246
    %p248 = scmp.ne.s32.totalorder %s239, %s240
    %p249 = scmp.eq.s32.totalorder %s30, 0
    %p250 = por %p248, %p249
    %p251 = scmp.ne.s32.totalorder %s239, %s240
    %p252 = scmp.eq.s32.totalorder %s31, 1
    %p253 = por %p251, %p252
    %p255 = scmp.ne.s32.totalorder %s240, %s254
    %p256 = scmp.eq.s32.totalorder %s31, 0
    %p257 = por %p255, %p256
    %s259 = sadd.s32 %s258, 1
    %p262 = scmp.eq.s32.totalorder %s25, 1
    %p263 = scmp.ne.s32.totalorder %s258, %s260
    %p264 = scmp.eq.s32.totalorder %s25, 0
    %p265 = por %p263, %p264
    %p266 = scmp.ne.s32.totalorder %s258, %s260
    %p267 = scmp.eq.s32.totalorder %s30, 1
    %p268 = por %p266, %p267
    %p269 = scmp.ne.s32.totalorder %s260, %s261
    %p270 = scmp.eq.s32.totalorder %s30, 0
    %p271 = por %p269, %p270
    %p272 = scmp.ne.s32.totalorder %s260, %s261
    %p273 = scmp.eq.s32.totalorder %s31, 1
    %p274 = por %p272, %p273
    %p276 = scmp.ne.s32.totalorder %s261, %s275
    %p277 = scmp.eq.s32.totalorder %s31, 0
    %p278 = por %p276, %p277
    %s280 = sadd.s32 %s279, 1
    %p283 = scmp.eq.s32.totalorder %s25, 1
    %p284 = scmp.ne.s32.totalorder %s279, %s281
    %p285 = scmp.eq.s32.totalorder %s25, 0
    %p286 = por %p284, %p285
    %p287 = scmp.ne.s32.totalorder %s279, %s281
    %p288 = scmp.eq.s32.totalorder %s30, 1
    %p289 = por %p287, %p288
    %p290 = scmp.ne.s32.totalorder %s281, %s282
    %p291 = scmp.eq.s32.totalorder %s30, 0
    %p292 = por %p290, %p291
    %p293 = scmp.ne.s32.totalorder %s281, %s282
    %p294 = scmp.eq.s32.totalorder %s31, 1
    %p295 = por %p293, %p294
    %p297 = scmp.ne.s32.totalorder %s282, %s296
    %p298 = scmp.eq.s32.totalorder %s31, 0
    %p299 = por %p297, %p298
    %s301 = sadd.s32 %s300, 1
    %p304 = scmp.eq.s32.totalorder %s25, 1
    %p305 = scmp.ne.s32.totalorder %s300, %s302
    %p306 = scmp.eq.s32.totalorder %s25, 0
    %p307 = por %p305, %p306
    %p308 = scmp.ne.s32.totalorder %s300, %s302
    %p309 = scmp.eq.s32.totalorder %s30, 1
    %p310 = por %p308, %p309
    %p311 = scmp.ne.s32.totalorder %s302, %s303
    %p312 = scmp.eq.s32.totalorder %s30, 0
    %p313 = por %p311, %p312
    %p314 = scmp.ne.s32.totalorder %s302, %s303
    %p315 = scmp.eq.s32.totalorder %s31, 1
    %p316 = por %p314, %p315
    %p318 = scmp.ne.s32.totalorder %s303, %s317
    %p319 = scmp.eq.s32.totalorder %s31, 0
    %p320 = por %p318, %p319
    %s322 = sadd.s32 %s321, 1
    %p325 = scmp.eq.s32.totalorder %s25, 1
    %p326 = scmp.ne.s32.totalorder %s321, %s323
    %p327 = scmp.eq.s32.totalorder %s25, 0
    %p328 = por %p326, %p327
    %p329 = scmp.ne.s32.totalorder %s321, %s323
    %p330 = scmp.eq.s32.totalorder %s30, 1
    %p331 = por %p329, %p330
    %p332 = scmp.ne.s32.totalorder %s323, %s324
    %p333 = scmp.eq.s32.totalorder %s30, 0
    %p334 = por %p332, %p333
    %p335 = scmp.ne.s32.totalorder %s323, %s324
    %p336 = scmp.eq.s32.totalorder %s31, 1
    %p337 = por %p335, %p336
    %p339 = scmp.ne.s32.totalorder %s324, %s338
    %p340 = scmp.eq.s32.totalorder %s31, 0
    %p341 = por %p339, %p340
    %s343 = sadd.s32 %s342, 1
    %p346 = scmp.eq.s32.totalorder %s25, 1
    %p347 = scmp.ne.s32.totalorder %s342, %s344
    %p348 = scmp.eq.s32.totalorder %s25, 0
    %p349 = por %p347, %p348
    %p350 = scmp.ne.s32.totalorder %s342, %s344
    %p351 = scmp.eq.s32.totalorder %s30, 1
    %p352 = por %p350, %p351
    %p353 = scmp.ne.s32.totalorder %s344, %s345
    %p354 = scmp.eq.s32.totalorder %s30, 0
    %p355 = por %p353, %p354
    %p356 = scmp.ne.s32.totalorder %s344, %s345
    %p357 = scmp.eq.s32.totalorder %s31, 1
    %p358 = por %p356, %p357
    %p360 = scmp.ne.s32.totalorder %s345, %s359
    %p361 = scmp.eq.s32.totalorder %s31, 0
    %p362 = por %p360, %p361
    %s364 = sadd.s32 %s363, 1
    %p367 = scmp.eq.s32.totalorder %s25, 1
    %p368 = scmp.ne.s32.totalorder %s363, %s365
    %p369 = scmp.eq.s32.totalorder %s25, 0
    %p370 = por %p368, %p369
    %p371 = scmp.ne.s32.totalorder %s363, %s365
    %p372 = scmp.eq.s32.totalorder %s30, 1
    %p373 = por %p371, %p372
    %p374 = scmp.ne.s32.totalorder %s365, %s366
    %p375 = scmp.eq.s32.totalorder %s30, 0
    %p376 = por %p374, %p375
    %p377 = scmp.ne.s32.totalorder %s365, %s366
    %p378 = scmp.eq.s32.totalorder %s31, 1
    %p379 = por %p377, %p378
    %p381 = scmp.ne.s32.totalorder %s366, %s380
    %p382 = scmp.eq.s32.totalorder %s31, 0
    %p383 = por %p381, %p382
    %s385 = sadd.s32 %s384, 1
    %p388 = scmp.eq.s32.totalorder %s25, 1
    %p389 = scmp.ne.s32.totalorder %s384, %s386
    %p390 = scmp.eq.s32.totalorder %s25, 0
    %p391 = por %p389, %p390
    %p392 = scmp.ne.s32.totalorder %s384, %s386
    %p393 = scmp.eq.s32.totalorder %s30, 1
    %p394 = por %p392, %p393
    %p395 = scmp.ne.s32.totalorder %s386, %s387
    %p396 = scmp.eq.s32.totalorder %s30, 0
    %p397 = por %p395, %p396
    %p398 = scmp.ne.s32.totalorder %s386, %s387
    %p399 = scmp.eq.s32.totalorder %s31, 1
    %p400 = por %p398, %p399
    %p402 = scmp.ne.s32.totalorder %s387, %s401
    %p403 = scmp.eq.s32.totalorder %s31, 0
    %p404 = por %p402, %p403
    %s406 = sadd.s32 %s405, 1
    %p409 = scmp.eq.s32.totalorder %s25, 1
    %p410 = scmp.ne.s32.totalorder %s405, %s407
    %p411 = scmp.eq.s32.totalorder %s25, 0
    %p412 = por %p410, %p411
    %p413 = scmp.ne.s32.totalorder %s405, %s407
    %p414 = scmp.eq.s32.totalorder %s30, 1
    %p415 = por %p413, %p414
    %p416 = scmp.ne.s32.totalorder %s407, %s408
    %p417 = scmp.eq.s32.totalorder %s30, 0
    %p418 = por %p416, %p417
    %p419 = scmp.ne.s32.totalorder %s407, %s408
    %p420 = scmp.eq.s32.totalorder %s31, 1
    %p421 = por %p419, %p420
    %p423 = scmp.ne.s32.totalorder %s408, %s422
    %p424 = scmp.eq.s32.totalorder %s31, 0
    %p425 = por %p423, %p424
    %s427 = sadd.s32 %s426, 1
    %p430 = scmp.eq.s32.totalorder %s25, 1
    %p431 = scmp.ne.s32.totalorder %s426, %s428
    %p432 = scmp.eq.s32.totalorder %s25, 0
    %p433 = por %p431, %p432
    %p434 = scmp.ne.s32.totalorder %s426, %s428
    %p435 = scmp.eq.s32.totalorder %s30, 1
    %p436 = por %p434, %p435
    %p437 = scmp.ne.s32.totalorder %s428, %s429
    %p438 = scmp.eq.s32.totalorder %s30, 0
    %p439 = por %p437, %p438
    %p440 = scmp.ne.s32.totalorder %s428, %s429
    %p441 = scmp.eq.s32.totalorder %s31, 1
    %p442 = por %p440, %p441
    %p444 = scmp.ne.s32.totalorder %s429, %s443
    %p445 = scmp.eq.s32.totalorder %s31, 0
    %p446 = por %p444, %p445
    %s447 = ssub.s32 %s25, %s32
    %p448 = scmp.eq.s32.totalorder %s447, 0
    %s450 = sadd.s32 %s449, 1
    %s451 = scalar_select %p448, %s449, %s450
    %p454 = pneg %p448
    %p455 = scmp.eq.s32.totalorder %s25, 1
    %p456 = por %p454, %p455
    %p457 = scmp.ne.s32.totalorder %s449, %s452
    %p458 = scmp.eq.s32.totalorder %s25, 0
    %p459 = por %p457, %p458
    %p460 = scmp.ne.s32.totalorder %s449, %s452
    %p461 = scmp.eq.s32.totalorder %s30, 1
    %p462 = por %p460, %p461
    %p463 = scmp.ne.s32.totalorder %s452, %s453
    %p464 = scmp.eq.s32.totalorder %s30, 0
    %p465 = por %p463, %p464
    %p466 = scmp.ne.s32.totalorder %s452, %s453
    %p467 = scmp.eq.s32.totalorder %s31, 1
    %p468 = por %p466, %p467
    %p470 = scmp.ne.s32.totalorder %s453, %s469
    %p471 = scmp.eq.s32.totalorder %s31, 0
    %p472 = por %p470, %p471
    %p473 = scmp.le.s32.totalorder 1, %s25
    %p474 = scmp.lt.s32.totalorder %s25, 3
    %p475 = pnand %p473, %p474
    %p476 = pneg %p475
    // Predicated region
    $region9: #{forward.5} parent=5 // pred_check
      _
    $region10: #{forward.5} parent=5 // pred_check_branch
      %478 = sbr.rel (%p475) target = $region12
    $region11: #{forward.5} parent=5 // pred_region
      %s479 = ssub.s32 %s25, 1
      // Predicated region
      $region13: #{forward.5} parent=11 // pred_check
        %p480 = pneg %p124
      $region14: #{forward.5} parent=11 // pred_check_branch
        %482 = sbr.rel (%p480) target = $region16
      $region15: #{forward.5} parent=11 // pred_region
        _
      $region16: #{forward.5} parent=11 // pred_fallthru
        _
      // Predicated region
      $region17: #{forward.5} parent=11 // pred_check
        %p483 = pneg %p145
      $region18: #{forward.5} parent=11 // pred_check_branch
        %485 = sbr.rel (%p483) target = $region20
      $region19: #{forward.5} parent=11 // pred_region
        _
      $region20: #{forward.5} parent=11 // pred_fallthru
        _
      // Predicated region
      $region21: #{forward.5} parent=11 // pred_check
        %p486 = pneg %p166
      $region22: #{forward.5} parent=11 // pred_check_branch
        %488 = sbr.rel (%p486) target = $region24
      $region23: #{forward.5} parent=11 // pred_region
        _
      $region24: #{forward.5} parent=11 // pred_fallthru
        _
      // Predicated region
      $region25: #{forward.5} parent=11 // pred_check
        %p489 = pneg %p187
      $region26: #{forward.5} parent=11 // pred_check_branch
        %491 = sbr.rel (%p489) target = $region28
      $region27: #{forward.5} parent=11 // pred_region
        _
      $region28: #{forward.5} parent=11 // pred_fallthru
        _
      // Predicated region
      $region29: #{forward.5} parent=11 // pred_check
        %p492 = pneg %p208
      $region30: #{forward.5} parent=11 // pred_check_branch
        %494 = sbr.rel (%p492) target = $region32
      $region31: #{forward.5} parent=11 // pred_region
        _
      $region32: #{forward.5} parent=11 // pred_fallthru
        _
      // Predicated region
      $region33: #{forward.5} parent=11 // pred_check
        %p495 = pneg %p229
      $region34: #{forward.5} parent=11 // pred_check_branch
        %497 = sbr.rel (%p495) target = $region36
      $region35: #{forward.5} parent=11 // pred_region
        _
      $region36: #{forward.5} parent=11 // pred_fallthru
        _
      // Predicated region
      $region37: #{forward.5} parent=11 // pred_check
        %p498 = pneg %p250
      $region38: #{forward.5} parent=11 // pred_check_branch
        %500 = sbr.rel (%p498) target = $region40
      $region39: #{forward.5} parent=11 // pred_region
        _
      $region40: #{forward.5} parent=11 // pred_fallthru
        _
      // Predicated region
      $region41: #{forward.5} parent=11 // pred_check
        %p501 = pneg %p271
      $region42: #{forward.5} parent=11 // pred_check_branch
        %503 = sbr.rel (%p501) target = $region44
      $region43: #{forward.5} parent=11 // pred_region
        _
      $region44: #{forward.5} parent=11 // pred_fallthru
        _
      // Predicated region
      $region45: #{forward.5} parent=11 // pred_check
        %p504 = pneg %p292
      $region46: #{forward.5} parent=11 // pred_check_branch
        %506 = sbr.rel (%p504) target = $region48
      $region47: #{forward.5} parent=11 // pred_region
        _
      $region48: #{forward.5} parent=11 // pred_fallthru
        _
      // Predicated region
      $region49: #{forward.5} parent=11 // pred_check
        %p507 = pneg %p313
      $region50: #{forward.5} parent=11 // pred_check_branch
        %509 = sbr.rel (%p507) target = $region52
      $region51: #{forward.5} parent=11 // pred_region
        _
      $region52: #{forward.5} parent=11 // pred_fallthru
        _
      // Predicated region
      $region53: #{forward.5} parent=11 // pred_check
        %p510 = pneg %p334
      $region54: #{forward.5} parent=11 // pred_check_branch
        %512 = sbr.rel (%p510) target = $region56
      $region55: #{forward.5} parent=11 // pred_region
        _
      $region56: #{forward.5} parent=11 // pred_fallthru
        _
      // Predicated region
      $region57: #{forward.5} parent=11 // pred_check
        %p513 = pneg %p355
      $region58: #{forward.5} parent=11 // pred_check_branch
        %515 = sbr.rel (%p513) target = $region60
      $region59: #{forward.5} parent=11 // pred_region
        _
      $region60: #{forward.5} parent=11 // pred_fallthru
        _
      // Predicated region
      $region61: #{forward.5} parent=11 // pred_check
        %p516 = pneg %p376
      $region62: #{forward.5} parent=11 // pred_check_branch
        %518 = sbr.rel (%p516) target = $region64
      $region63: #{forward.5} parent=11 // pred_region
        _
      $region64: #{forward.5} parent=11 // pred_fallthru
        _
      // Predicated region
      $region65: #{forward.5} parent=11 // pred_check
        %p519 = pneg %p397
      $region66: #{forward.5} parent=11 // pred_check_branch
        %521 = sbr.rel (%p519) target = $region68
      $region67: #{forward.5} parent=11 // pred_region
        _
      $region68: #{forward.5} parent=11 // pred_fallthru
        _
      // Predicated region
      $region69: #{forward.5} parent=11 // pred_check
        %p522 = pneg %p418
      $region70: #{forward.5} parent=11 // pred_check_branch
        %524 = sbr.rel (%p522) target = $region72
      $region71: #{forward.5} parent=11 // pred_region
        _
      $region72: #{forward.5} parent=11 // pred_fallthru
        _
      // Predicated region
      $region73: #{forward.5} parent=11 // pred_check
        %p525 = pneg %p439
      $region74: #{forward.5} parent=11 // pred_check_branch
        %527 = sbr.rel (%p525) target = $region76
      $region75: #{forward.5} parent=11 // pred_region
        _
      $region76: #{forward.5} parent=11 // pred_fallthru
        _
    $region12: #{forward.5} parent=5 // pred_fallthru
      _
    %p528 = scmp.lt.s32.totalorder %s25, 2
    // Predicated region
    $region77: #{forward.5} parent=5 // pred_check
      %p529 = pneg %p528
    $region78: #{forward.5} parent=5 // pred_check_branch
      %531 = sbr.rel (%p529) target = $region80
    $region79: #{forward.5} parent=5 // pred_region
      // Predicated region
      $region81: #{forward.5} parent=79 // pred_check
        %p532 = pneg %p45
      $region82: #{forward.5} parent=79 // pred_check_branch
        %534 = sbr.rel (%p532) target = $region84
      $region83: #{forward.5} parent=79 // pred_region
        %p535 = scmp.lt.s32.totalorder %s25, 1
        %s536 = scalar_select %p535, %s25, 1
        %s537 = smul.addr %s536, 4
        %s538 = scalar_lea.vmem %s0, %s537
      $region84: #{forward.5} parent=79 // pred_fallthru
        _
      // Predicated region
      $region85: #{forward.5} parent=79 // pred_check
        %p539 = pneg %p71
      $region86: #{forward.5} parent=79 // pred_check_branch
        %541 = sbr.rel (%p539) target = $region88
      $region87: #{forward.5} parent=79 // pred_region
        %p542 = scmp.lt.s32.totalorder %s25, 1
        %s543 = scalar_select %p542, %s25, 1
        %s544 = scalar_lea.vmem %s1, %s543
      $region88: #{forward.5} parent=79 // pred_fallthru
        _
      // Predicated region
      $region89: #{forward.5} parent=79 // pred_check
        %p545 = pneg %p97
      $region90: #{forward.5} parent=79 // pred_check_branch
        %547 = sbr.rel (%p545) target = $region92
      $region91: #{forward.5} parent=79 // pred_region
        %p548 = scmp.lt.s32.totalorder %s25, 1
        %s549 = scalar_select %p548, %s25, 1
        %s550 = smul.addr %s549, 8
        %s551 = scalar_lea.vmem %s2, %s550
      $region92: #{forward.5} parent=79 // pred_fallthru
        _
    $region80: #{forward.5} parent=5 // pred_fallthru
      _
    %p552 = scmp.le.s32.totalorder 1, %s25
    %p553 = scmp.lt.s32.totalorder %s25, 3
    %p554 = pnand %p552, %p553
    %p555 = pneg %p554
    // Predicated region
    $region93: #{forward.5} parent=5 // pred_check
      _
    $region94: #{forward.5} parent=5 // pred_check_branch
      %557 = sbr.rel (%p554) target = $region96
    $region95: #{forward.5} parent=5 // pred_region
      %s558 = ssub.s32 %s25, 1
      %p559 = scmp.lt.s32.totalorder %s30, 1
      %s560 = scalar_select %p559, %s30, 1
      %s561 = smul.addr %s560, 4
      %s562 = scalar_lea.vmem %s0, %s561
      %p563 = pneg %p51
      %p564 = pneg %p48
      %p565 = scmp.lt.s32.totalorder %s30, 1
      %s566 = scalar_select %p565, %s30, 1
      %s567 = scalar_lea.vmem %s1, %s566
      %p568 = pneg %p77
      %p569 = pneg %p74
      %p570 = scmp.lt.s32.totalorder %s30, 1
      %s571 = scalar_select %p570, %s30, 1
      %s572 = smul.addr %s571, 8
      %s573 = scalar_lea.vmem %s2, %s572
      %p574 = pneg %p103
      %p575 = pneg %p100
      %p576 = pneg %p124
      %p577 = pneg %p121
      %p578 = pneg %p145
      %p579 = pneg %p142
      %p580 = pneg %p166
      %p581 = pneg %p163
      %p582 = pneg %p187
      %p583 = pneg %p184
      %p584 = pneg %p208
      %p585 = pneg %p205
      %p586 = pneg %p229
      %p587 = pneg %p226
      %p588 = pneg %p250
      %p589 = pneg %p247
      %p590 = pneg %p271
      %p591 = pneg %p268
      %p592 = pneg %p292
      %p593 = pneg %p289
      %p594 = pneg %p313
      %p595 = pneg %p310
      %p596 = pneg %p334
      %p597 = pneg %p331
      %p598 = pneg %p355
      %p599 = pneg %p352
      %p600 = pneg %p376
      %p601 = pneg %p373
      %p602 = pneg %p397
      %p603 = pneg %p394
      %p604 = pneg %p418
      %p605 = pneg %p415
      %p606 = pneg %p439
      %p607 = pneg %p436
      %p608 = pneg %p465
      %p609 = pneg %p462
      %p610 = scmp.lt.s32.totalorder %s30, 1
      %s611 = scalar_select %p610, %s30, 1
      %s612 = smul.addr %s611, 8
      %s613 = scalar_lea.vmem %s19, %s612
      %p614 = scmp.lt.s32.totalorder %s30, 1
      %s615 = scalar_select %p614, %s30, 1
      %s616 = smul.addr %s615, 4
      %s617 = scalar_lea.vmem %s0, %s616
      %p618 = scmp.lt.s32.totalorder %s30, 1
      %s619 = scalar_select %p618, %s30, 1
      %s620 = scalar_lea.vmem %s1, %s619
      %p621 = scmp.lt.s32.totalorder %s30, 1
      %s622 = scalar_select %p621, %s30, 1
      %s623 = smul.addr %s622, 8
      %s624 = scalar_lea.vmem %s2, %s623
      %p625 = scmp.lt.s32.totalorder %s30, 1
      %s626 = scalar_select %p625, %s30, 1
      %s627 = smul.addr %s626, 8
      %s628 = scalar_lea.vmem %s19, %s627
      %v630 = vld [vmem:[%s617] sm:$0xf]
      %v631 = vld [vmem:[%s620] sm:$0x1]
      %v632 = vld [vmem:[%s3] sm:$0xf]
      %v633 = vld [vmem:[%s3 + $0x4] sm:$0xf]
      %v634 = vld [vmem:[%s3 + $0x8] sm:$0xf]
      %v635 = vld [vmem:[%s3 + $0xc] sm:$0xf]
      %v636 = vld [vmem:[%s4] sm:$0x1]
      %v637 = vunpack.c.l.bf16 %v636
      %v638 = vlaneseq
      %v639 = vshrl.u32 %v638, 7
      %v640 = vsub.s32 0, %v639
      %v641 = vrot.slane %v637, %v640
      %v646 = vunpack.c.l.b16 %v632
      %v647 = vunpack.c.l.b16 %v633
      %v648 = vunpack.c.l.b16 %v634
      %v649 = vunpack.c.l.b16 %v635
      %v650 = vpack.c.b16 %v647, %v646
      %v651 = vpack.c.b16 %v649, %v648
      %vm654 = vcmask 261120
      %v656 = vsel %vm654, %v630, 0
      %658 = vmatprep.subr.bf16.mxu0 0
      %659 = vmatpush1.bf16.msra.mxu0 %v650
      %660 = vmatprep.subr.bf16.mxu0 0
      %661 = vmatpush1.bf16.msra.mxu0 %v651
      %662 = vmatprep.subr.bf16.mxu0 0
      %663 = vmatpush1.bf16.msra.mxu0 0
      %664 = vmatprep.subr.bf16.mxu0 0
      %665 = vmatpush1.bf16.msra.mxu0 0
      %666 = vmatprep.subr.bf16.mxu0 0
      %667 = vmatpush1.bf16.msra.mxu0 0
      %668 = vmatprep.subr.bf16.mxu0 0
      %669 = vmatpush1.bf16.msra.mxu0 0
      %670 = vmatprep.subr.bf16.mxu0 0
      %671 = vmatpush1.bf16.msra.mxu0 0
      %672 = vmatprep.subr.bf16.mxu0 0
      %673 = vmatpush1.bf16.msra.mxu0 0
      %674 = vmatprep.subr.bf16.mxu0 0
      %675 = vmatpush1.bf16.msra.mxu0 0
      %676 = vmatprep.subr.bf16.mxu0 0
      %677 = vmatpush1.bf16.msra.mxu0 0
      %678 = vmatprep.subr.bf16.mxu0 0
      %679 = vmatpush1.bf16.msra.mxu0 0
      %680 = vmatprep.subr.bf16.mxu0 0
      %681 = vmatpush1.bf16.msra.mxu0 0
      %682 = vmatprep.subr.bf16.mxu0 0
      %683 = vmatpush1.bf16.msra.mxu0 0
      %684 = vmatprep.subr.bf16.mxu0 0
      %685 = vmatpush1.bf16.msra.mxu0 0
      %686 = vmatprep.subr.bf16.mxu0 0
      %687 = vmatpush1.bf16.msra.mxu0 0
      %688 = vmatprep.subr.bf16.mxu0 0
      %689 = vmatpush1.bf16.msra.mxu0 0
      %690 = vmatprep.mubr.bf16.mxu0 0
      %691 = vmatmul.mubr.bf16.gmra.mrb[0].mxu0 %v656
      %v692 = vpop.f32.mrb[0].mxu0
      %v693 = vadd.f32 %v641, %v692
      %v694 = vpop.f32.mrb[0].mxu0
      %v695 = vpop.f32.mrb[0].mxu0
      %v696 = vpop.f32.mrb[0].mxu0
      %697 = vdwg.mxu0
      %699 = vrot.lane.b32.xlu0 %v693, 120
      %v700 = vpop.permute.xlu0 %699
      %702 = vrot.lane.b32.xlu0 %v693, 112
      %v703 = vpop.permute.xlu0 %702
      %705 = vrot.lane.b32.xlu0 %v693, 104
      %v706 = vpop.permute.xlu0 %705
      %v708 = vcombine.low %v693, %v703
      %v709 = vcombine.high %v693, %v703
      %v711 = vunpack.c.l.s4 1983009808
      %v712 = vunpack.c.0.s8 %v711
      %v713 = vlaneseq
      %v714 = vshrl.u32 %v713, 7
      %v715 = vsub.s32 %v712, %v714
      %v716 = vrot.slane %v708, %v715
      %v718 = vunpack.c.l.s4 1983009808
      %v719 = vunpack.c.0.s8 %v718
      %v720 = vlaneseq
      %v721 = vshrl.u32 %v720, 7
      %v722 = vsub.s32 %v719, %v721
      %v723 = vrot.slane %v709, %v722
      %v724 = vcombine.low %v700, %v706
      %v725 = vcombine.high %v700, %v706
      %v727 = vunpack.c.l.s4 1983009808
      %v728 = vunpack.c.0.s8 %v727
      %v729 = vlaneseq
      %v730 = vshrl.u32 %v729, 7
      %v731 = vsub.s32 %v728, %v730
      %v732 = vrot.slane %v724, %v731
      %v734 = vunpack.c.l.s4 1983009808
      %v735 = vunpack.c.0.s8 %v734
      %v736 = vlaneseq
      %v737 = vshrl.u32 %v736, 7
      %v738 = vsub.s32 %v735, %v737
      %v739 = vrot.slane %v725, %v738
      %v740 = vcombine.low %v716, %v732
      %v741 = vcombine.high %v716, %v732
      %v743 = vunpack.c.l.s4 1934713408
      %v744 = vunpack.c.0.s8 %v743
      %v745 = vlaneseq
      %v746 = vshrl.u32 %v745, 7
      %v747 = vsub.s32 %v744, %v746
      %v748 = vrot.slane %v740, %v747
      %v750 = vunpack.c.l.s4 1934713408
      %v751 = vunpack.c.0.s8 %v750
      %v752 = vlaneseq
      %v753 = vshrl.u32 %v752, 7
      %v754 = vsub.s32 %v751, %v753
      %v755 = vrot.slane %v741, %v754
      %v756 = vcombine.low %v723, %v739
      %v757 = vcombine.high %v723, %v739
      %v759 = vunpack.c.l.s4 1934713408
      %v760 = vunpack.c.0.s8 %v759
      %v761 = vlaneseq
      %v762 = vshrl.u32 %v761, 7
      %v763 = vsub.s32 %v760, %v762
      %v764 = vrot.slane %v756, %v763
      %v766 = vunpack.c.l.s4 1934713408
      %v767 = vunpack.c.0.s8 %v766
      %v768 = vlaneseq
      %v769 = vshrl.u32 %v768, 7
      %v770 = vsub.s32 %v767, %v769
      %v771 = vrot.slane %v757, %v770
      %v772 = vcombine.high %v748, 0.0
      %v773 = vcombine.high %v755, 0.0
      %v774 = vcombine.high %v764, 0.0
      %v775 = vcombine.high %v771, 0.0
      %v776 = vcombine.low %v748, %v755
      %v778 = vunpack.c.l.s4 1983009808
      %v779 = vunpack.c.0.s8 %v778
      %v780 = vlaneseq
      %v781 = vshrl.u32 %v780, 7
      %v782 = vsub.s32 %v779, %v781
      %v783 = vrot.slane %v776, %v782
      %v784 = vcombine.low %v772, %v773
      %v786 = vunpack.c.l.s4 1983009808
      %v787 = vunpack.c.0.s8 %v786
      %v788 = vlaneseq
      %v789 = vshrl.u32 %v788, 7
      %v790 = vsub.s32 %v787, %v789
      %v791 = vrot.slane %v784, %v790
      %v792 = vcombine.low %v764, %v771
      %v794 = vunpack.c.l.s4 1983009808
      %v795 = vunpack.c.0.s8 %v794
      %v796 = vlaneseq
      %v797 = vshrl.u32 %v796, 7
      %v798 = vsub.s32 %v795, %v797
      %v799 = vrot.slane %v792, %v798
      %v800 = vcombine.low %v774, %v775
      %v802 = vunpack.c.l.s4 1983009808
      %v803 = vunpack.c.0.s8 %v802
      %v804 = vlaneseq
      %v805 = vshrl.u32 %v804, 7
      %v806 = vsub.s32 %v803, %v805
      %v807 = vrot.slane %v800, %v806
      %v808 = vcombine.low %v783, %v791
      %v809 = vcombine.high %v783, %v791
      %v811 = vunpack.c.l.s4 1934713408
      %v812 = vunpack.c.0.s8 %v811
      %v813 = vlaneseq
      %v814 = vshrl.u32 %v813, 7
      %v815 = vsub.s32 %v812, %v814
      %v816 = vrot.slane %v808, %v815
      %v818 = vunpack.c.l.s4 1934713408
      %v819 = vunpack.c.0.s8 %v818
      %v820 = vlaneseq
      %v821 = vshrl.u32 %v820, 7
      %v822 = vsub.s32 %v819, %v821
      %v823 = vrot.slane %v809, %v822
      %v824 = vcombine.low %v799, %v807
      %v825 = vcombine.high %v799, %v807
      %v827 = vunpack.c.l.s4 1934713408
      %v828 = vunpack.c.0.s8 %v827
      %v829 = vlaneseq
      %v830 = vshrl.u32 %v829, 7
      %v831 = vsub.s32 %v828, %v830
      %v832 = vrot.slane %v824, %v831
      %v834 = vunpack.c.l.s4 1934713408
      %v835 = vunpack.c.0.s8 %v834
      %v836 = vlaneseq
      %v837 = vshrl.u32 %v836, 7
      %v838 = vsub.s32 %v835, %v837
      %v839 = vrot.slane %v825, %v838
      %v840 = vcombine.low %v816, %v832
      %v841 = vcombine.high %v816, %v832
      %v842 = vcombine.low %v823, %v839
      %v843 = vcombine.high %v823, %v839
      %844 = vrot.lane.b32.xlu0 %v693, 96
      %v845 = vpop.permute.xlu0 %844
      %846 = vrot.lane.b32.xlu0 %v700, 96
      %v847 = vpop.permute.xlu0 %846
      %848 = vrot.lane.b32.xlu0 %v703, 96
      %v849 = vpop.permute.xlu0 %848
      %850 = vrot.lane.b32.xlu0 %v706, 96
      %v851 = vpop.permute.xlu0 %850
      %v856 = vcombine.low %v845, %v849
      %v857 = vcombine.high %v845, %v849
      %v859 = vunpack.c.l.s4 1983009808
      %v860 = vunpack.c.0.s8 %v859
      %v861 = vlaneseq
      %v862 = vshrl.u32 %v861, 7
      %v863 = vsub.s32 %v860, %v862
      %v864 = vrot.slane %v856, %v863
      %v866 = vunpack.c.l.s4 1983009808
      %v867 = vunpack.c.0.s8 %v866
      %v868 = vlaneseq
      %v869 = vshrl.u32 %v868, 7
      %v870 = vsub.s32 %v867, %v869
      %v871 = vrot.slane %v857, %v870
      %v872 = vcombine.low %v847, %v851
      %v873 = vcombine.high %v847, %v851
      %v875 = vunpack.c.l.s4 1983009808
      %v876 = vunpack.c.0.s8 %v875
      %v877 = vlaneseq
      %v878 = vshrl.u32 %v877, 7
      %v879 = vsub.s32 %v876, %v878
      %v880 = vrot.slane %v872, %v879
      %v882 = vunpack.c.l.s4 1983009808
      %v883 = vunpack.c.0.s8 %v882
      %v884 = vlaneseq
      %v885 = vshrl.u32 %v884, 7
      %v886 = vsub.s32 %v883, %v885
      %v887 = vrot.slane %v873, %v886
      %v888 = vcombine.low %v864, %v880
      %v889 = vcombine.high %v864, %v880
      %v891 = vunpack.c.l.s4 1934713408
      %v892 = vunpack.c.0.s8 %v891
      %v893 = vlaneseq
      %v894 = vshrl.u32 %v893, 7
      %v895 = vsub.s32 %v892, %v894
      %v896 = vrot.slane %v888, %v895
      %v898 = vunpack.c.l.s4 1934713408
      %v899 = vunpack.c.0.s8 %v898
      %v900 = vlaneseq
      %v901 = vshrl.u32 %v900, 7
      %v902 = vsub.s32 %v899, %v901
      %v903 = vrot.slane %v889, %v902
      %v904 = vcombine.low %v871, %v887
      %v905 = vcombine.high %v871, %v887
      %v907 = vunpack.c.l.s4 1934713408
      %v908 = vunpack.c.0.s8 %v907
      %v909 = vlaneseq
      %v910 = vshrl.u32 %v909, 7
      %v911 = vsub.s32 %v908, %v910
      %v912 = vrot.slane %v904, %v911
      %v914 = vunpack.c.l.s4 1934713408
      %v915 = vunpack.c.0.s8 %v914
      %v916 = vlaneseq
      %v917 = vshrl.u32 %v916, 7
      %v918 = vsub.s32 %v915, %v917
      %v919 = vrot.slane %v905, %v918
      %v920 = vcombine.high %v896, 0.0
      %v921 = vcombine.high %v903, 0.0
      %v922 = vcombine.high %v912, 0.0
      %v923 = vcombine.high %v919, 0.0
      %v924 = vcombine.low %v896, %v903
      %v926 = vunpack.c.l.s4 1983009808
      %v927 = vunpack.c.0.s8 %v926
      %v928 = vlaneseq
      %v929 = vshrl.u32 %v928, 7
      %v930 = vsub.s32 %v927, %v929
      %v931 = vrot.slane %v924, %v930
      %v932 = vcombine.low %v920, %v921
      %v934 = vunpack.c.l.s4 1983009808
      %v935 = vunpack.c.0.s8 %v934
      %v936 = vlaneseq
      %v937 = vshrl.u32 %v936, 7
      %v938 = vsub.s32 %v935, %v937
      %v939 = vrot.slane %v932, %v938
      %v940 = vcombine.low %v912, %v919
      %v942 = vunpack.c.l.s4 1983009808
      %v943 = vunpack.c.0.s8 %v942
      %v944 = vlaneseq
      %v945 = vshrl.u32 %v944, 7
      %v946 = vsub.s32 %v943, %v945
      %v947 = vrot.slane %v940, %v946
      %v948 = vcombine.low %v922, %v923
      %v950 = vunpack.c.l.s4 1983009808
      %v951 = vunpack.c.0.s8 %v950
      %v952 = vlaneseq
      %v953 = vshrl.u32 %v952, 7
      %v954 = vsub.s32 %v951, %v953
      %v955 = vrot.slane %v948, %v954
      %v956 = vcombine.low %v931, %v939
      %v957 = vcombine.high %v931, %v939
      %v959 = vunpack.c.l.s4 1934713408
      %v960 = vunpack.c.0.s8 %v959
      %v961 = vlaneseq
      %v962 = vshrl.u32 %v961, 7
      %v963 = vsub.s32 %v960, %v962
      %v964 = vrot.slane %v956, %v963
      %v966 = vunpack.c.l.s4 1934713408
      %v967 = vunpack.c.0.s8 %v966
      %v968 = vlaneseq
      %v969 = vshrl.u32 %v968, 7
      %v970 = vsub.s32 %v967, %v969
      %v971 = vrot.slane %v957, %v970
      %v972 = vcombine.low %v947, %v955
      %v973 = vcombine.high %v947, %v955
      %v975 = vunpack.c.l.s4 1934713408
      %v976 = vunpack.c.0.s8 %v975
      %v977 = vlaneseq
      %v978 = vshrl.u32 %v977, 7
      %v979 = vsub.s32 %v976, %v978
      %v980 = vrot.slane %v972, %v979
      %v982 = vunpack.c.l.s4 1934713408
      %v983 = vunpack.c.0.s8 %v982
      %v984 = vlaneseq
      %v985 = vshrl.u32 %v984, 7
      %v986 = vsub.s32 %v983, %v985
      %v987 = vrot.slane %v973, %v986
      %v988 = vcombine.low %v964, %v980
      %v989 = vcombine.high %v964, %v980
      %v990 = vcombine.low %v971, %v987
      %v991 = vcombine.high %v971, %v987
      %992 = vrot.lane.b32.xlu0 %v693, 64
      %v993 = vpop.permute.xlu0 %992
      %994 = vrot.lane.b32.xlu0 %v700, 64
      %v995 = vpop.permute.xlu0 %994
      %996 = vrot.lane.b32.xlu0 %v703, 64
      %v997 = vpop.permute.xlu0 %996
      %998 = vrot.lane.b32.xlu0 %v706, 64
      %v999 = vpop.permute.xlu0 %998
      %v1004 = vcombine.low %v993, %v997
      %v1005 = vcombine.high %v993, %v997
      %v1007 = vunpack.c.l.s4 1983009808
      %v1008 = vunpack.c.0.s8 %v1007
      %v1009 = vlaneseq
      %v1010 = vshrl.u32 %v1009, 7
      %v1011 = vsub.s32 %v1008, %v1010
      %v1012 = vrot.slane %v1004, %v1011
      %v1014 = vunpack.c.l.s4 1983009808
      %v1015 = vunpack.c.0.s8 %v1014
      %v1016 = vlaneseq
      %v1017 = vshrl.u32 %v1016, 7
      %v1018 = vsub.s32 %v1015, %v1017
      %v1019 = vrot.slane %v1005, %v1018
      %v1020 = vcombine.low %v995, %v999
      %v1021 = vcombine.high %v995, %v999
      %v1023 = vunpack.c.l.s4 1983009808
      %v1024 = vunpack.c.0.s8 %v1023
      %v1025 = vlaneseq
      %v1026 = vshrl.u32 %v1025, 7
      %v1027 = vsub.s32 %v1024, %v1026
      %v1028 = vrot.slane %v1020, %v1027
      %v1030 = vunpack.c.l.s4 1983009808
      %v1031 = vunpack.c.0.s8 %v1030
      %v1032 = vlaneseq
      %v1033 = vshrl.u32 %v1032, 7
      %v1034 = vsub.s32 %v1031, %v1033
      %v1035 = vrot.slane %v1021, %v1034
      %v1036 = vcombine.low %v1012, %v1028
      %v1037 = vcombine.high %v1012, %v1028
      %v1039 = vunpack.c.l.s4 1934713408
      %v1040 = vunpack.c.0.s8 %v1039
      %v1041 = vlaneseq
      %v1042 = vshrl.u32 %v1041, 7
      %v1043 = vsub.s32 %v1040, %v1042
      %v1044 = vrot.slane %v1036, %v1043
      %v1046 = vunpack.c.l.s4 1934713408
      %v1047 = vunpack.c.0.s8 %v1046
      %v1048 = vlaneseq
      %v1049 = vshrl.u32 %v1048, 7
      %v1050 = vsub.s32 %v1047, %v1049
      %v1051 = vrot.slane %v1037, %v1050
      %v1052 = vcombine.low %v1019, %v1035
      %v1053 = vcombine.high %v1019, %v1035
      %v1055 = vunpack.c.l.s4 1934713408
      %v1056 = vunpack.c.0.s8 %v1055
      %v1057 = vlaneseq
      %v1058 = vshrl.u32 %v1057, 7
      %v1059 = vsub.s32 %v1056, %v1058
      %v1060 = vrot.slane %v1052, %v1059
      %v1062 = vunpack.c.l.s4 1934713408
      %v1063 = vunpack.c.0.s8 %v1062
      %v1064 = vlaneseq
      %v1065 = vshrl.u32 %v1064, 7
      %v1066 = vsub.s32 %v1063, %v1065
      %v1067 = vrot.slane %v1053, %v1066
      %v1068 = vcombine.high %v1044, 0.0
      %v1069 = vcombine.high %v1051, 0.0
      %v1070 = vcombine.high %v1060, 0.0
      %v1071 = vcombine.high %v1067, 0.0
      %v1072 = vcombine.low %v1044, %v1051
      %v1074 = vunpack.c.l.s4 1983009808
      %v1075 = vunpack.c.0.s8 %v1074
      %v1076 = vlaneseq
      %v1077 = vshrl.u32 %v1076, 7
      %v1078 = vsub.s32 %v1075, %v1077
      %v1079 = vrot.slane %v1072, %v1078
      %v1080 = vcombine.low %v1068, %v1069
      %v1082 = vunpack.c.l.s4 1983009808
      %v1083 = vunpack.c.0.s8 %v1082
      %v1084 = vlaneseq
      %v1085 = vshrl.u32 %v1084, 7
      %v1086 = vsub.s32 %v1083, %v1085
      %v1087 = vrot.slane %v1080, %v1086
      %v1088 = vcombine.low %v1060, %v1067
      %v1090 = vunpack.c.l.s4 1983009808
      %v1091 = vunpack.c.0.s8 %v1090
      %v1092 = vlaneseq
      %v1093 = vshrl.u32 %v1092, 7
      %v1094 = vsub.s32 %v1091, %v1093
      %v1095 = vrot.slane %v1088, %v1094
      %v1096 = vcombine.low %v1070, %v1071
      %v1098 = vunpack.c.l.s4 1983009808
      %v1099 = vunpack.c.0.s8 %v1098
      %v1100 = vlaneseq
      %v1101 = vshrl.u32 %v1100, 7
      %v1102 = vsub.s32 %v1099, %v1101
      %v1103 = vrot.slane %v1096, %v1102
      %v1104 = vcombine.low %v1079, %v1087
      %v1105 = vcombine.high %v1079, %v1087
      %v1107 = vunpack.c.l.s4 1934713408
      %v1108 = vunpack.c.0.s8 %v1107
      %v1109 = vlaneseq
      %v1110 = vshrl.u32 %v1109, 7
      %v1111 = vsub.s32 %v1108, %v1110
      %v1112 = vrot.slane %v1104, %v1111
      %v1114 = vunpack.c.l.s4 1934713408
      %v1115 = vunpack.c.0.s8 %v1114
      %v1116 = vlaneseq
      %v1117 = vshrl.u32 %v1116, 7
      %v1118 = vsub.s32 %v1115, %v1117
      %v1119 = vrot.slane %v1105, %v1118
      %v1120 = vcombine.low %v1095, %v1103
      %v1121 = vcombine.high %v1095, %v1103
      %v1123 = vunpack.c.l.s4 1934713408
      %v1124 = vunpack.c.0.s8 %v1123
      %v1125 = vlaneseq
      %v1126 = vshrl.u32 %v1125, 7
      %v1127 = vsub.s32 %v1124, %v1126
      %v1128 = vrot.slane %v1120, %v1127
      %v1130 = vunpack.c.l.s4 1934713408
      %v1131 = vunpack.c.0.s8 %v1130
      %v1132 = vlaneseq
      %v1133 = vshrl.u32 %v1132, 7
      %v1134 = vsub.s32 %v1131, %v1133
      %v1135 = vrot.slane %v1121, %v1134
      %v1136 = vcombine.low %v1112, %v1128
      %v1137 = vcombine.high %v1112, %v1128
      %v1138 = vcombine.low %v1119, %v1135
      %v1139 = vcombine.high %v1119, %v1135
      %v1140 = vpack.c.bf16 %v840, %v840
      %v1141 = vpack.c.bf16 %v841, %v841
      %v1142 = vpack.c.bf16 %v842, %v842
      %v1143 = vpack.c.bf16 %v843, %v843
      %v1144 = vpack.c.bf16 %v988, %v988
      %v1145 = vpack.c.bf16 %v989, %v989
      %v1146 = vpack.c.bf16 %v990, %v990
      %v1147 = vpack.c.bf16 %v991, %v991
      %vm1148 = vcmask 64512
      %v1150 = vsel %vm1148, %v1140, 0
      %v1153 = vsel %vm1148, %v1144, 0
      %1155 = vmatprep.subr.bf16.mxu0 0
      %1156 = vmatpush1.bf16.xpose.msra.mxu0 %v1153
      %1157 = vmatprep.subr.bf16.mxu0 0
      %1158 = vmatpush1.bf16.xpose.msra.mxu0 0
      %1159 = vmatprep.subr.bf16.mxu0 0
      %1160 = vmatpush1.bf16.xpose.msra.mxu0 0
      %1161 = vmatprep.subr.bf16.mxu0 0
      %1162 = vmatpush1.bf16.xpose.msra.mxu0 0
      %1163 = vmatprep.subr.bf16.mxu0 0
      %1164 = vmatpush1.bf16.xpose.msra.mxu0 0
      %1165 = vmatprep.subr.bf16.mxu0 0
      %1166 = vmatpush1.bf16.xpose.msra.mxu0 0
      %1167 = vmatprep.subr.bf16.mxu0 0
      %1168 = vmatpush1.bf16.xpose.msra.mxu0 0
      %1169 = vmatprep.subr.bf16.mxu0 0
      %1170 = vmatpush1.bf16.xpose.msra.mxu0 0
      %1171 = vmatprep.subr.bf16.mxu0 0
      %1172 = vmatpush1.bf16.xpose.msra.mxu0 0
      %1173 = vmatprep.subr.bf16.mxu0 0
      %1174 = vmatpush1.bf16.xpose.msra.mxu0 0
      %1175 = vmatprep.subr.bf16.mxu0 0
      %1176 = vmatpush1.bf16.xpose.msra.mxu0 0
      %1177 = vmatprep.subr.bf16.mxu0 0
      %1178 = vmatpush1.bf16.xpose.msra.mxu0 0
      %1179 = vmatprep.subr.bf16.mxu0 0
      %1180 = vmatpush1.bf16.xpose.msra.mxu0 0
      %1181 = vmatprep.subr.bf16.mxu0 0
      %1182 = vmatpush1.bf16.xpose.msra.mxu0 0
      %1183 = vmatprep.subr.bf16.mxu0 0
      %1184 = vmatpush1.bf16.xpose.msra.mxu0 0
      %1185 = vmatprep.subr.bf16.mxu0 0
      %1186 = vmatpush1.bf16.xpose.msra.mxu0 0
      %1187 = vmatprep.mubr.bf16.mxu0 0
      %1188 = vmatmul.mubr.bf16.gmra.mrb[0].mxu0 %v1150
      %v1189 = vpop.f32.mrb[0].mxu0
      %v1190 = vadd.f32 0.0, %v1189
      %v1191 = vpop.f32.mrb[0].mxu0
      %v1192 = vpop.f32.mrb[0].mxu0
      %v1193 = vpop.f32.mrb[0].mxu0
      %1194 = vdwg.mxu0
      %v1196 = vsel %vm1148, %v1141, 0
      %v1199 = vsel %vm1148, %v1145, 0
      %1201 = vmatprep.subr.bf16.mxu0 0
      %1202 = vmatpush1.bf16.xpose.msra.mxu0 %v1199
      %1203 = vmatprep.subr.bf16.mxu0 0
      %1204 = vmatpush1.bf16.xpose.msra.mxu0 0
      %1205 = vmatprep.subr.bf16.mxu0 0
      %1206 = vmatpush1.bf16.xpose.msra.mxu0 0
      %1207 = vmatprep.subr.bf16.mxu0 0
      %1208 = vmatpush1.bf16.xpose.msra.mxu0 0
      %1209 = vmatprep.subr.bf16.mxu0 0
      %1210 = vmatpush1.bf16.xpose.msra.mxu0 0
      %1211 = vmatprep.subr.bf16.mxu0 0
      %1212 = vmatpush1.bf16.xpose.msra.mxu0 0
      %1213 = vmatprep.subr.bf16.mxu0 0
      %1214 = vmatpush1.bf16.xpose.msra.mxu0 0
      %1215 = vmatprep.subr.bf16.mxu0 0
      %1216 = vmatpush1.bf16.xpose.msra.mxu0 0
      %1217 = vmatprep.subr.bf16.mxu0 0
      %1218 = vmatpush1.bf16.xpose.msra.mxu0 0
      %1219 = vmatprep.subr.bf16.mxu0 0
      %1220 = vmatpush1.bf16.xpose.msra.mxu0 0
      %1221 = vmatprep.subr.bf16.mxu0 0
      %1222 = vmatpush1.bf16.xpose.msra.mxu0 0
      %1223 = vmatprep.subr.bf16.mxu0 0
      %1224 = vmatpush1.bf16.xpose.msra.mxu0 0
      %1225 = vmatprep.subr.bf16.mxu0 0
      %1226 = vmatpush1.bf16.xpose.msra.mxu0 0
      %1227 = vmatprep.subr.bf16.mxu0 0
      %1228 = vmatpush1.bf16.xpose.msra.mxu0 0
      %1229 = vmatprep.subr.bf16.mxu0 0
      %1230 = vmatpush1.bf16.xpose.msra.mxu0 0
      %1231 = vmatprep.subr.bf16.mxu0 0
      %1232 = vmatpush1.bf16.xpose.msra.mxu0 0
      %1233 = vmatprep.mubr.bf16.mxu0 0
      %1234 = vmatmul.mubr.bf16.gmra.mrb[0].mxu0 %v1196
      %v1235 = vpop.f32.mrb[0].mxu0
      %v1236 = vadd.f32 0.0, %v1235
      %v1237 = vpop.f32.mrb[0].mxu0
      %v1238 = vpop.f32.mrb[0].mxu0
      %v1239 = vpop.f32.mrb[0].mxu0
      %1240 = vdwg.mxu0
      %v1242 = vsel %vm1148, %v1142, 0
      %v1245 = vsel %vm1148, %v1146, 0
      %1247 = vmatprep.subr.bf16.mxu0 0
      %1248 = vmatpush1.bf16.xpose.msra.mxu0 %v1245
      %1249 = vmatprep.subr.bf16.mxu0 0
      %1250 = vmatpush1.bf16.xpose.msra.mxu0 0
      %1251 = vmatprep.subr.bf16.mxu0 0
      %1252 = vmatpush1.bf16.xpose.msra.mxu0 0
      %1253 = vmatprep.subr.bf16.mxu0 0
      %1254 = vmatpush1.bf16.xpose.msra.mxu0 0
      %1255 = vmatprep.subr.bf16.mxu0 0
      %1256 = vmatpush1.bf16.xpose.msra.mxu0 0
      %1257 = vmatprep.subr.bf16.mxu0 0
      %1258 = vmatpush1.bf16.xpose.msra.mxu0 0
      %1259 = vmatprep.subr.bf16.mxu0 0
      %1260 = vmatpush1.bf16.xpose.msra.mxu0 0
      %1261 = vmatprep.subr.bf16.mxu0 0
      %1262 = vmatpush1.bf16.xpose.msra.mxu0 0
      %1263 = vmatprep.subr.bf16.mxu0 0
      %1264 = vmatpush1.bf16.xpose.msra.mxu0 0
      %1265 = vmatprep.subr.bf16.mxu0 0
      %1266 = vmatpush1.bf16.xpose.msra.mxu0 0
      %1267 = vmatprep.subr.bf16.mxu0 0
      %1268 = vmatpush1.bf16.xpose.msra.mxu0 0
      %1269 = vmatprep.subr.bf16.mxu0 0
      %1270 = vmatpush1.bf16.xpose.msra.mxu0 0
      %1271 = vmatprep.subr.bf16.mxu0 0
      %1272 = vmatpush1.bf16.xpose.msra.mxu0 0
      %1273 = vmatprep.subr.bf16.mxu0 0
      %1274 = vmatpush1.bf16.xpose.msra.mxu0 0
      %1275 = vmatprep.subr.bf16.mxu0 0
      %1276 = vmatpush1.bf16.xpose.msra.mxu0 0
      %1277 = vmatprep.subr.bf16.mxu0 0
      %1278 = vmatpush1.bf16.xpose.msra.mxu0 0
      %1279 = vmatprep.mubr.bf16.mxu0 0
      %1280 = vmatmul.mubr.bf16.gmra.mrb[0].mxu0 %v1242
      %v1281 = vpop.f32.mrb[0].mxu0
      %v1282 = vadd.f32 0.0, %v1281
      %v1283 = vpop.f32.mrb[0].mxu0
      %v1284 = vpop.f32.mrb[0].mxu0
      %v1285 = vpop.f32.mrb[0].mxu0
      %1286 = vdwg.mxu0
      %v1288 = vsel %vm1148, %v1143, 0
      %v1291 = vsel %vm1148, %v1147, 0
      %1293 = vmatprep.subr.bf16.mxu0 0
      %1294 = vmatpush1.bf16.xpose.msra.mxu0 %v1291
      %1295 = vmatprep.subr.bf16.mxu0 0
      %1296 = vmatpush1.bf16.xpose.msra.mxu0 0
      %1297 = vmatprep.subr.bf16.mxu0 0
      %1298 = vmatpush1.bf16.xpose.msra.mxu0 0
      %1299 = vmatprep.subr.bf16.mxu0 0
      %1300 = vmatpush1.bf16.xpose.msra.mxu0 0
      %1301 = vmatprep.subr.bf16.mxu0 0
      %1302 = vmatpush1.bf16.xpose.msra.mxu0 0
      %1303 = vmatprep.subr.bf16.mxu0 0
      %1304 = vmatpush1.bf16.xpose.msra.mxu0 0
      %1305 = vmatprep.subr.bf16.mxu0 0
      %1306 = vmatpush1.bf16.xpose.msra.mxu0 0
      %1307 = vmatprep.subr.bf16.mxu0 0
      %1308 = vmatpush1.bf16.xpose.msra.mxu0 0
      %1309 = vmatprep.subr.bf16.mxu0 0
      %1310 = vmatpush1.bf16.xpose.msra.mxu0 0
      %1311 = vmatprep.subr.bf16.mxu0 0
      %1312 = vmatpush1.bf16.xpose.msra.mxu0 0
      %1313 = vmatprep.subr.bf16.mxu0 0
      %1314 = vmatpush1.bf16.xpose.msra.mxu0 0
      %1315 = vmatprep.subr.bf16.mxu0 0
      %1316 = vmatpush1.bf16.xpose.msra.mxu0 0
      %1317 = vmatprep.subr.bf16.mxu0 0
      %1318 = vmatpush1.bf16.xpose.msra.mxu0 0
      %1319 = vmatprep.subr.bf16.mxu0 0
      %1320 = vmatpush1.bf16.xpose.msra.mxu0 0
      %1321 = vmatprep.subr.bf16.mxu0 0
      %1322 = vmatpush1.bf16.xpose.msra.mxu0 0
      %1323 = vmatprep.subr.bf16.mxu0 0
      %1324 = vmatpush1.bf16.xpose.msra.mxu0 0
      %1325 = vmatprep.mubr.bf16.mxu0 0
      %1326 = vmatmul.mubr.bf16.gmra.mrb[0].mxu0 %v1288
      %v1327 = vpop.f32.mrb[0].mxu0
      %v1328 = vadd.f32 0.0, %v1327
      %v1329 = vpop.f32.mrb[0].mxu0
      %v1330 = vpop.f32.mrb[0].mxu0
      %v1331 = vpop.f32.mrb[0].mxu0
      %1332 = vdwg.mxu0
      %v1333 = vmul.f32 %v1190, 0.35355338
      %v1334 = vmul.f32 %v1236, 0.35355338
      %v1335 = vmul.f32 %v1282, 0.35355338
      %v1336 = vmul.f32 %v1328, 0.35355338
      %v1338 = vlaneseq
      %v1339 = vshrl.u32 %v1338, 7
      %v1340 = vsub.s32 0, %v1339
      %v1341 = vrot.slane %v631, %v1340
      %v1343 = vadd.f32 %v1333, %v1341
      %v1344 = vadd.f32 %v1334, %v1341
      %v1345 = vadd.f32 %v1335, %v1341
      %v1346 = vadd.f32 %v1336, %v1341
      %v1347 = vsel %vm1148, %v1343, -inf
      %1348 = vmax.xlane.f32.xlu0 %v1347
      %v1349 = vpop.xlane.xlu0 %1348
      %v1350 = vsel %vm1148, %v1344, -inf
      %1351 = vmax.xlane.f32.xlu0 %v1350
      %v1352 = vpop.xlane.xlu0 %1351
      %v1353 = vsel %vm1148, %v1345, -inf
      %1354 = vmax.xlane.f32.xlu0 %v1353
      %v1355 = vpop.xlane.xlu0 %1354
      %v1356 = vsel %vm1148, %v1346, -inf
      %1357 = vmax.xlane.f32.xlu0 %v1356
      %v1358 = vpop.xlane.xlu0 %1357
      %v1359 = vsub.f32 %v1343, %v1349
      %v1360 = vsub.f32 %v1344, %v1352
      %v1361 = vsub.f32 %v1345, %v1355
      %v1362 = vsub.f32 %v1346, %v1358
      %v1363 = vmul.f32 %v1359, 1.442695
      %v1364 = vpow.pop %v1363
      %v1365 = vmul.f32 %v1360, 1.442695
      %v1366 = vpow.pop %v1365
      %v1367 = vmul.f32 %v1361, 1.442695
      %v1368 = vpow.pop %v1367
      %v1369 = vmul.f32 %v1362, 1.442695
      %v1370 = vpow.pop %v1369
      %v1371 = vsel %vm1148, %v1364, 0.0
      %1372 = vadd.xlane.f32.xlu0 %v1371
      %v1373 = vpop.xlane.xlu0 %1372
      %v1374 = vsel %vm1148, %v1366, 0.0
      %1375 = vadd.xlane.f32.xlu0 %v1374
      %v1376 = vpop.xlane.xlu0 %1375
      %v1377 = vsel %vm1148, %v1368, 0.0
      %1378 = vadd.xlane.f32.xlu0 %v1377
      %v1379 = vpop.xlane.xlu0 %1378
      %v1380 = vsel %vm1148, %v1370, 0.0
      %1381 = vadd.xlane.f32.xlu0 %v1380
      %v1382 = vpop.xlane.xlu0 %1381
      %v1383 = vrcp.pop %v1373
      %v1384 = vrcp.pop %v1376
      %v1385 = vrcp.pop %v1379
      %v1386 = vrcp.pop %v1382
      %v1387 = vmul.f32 %v1364, %v1383
      %v1388 = vmul.f32 %v1366, %v1384
      %v1389 = vmul.f32 %v1368, %v1385
      %v1390 = vmul.f32 %v1370, %v1386
      %v1391 = vpack.c.bf16 %v1387, %v1387
      %v1392 = vpack.c.bf16 %v1388, %v1388
      %v1393 = vpack.c.bf16 %v1389, %v1389
      %v1394 = vpack.c.bf16 %v1390, %v1390
      %v1395 = vpack.c.bf16 %v1136, %v1136
      %v1396 = vpack.c.bf16 %v1137, %v1137
      %v1397 = vpack.c.bf16 %v1138, %v1138
      %v1398 = vpack.c.bf16 %v1139, %v1139
      %v1400 = vsel %vm1148, %v1391, 0
      %vm1402 = vcmask 1043456
      %v1404 = vsel %vm1402, %v1395, 0
      %1406 = vmatprep.subr.bf16.mxu0 0
      %1407 = vmatpush1.bf16.msra.mxu0 %v1404
      %1408 = vmatprep.subr.bf16.mxu0 0
      %1409 = vmatpush1.bf16.msra.mxu0 0
      %1410 = vmatprep.subr.bf16.mxu0 0
      %1411 = vmatpush1.bf16.msra.mxu0 0
      %1412 = vmatprep.subr.bf16.mxu0 0
      %1413 = vmatpush1.bf16.msra.mxu0 0
      %1414 = vmatprep.subr.bf16.mxu0 0
      %1415 = vmatpush1.bf16.msra.mxu0 0
      %1416 = vmatprep.subr.bf16.mxu0 0
      %1417 = vmatpush1.bf16.msra.mxu0 0
      %1418 = vmatprep.subr.bf16.mxu0 0
      %1419 = vmatpush1.bf16.msra.mxu0 0
      %1420 = vmatprep.subr.bf16.mxu0 0
      %1421 = vmatpush1.bf16.msra.mxu0 0
      %1422 = vmatprep.subr.bf16.mxu0 0
      %1423 = vmatpush1.bf16.msra.mxu0 0
      %1424 = vmatprep.subr.bf16.mxu0 0
      %1425 = vmatpush1.bf16.msra.mxu0 0
      %1426 = vmatprep.subr.bf16.mxu0 0
      %1427 = vmatpush1.bf16.msra.mxu0 0
      %1428 = vmatprep.subr.bf16.mxu0 0
      %1429 = vmatpush1.bf16.msra.mxu0 0
      %1430 = vmatprep.subr.bf16.mxu0 0
      %1431 = vmatpush1.bf16.msra.mxu0 0
      %1432 = vmatprep.subr.bf16.mxu0 0
      %1433 = vmatpush1.bf16.msra.mxu0 0
      %1434 = vmatprep.subr.bf16.mxu0 0
      %1435 = vmatpush1.bf16.msra.mxu0 0
      %1436 = vmatprep.subr.bf16.mxu0 0
      %1437 = vmatpush1.bf16.msra.mxu0 0
      %1438 = vmatprep.mubr.bf16.mxu0 0
      %1439 = vmatmul.mubr.bf16.gmra.mrb[0].mxu0 %v1400
      %v1440 = vpop.f32.mrb[0].mxu0
      %v1441 = vadd.f32 0.0, %v1440
      %v1442 = vpop.f32.mrb[0].mxu0
      %v1443 = vpop.f32.mrb[0].mxu0
      %v1444 = vpop.f32.mrb[0].mxu0
      %1445 = vdwg.mxu0
      %v1447 = vsel %vm1148, %v1392, 0
      %v1450 = vsel %vm1402, %v1396, 0
      %1452 = vmatprep.subr.bf16.mxu0 0
      %1453 = vmatpush1.bf16.msra.mxu0 %v1450
      %1454 = vmatprep.subr.bf16.mxu0 0
      %1455 = vmatpush1.bf16.msra.mxu0 0
      %1456 = vmatprep.subr.bf16.mxu0 0
      %1457 = vmatpush1.bf16.msra.mxu0 0
      %1458 = vmatprep.subr.bf16.mxu0 0
      %1459 = vmatpush1.bf16.msra.mxu0 0
      %1460 = vmatprep.subr.bf16.mxu0 0
      %1461 = vmatpush1.bf16.msra.mxu0 0
      %1462 = vmatprep.subr.bf16.mxu0 0
      %1463 = vmatpush1.bf16.msra.mxu0 0
      %1464 = vmatprep.subr.bf16.mxu0 0
      %1465 = vmatpush1.bf16.msra.mxu0 0
      %1466 = vmatprep.subr.bf16.mxu0 0
      %1467 = vmatpush1.bf16.msra.mxu0 0
      %1468 = vmatprep.subr.bf16.mxu0 0
      %1469 = vmatpush1.bf16.msra.mxu0 0
      %1470 = vmatprep.subr.bf16.mxu0 0
      %1471 = vmatpush1.bf16.msra.mxu0 0
      %1472 = vmatprep.subr.bf16.mxu0 0
      %1473 = vmatpush1.bf16.msra.mxu0 0
      %1474 = vmatprep.subr.bf16.mxu0 0
      %1475 = vmatpush1.bf16.msra.mxu0 0
      %1476 = vmatprep.subr.bf16.mxu0 0
      %1477 = vmatpush1.bf16.msra.mxu0 0
      %1478 = vmatprep.subr.bf16.mxu0 0
      %1479 = vmatpush1.bf16.msra.mxu0 0
      %1480 = vmatprep.subr.bf16.mxu0 0
      %1481 = vmatpush1.bf16.msra.mxu0 0
      %1482 = vmatprep.subr.bf16.mxu0 0
      %1483 = vmatpush1.bf16.msra.mxu0 0
      %1484 = vmatprep.mubr.bf16.mxu0 0
      %1485 = vmatmul.mubr.bf16.gmra.mrb[0].mxu0 %v1447
      %v1486 = vpop.f32.mrb[0].mxu0
      %v1487 = vadd.f32 0.0, %v1486
      %v1488 = vpop.f32.mrb[0].mxu0
      %v1489 = vpop.f32.mrb[0].mxu0
      %v1490 = vpop.f32.mrb[0].mxu0
      %1491 = vdwg.mxu0
      %v1493 = vsel %vm1148, %v1393, 0
      %v1496 = vsel %vm1402, %v1397, 0
      %1498 = vmatprep.subr.bf16.mxu0 0
      %1499 = vmatpush1.bf16.msra.mxu0 %v1496
      %1500 = vmatprep.subr.bf16.mxu0 0
      %1501 = vmatpush1.bf16.msra.mxu0 0
      %1502 = vmatprep.subr.bf16.mxu0 0
      %1503 = vmatpush1.bf16.msra.mxu0 0
      %1504 = vmatprep.subr.bf16.mxu0 0
      %1505 = vmatpush1.bf16.msra.mxu0 0
      %1506 = vmatprep.subr.bf16.mxu0 0
      %1507 = vmatpush1.bf16.msra.mxu0 0
      %1508 = vmatprep.subr.bf16.mxu0 0
      %1509 = vmatpush1.bf16.msra.mxu0 0
      %1510 = vmatprep.subr.bf16.mxu0 0
      %1511 = vmatpush1.bf16.msra.mxu0 0
      %1512 = vmatprep.subr.bf16.mxu0 0
      %1513 = vmatpush1.bf16.msra.mxu0 0
      %1514 = vmatprep.subr.bf16.mxu0 0
      %1515 = vmatpush1.bf16.msra.mxu0 0
      %1516 = vmatprep.subr.bf16.mxu0 0
      %1517 = vmatpush1.bf16.msra.mxu0 0
      %1518 = vmatprep.subr.bf16.mxu0 0
      %1519 = vmatpush1.bf16.msra.mxu0 0
      %1520 = vmatprep.subr.bf16.mxu0 0
      %1521 = vmatpush1.bf16.msra.mxu0 0
      %1522 = vmatprep.subr.bf16.mxu0 0
      %1523 = vmatpush1.bf16.msra.mxu0 0
      %1524 = vmatprep.subr.bf16.mxu0 0
      %1525 = vmatpush1.bf16.msra.mxu0 0
      %1526 = vmatprep.subr.bf16.mxu0 0
      %1527 = vmatpush1.bf16.msra.mxu0 0
      %1528 = vmatprep.subr.bf16.mxu0 0
      %1529 = vmatpush1.bf16.msra.mxu0 0
      %1530 = vmatprep.mubr.bf16.mxu0 0
      %1531 = vmatmul.mubr.bf16.gmra.mrb[0].mxu0 %v1493
      %v1532 = vpop.f32.mrb[0].mxu0
      %v1533 = vadd.f32 0.0, %v1532
      %v1534 = vpop.f32.mrb[0].mxu0
      %v1535 = vpop.f32.mrb[0].mxu0
      %v1536 = vpop.f32.mrb[0].mxu0
      %1537 = vdwg.mxu0
      %v1539 = vsel %vm1148, %v1394, 0
      %v1542 = vsel %vm1402, %v1398, 0
      %1544 = vmatprep.subr.bf16.mxu0 0
      %1545 = vmatpush1.bf16.msra.mxu0 %v1542
      %1546 = vmatprep.subr.bf16.mxu0 0
      %1547 = vmatpush1.bf16.msra.mxu0 0
      %1548 = vmatprep.subr.bf16.mxu0 0
      %1549 = vmatpush1.bf16.msra.mxu0 0
      %1550 = vmatprep.subr.bf16.mxu0 0
      %1551 = vmatpush1.bf16.msra.mxu0 0
      %1552 = vmatprep.subr.bf16.mxu0 0
      %1553 = vmatpush1.bf16.msra.mxu0 0
      %1554 = vmatprep.subr.bf16.mxu0 0
      %1555 = vmatpush1.bf16.msra.mxu0 0
      %1556 = vmatprep.subr.bf16.mxu0 0
      %1557 = vmatpush1.bf16.msra.mxu0 0
      %1558 = vmatprep.subr.bf16.mxu0 0
      %1559 = vmatpush1.bf16.msra.mxu0 0
      %1560 = vmatprep.subr.bf16.mxu0 0
      %1561 = vmatpush1.bf16.msra.mxu0 0
      %1562 = vmatprep.subr.bf16.mxu0 0
      %1563 = vmatpush1.bf16.msra.mxu0 0
      %1564 = vmatprep.subr.bf16.mxu0 0
      %1565 = vmatpush1.bf16.msra.mxu0 0
      %1566 = vmatprep.subr.bf16.mxu0 0
      %1567 = vmatpush1.bf16.msra.mxu0 0
      %1568 = vmatprep.subr.bf16.mxu0 0
      %1569 = vmatpush1.bf16.msra.mxu0 0
      %1570 = vmatprep.subr.bf16.mxu0 0
      %1571 = vmatpush1.bf16.msra.mxu0 0
      %1572 = vmatprep.subr.bf16.mxu0 0
      %1573 = vmatpush1.bf16.msra.mxu0 0
      %1574 = vmatprep.subr.bf16.mxu0 0
      %1575 = vmatpush1.bf16.msra.mxu0 0
      %1576 = vmatprep.mubr.bf16.mxu0 0
      %1577 = vmatmul.mubr.bf16.gmra.mrb[0].mxu0 %v1539
      %v1578 = vpop.f32.mrb[0].mxu0
      %v1579 = vadd.f32 0.0, %v1578
      %v1580 = vpop.f32.mrb[0].mxu0
      %v1581 = vpop.f32.mrb[0].mxu0
      %v1582 = vpop.f32.mrb[0].mxu0
      %1583 = vdwg.mxu0
      %v1584 = vcombine.low %v1441, %v1533
      %v1585 = vcombine.high %v1441, %v1533
      %v1587 = vunpack.c.l.s4 1983009808
      %v1588 = vunpack.c.0.s8 %v1587
      %v1589 = vlaneseq
      %v1590 = vshrl.u32 %v1589, 7
      %v1591 = vsub.s32 %v1588, %v1590
      %v1592 = vrot.slane %v1584, %v1591
      %v1594 = vunpack.c.l.s4 1983009808
      %v1595 = vunpack.c.0.s8 %v1594
      %v1596 = vlaneseq
      %v1597 = vshrl.u32 %v1596, 7
      %v1598 = vsub.s32 %v1595, %v1597
      %v1599 = vrot.slane %v1585, %v1598
      %v1600 = vcombine.low %v1487, %v1579
      %v1601 = vcombine.high %v1487, %v1579
      %v1603 = vunpack.c.l.s4 1983009808
      %v1604 = vunpack.c.0.s8 %v1603
      %v1605 = vlaneseq
      %v1606 = vshrl.u32 %v1605, 7
      %v1607 = vsub.s32 %v1604, %v1606
      %v1608 = vrot.slane %v1600, %v1607
      %v1610 = vunpack.c.l.s4 1983009808
      %v1611 = vunpack.c.0.s8 %v1610
      %v1612 = vlaneseq
      %v1613 = vshrl.u32 %v1612, 7
      %v1614 = vsub.s32 %v1611, %v1613
      %v1615 = vrot.slane %v1601, %v1614
      %v1616 = vcombine.low %v1592, %v1608
      %v1617 = vcombine.high %v1592, %v1608
      %v1619 = vunpack.c.l.s4 1934713408
      %v1620 = vunpack.c.0.s8 %v1619
      %v1621 = vlaneseq
      %v1622 = vshrl.u32 %v1621, 7
      %v1623 = vsub.s32 %v1620, %v1622
      %v1624 = vrot.slane %v1616, %v1623
      %v1626 = vunpack.c.l.s4 1934713408
      %v1627 = vunpack.c.0.s8 %v1626
      %v1628 = vlaneseq
      %v1629 = vshrl.u32 %v1628, 7
      %v1630 = vsub.s32 %v1627, %v1629
      %v1631 = vrot.slane %v1617, %v1630
      %v1632 = vcombine.low %v1599, %v1615
      %v1633 = vcombine.high %v1599, %v1615
      %v1635 = vunpack.c.l.s4 1934713408
      %v1636 = vunpack.c.0.s8 %v1635
      %v1637 = vlaneseq
      %v1638 = vshrl.u32 %v1637, 7
      %v1639 = vsub.s32 %v1636, %v1638
      %v1640 = vrot.slane %v1632, %v1639
      %v1642 = vunpack.c.l.s4 1934713408
      %v1643 = vunpack.c.0.s8 %v1642
      %v1644 = vlaneseq
      %v1645 = vshrl.u32 %v1644, 7
      %v1646 = vsub.s32 %v1643, %v1645
      %v1647 = vrot.slane %v1633, %v1646
      %v1648 = vcombine.high %v1624, 0.0
      %v1649 = vcombine.high %v1631, 0.0
      %v1650 = vcombine.high %v1640, 0.0
      %v1651 = vcombine.high %v1647, 0.0
      %v1652 = vcombine.low %v1624, %v1631
      %v1654 = vunpack.c.l.s4 1983009808
      %v1655 = vunpack.c.0.s8 %v1654
      %v1656 = vlaneseq
      %v1657 = vshrl.u32 %v1656, 7
      %v1658 = vsub.s32 %v1655, %v1657
      %v1659 = vrot.slane %v1652, %v1658
      %v1660 = vcombine.low %v1648, %v1649
      %v1662 = vunpack.c.l.s4 1983009808
      %v1663 = vunpack.c.0.s8 %v1662
      %v1664 = vlaneseq
      %v1665 = vshrl.u32 %v1664, 7
      %v1666 = vsub.s32 %v1663, %v1665
      %v1667 = vrot.slane %v1660, %v1666
      %v1668 = vcombine.low %v1640, %v1647
      %v1670 = vunpack.c.l.s4 1983009808
      %v1671 = vunpack.c.0.s8 %v1670
      %v1672 = vlaneseq
      %v1673 = vshrl.u32 %v1672, 7
      %v1674 = vsub.s32 %v1671, %v1673
      %v1675 = vrot.slane %v1668, %v1674
      %v1676 = vcombine.low %v1650, %v1651
      %v1678 = vunpack.c.l.s4 1983009808
      %v1679 = vunpack.c.0.s8 %v1678
      %v1680 = vlaneseq
      %v1681 = vshrl.u32 %v1680, 7
      %v1682 = vsub.s32 %v1679, %v1681
      %v1683 = vrot.slane %v1676, %v1682
      %v1684 = vcombine.low %v1659, %v1667
      %v1685 = vcombine.high %v1659, %v1667
      %v1687 = vunpack.c.l.s4 1934713408
      %v1688 = vunpack.c.0.s8 %v1687
      %v1689 = vlaneseq
      %v1690 = vshrl.u32 %v1689, 7
      %v1691 = vsub.s32 %v1688, %v1690
      %v1692 = vrot.slane %v1684, %v1691
      %v1694 = vunpack.c.l.s4 1934713408
      %v1695 = vunpack.c.0.s8 %v1694
      %v1696 = vlaneseq
      %v1697 = vshrl.u32 %v1696, 7
      %v1698 = vsub.s32 %v1695, %v1697
      %v1699 = vrot.slane %v1685, %v1698
      %v1700 = vcombine.low %v1675, %v1683
      %v1701 = vcombine.high %v1675, %v1683
      %v1703 = vunpack.c.l.s4 1934713408
      %v1704 = vunpack.c.0.s8 %v1703
      %v1705 = vlaneseq
      %v1706 = vshrl.u32 %v1705, 7
      %v1707 = vsub.s32 %v1704, %v1706
      %v1708 = vrot.slane %v1700, %v1707
      %v1710 = vunpack.c.l.s4 1934713408
      %v1711 = vunpack.c.0.s8 %v1710
      %v1712 = vlaneseq
      %v1713 = vshrl.u32 %v1712, 7
      %v1714 = vsub.s32 %v1711, %v1713
      %v1715 = vrot.slane %v1701, %v1714
      %v1716 = vcombine.low %v1692, %v1708
      %v1717 = vcombine.high %v1692, %v1708
      %v1718 = vcombine.low %v1699, %v1715
      %v1719 = vcombine.high %v1699, %v1715
      %1721 = vrot.lane.b32.xlu0 %v1717, 8
      %v1722 = vpop.permute.xlu0 %1721
      %1725 = vrot.lane.b32.xlu0 %v1718, 16
      %v1726 = vpop.permute.xlu0 %1725
      %1729 = vrot.lane.b32.xlu0 %v1719, 24
      %v1730 = vpop.permute.xlu0 %1729
      %v1732 = vsel %vm1148, %v1716, %v1722
      %vm1733 = vcmask 130048
      %v1734 = vsel %vm1733, %v1732, %v1726
      %vm1735 = vcmask 195584
      %v1736 = vsel %vm1735, %v1734, %v1730
      %v1737 = vpack.c.bf16 %v1736, %v1736
      %v1738 = vld [vmem:[%s5] sm:$0xf]
      %v1739 = vld [vmem:[%s5 + $0x4] sm:$0xf]
      %v1740 = vld [vmem:[%s5 + $0x8] sm:$0xf]
      %v1741 = vld [vmem:[%s5 + $0xc] sm:$0xf]
      %v1742 = vld [vmem:[%s6] sm:$0x1]
      %v1743 = vunpack.c.l.bf16 %v1742
      %v1744 = vlaneseq
      %v1745 = vshrl.u32 %v1744, 7
      %v1746 = vsub.s32 0, %v1745
      %v1747 = vrot.slane %v1743, %v1746
      %v1752 = vunpack.c.l.b16 %v1738
      %v1753 = vunpack.c.l.b16 %v1739
      %v1754 = vunpack.c.l.b16 %v1740
      %v1755 = vunpack.c.l.b16 %v1741
      %v1756 = vpack.c.b16 %v1753, %v1752
      %v1757 = vpack.c.b16 %v1755, %v1754
      %v1761 = vsel %vm654, %v1737, 0
      %1763 = vmatprep.subr.bf16.mxu0 0
      %1764 = vmatpush1.bf16.msra.mxu0 %v1756
      %1765 = vmatprep.subr.bf16.mxu0 0
      %1766 = vmatpush1.bf16.msra.mxu0 %v1757
      %1767 = vmatprep.subr.bf16.mxu0 0
      %1768 = vmatpush1.bf16.msra.mxu0 0
      %1769 = vmatprep.subr.bf16.mxu0 0
      %1770 = vmatpush1.bf16.msra.mxu0 0
      %1771 = vmatprep.subr.bf16.mxu0 0
      %1772 = vmatpush1.bf16.msra.mxu0 0
      %1773 = vmatprep.subr.bf16.mxu0 0
      %1774 = vmatpush1.bf16.msra.mxu0 0
      %1775 = vmatprep.subr.bf16.mxu0 0
      %1776 = vmatpush1.bf16.msra.mxu0 0
      %1777 = vmatprep.subr.bf16.mxu0 0
      %1778 = vmatpush1.bf16.msra.mxu0 0
      %1779 = vmatprep.subr.bf16.mxu0 0
      %1780 = vmatpush1.bf16.msra.mxu0 0
      %1781 = vmatprep.subr.bf16.mxu0 0
      %1782 = vmatpush1.bf16.msra.mxu0 0
      %1783 = vmatprep.subr.bf16.mxu0 0
      %1784 = vmatpush1.bf16.msra.mxu0 0
      %1785 = vmatprep.subr.bf16.mxu0 0
      %1786 = vmatpush1.bf16.msra.mxu0 0
      %1787 = vmatprep.subr.bf16.mxu0 0
      %1788 = vmatpush1.bf16.msra.mxu0 0
      %1789 = vmatprep.subr.bf16.mxu0 0
      %1790 = vmatpush1.bf16.msra.mxu0 0
      %1791 = vmatprep.subr.bf16.mxu0 0
      %1792 = vmatpush1.bf16.msra.mxu0 0
      %1793 = vmatprep.subr.bf16.mxu0 0
      %1794 = vmatpush1.bf16.msra.mxu0 0
      %1795 = vmatprep.mubr.bf16.mxu0 0
      %1796 = vmatmul.mubr.bf16.gmra.mrb[0].mxu0 %v1761
      %v1797 = vpop.f32.mrb[0].mxu0
      %v1798 = vadd.f32 %v1747, %v1797
      %v1799 = vpop.f32.mrb[0].mxu0
      %v1800 = vpop.f32.mrb[0].mxu0
      %v1801 = vpop.f32.mrb[0].mxu0
      %1802 = vdwg.mxu0
      %v1803 = vunpack.c.l.bf16 %v630
      %v1804 = vadd.f32 %v1803, %v1798
      %v1805 = vld [vmem:[%s7] sm:$0x1]
      %v1806 = vld [vmem:[%s8] sm:$0x1]
      %v1807 = vsel %vm654, %v1804, 0.0
      %1808 = vadd.xlane.f32.xlu0 %v1807
      %v1809 = vpop.xlane.xlu0 %1808
      %v1810 = vrcp.pop 32.0
      %v1811 = vmul.f32 %v1809, %v1810
      %v1812 = vsub.f32 %v1804, %v1811
      %v1813 = vmul.f32 %v1812, %v1812
      %v1814 = vsel %vm654, %v1813, 0.0
      %1815 = vadd.xlane.f32.xlu0 %v1814
      %v1816 = vpop.xlane.xlu0 %1815
      %v1817 = vmul.f32 %v1816, %v1810
      %v1818 = vadd.f32 %v1817, 1e-05
      %v1819 = vrsqrt.pop %v1818
      %v1820 = vmul.f32 %v1812, %v1819
      %v1822 = vlaneseq
      %v1823 = vshrl.u32 %v1822, 7
      %v1824 = vsub.s32 0, %v1823
      %v1825 = vrot.slane %v1805, %v1824
      %v1827 = vmul.f32 %v1820, %v1825
      %v1829 = vlaneseq
      %v1830 = vshrl.u32 %v1829, 7
      %v1831 = vsub.s32 0, %v1830
      %v1832 = vrot.slane %v1806, %v1831
      %v1834 = vadd.f32 %v1827, %v1832
      %v1835 = vpack.c.bf16 %v1834, %v1834
      %v1836 = vld [vmem:[%s9] sm:$0xf]
      %v1837 = vld [vmem:[%s9 + $0x4] sm:$0xf]
      %v1838 = vld [vmem:[%s9 + $0x8] sm:$0xf]
      %v1839 = vld [vmem:[%s9 + $0xc] sm:$0xf]
      %v1840 = vld [vmem:[%s10] sm:$0x1]
      %v1841 = vunpack.c.l.bf16 %v1840
      %v1842 = vlaneseq
      %v1843 = vshrl.u32 %v1842, 7
      %v1844 = vsub.s32 0, %v1843
      %v1845 = vrot.slane %v1841, %v1844
      %v1850 = vunpack.c.l.b16 %v1836
      %v1851 = vunpack.c.l.b16 %v1837
      %v1852 = vunpack.c.l.b16 %v1838
      %v1853 = vunpack.c.l.b16 %v1839
      %v1854 = vpack.c.b16 %v1851, %v1850
      %v1855 = vpack.c.b16 %v1853, %v1852
      %v1859 = vsel %vm654, %v1835, 0
      %1861 = vmatprep.subr.bf16.mxu0 0
      %1862 = vmatpush1.bf16.msra.mxu0 %v1854
      %1863 = vmatprep.subr.bf16.mxu0 0
      %1864 = vmatpush1.bf16.msra.mxu0 %v1855
      %1865 = vmatprep.subr.bf16.mxu0 0
      %1866 = vmatpush1.bf16.msra.mxu0 0
      %1867 = vmatprep.subr.bf16.mxu0 0
      %1868 = vmatpush1.bf16.msra.mxu0 0
      %1869 = vmatprep.subr.bf16.mxu0 0
      %1870 = vmatpush1.bf16.msra.mxu0 0
      %1871 = vmatprep.subr.bf16.mxu0 0
      %1872 = vmatpush1.bf16.msra.mxu0 0
      %1873 = vmatprep.subr.bf16.mxu0 0
      %1874 = vmatpush1.bf16.msra.mxu0 0
      %1875 = vmatprep.subr.bf16.mxu0 0
      %1876 = vmatpush1.bf16.msra.mxu0 0
      %1877 = vmatprep.subr.bf16.mxu0 0
      %1878 = vmatpush1.bf16.msra.mxu0 0
      %1879 = vmatprep.subr.bf16.mxu0 0
      %1880 = vmatpush1.bf16.msra.mxu0 0
      %1881 = vmatprep.subr.bf16.mxu0 0
      %1882 = vmatpush1.bf16.msra.mxu0 0
      %1883 = vmatprep.subr.bf16.mxu0 0
      %1884 = vmatpush1.bf16.msra.mxu0 0
      %1885 = vmatprep.subr.bf16.mxu0 0
      %1886 = vmatpush1.bf16.msra.mxu0 0
      %1887 = vmatprep.subr.bf16.mxu0 0
      %1888 = vmatpush1.bf16.msra.mxu0 0
      %1889 = vmatprep.subr.bf16.mxu0 0
      %1890 = vmatpush1.bf16.msra.mxu0 0
      %1891 = vmatprep.subr.bf16.mxu0 0
      %1892 = vmatpush1.bf16.msra.mxu0 0
      %1893 = vmatprep.mubr.bf16.mxu0 0
      %1894 = vmatmul.mubr.bf16.gmra.mrb[0].mxu0 %v1859
      %v1895 = vpop.f32.mrb[0].mxu0
      %v1896 = vadd.f32 %v1845, %v1895
      %v1897 = vpop.f32.mrb[0].mxu0
      %v1898 = vpop.f32.mrb[0].mxu0
      %v1899 = vpop.f32.mrb[0].mxu0
      %1900 = vdwg.mxu0
      %v1901 = vmul.f32 %v1896, 0.5
      %v1902 = vmul.f32 %v1896, 0.044715
      %v1903 = vmul.f32 %v1902, %v1896
      %v1904 = vmul.f32 %v1903, %v1896
      %v1905 = vadd.f32 %v1896, %v1904
      %v1906 = vmul.f32 %v1905, 0.7978846
      %v1907 = vtanh.pop %v1906
      %v1908 = vadd.f32 %v1907, 1.0
      %v1909 = vmul.f32 %v1901, %v1908
      %v1910 = vpack.c.bf16 %v1909, %v1909
      %v1911 = vld [vmem:[%s11] sm:$0xf]
      %v1912 = vld [vmem:[%s11 + $0x4] sm:$0xf]
      %v1913 = vld [vmem:[%s11 + $0x8] sm:$0xf]
      %v1914 = vld [vmem:[%s11 + $0xc] sm:$0xf]
      %v1915 = vld [vmem:[%s11 + $0x10] sm:$0xf]
      %v1916 = vld [vmem:[%s11 + $0x14] sm:$0xf]
      %v1917 = vld [vmem:[%s11 + $0x18] sm:$0xf]
      %v1918 = vld [vmem:[%s11 + $0x1c] sm:$0xf]
      %v1919 = vld [vmem:[%s12] sm:$0x1]
      %v1920 = vunpack.c.l.bf16 %v1919
      %v1921 = vlaneseq
      %v1922 = vshrl.u32 %v1921, 7
      %v1923 = vsub.s32 0, %v1922
      %v1924 = vrot.slane %v1920, %v1923
      %v1933 = vunpack.c.l.b16 %v1911
      %v1934 = vunpack.c.l.b16 %v1912
      %v1935 = vunpack.c.l.b16 %v1913
      %v1936 = vunpack.c.l.b16 %v1914
      %v1937 = vunpack.c.l.b16 %v1915
      %v1938 = vunpack.c.l.b16 %v1916
      %v1939 = vunpack.c.l.b16 %v1917
      %v1940 = vunpack.c.l.b16 %v1918
      %v1941 = vpack.c.b16 %v1934, %v1933
      %v1942 = vpack.c.b16 %v1936, %v1935
      %v1943 = vpack.c.b16 %v1938, %v1937
      %v1944 = vpack.c.b16 %v1940, %v1939
      %vm1949 = vcmask 523264
      %v1951 = vsel %vm1949, %v1910, 0
      %1953 = vmatprep.subr.bf16.mxu0 0
      %1954 = vmatpush1.bf16.msra.mxu0 %v1941
      %1955 = vmatprep.subr.bf16.mxu0 0
      %1956 = vmatpush1.bf16.msra.mxu0 %v1942
      %1957 = vmatprep.subr.bf16.mxu0 0
      %1958 = vmatpush1.bf16.msra.mxu0 %v1943
      %1959 = vmatprep.subr.bf16.mxu0 0
      %1960 = vmatpush1.bf16.msra.mxu0 %v1944
      %1961 = vmatprep.subr.bf16.mxu0 0
      %1962 = vmatpush1.bf16.msra.mxu0 0
      %1963 = vmatprep.subr.bf16.mxu0 0
      %1964 = vmatpush1.bf16.msra.mxu0 0
      %1965 = vmatprep.subr.bf16.mxu0 0
      %1966 = vmatpush1.bf16.msra.mxu0 0
      %1967 = vmatprep.subr.bf16.mxu0 0
      %1968 = vmatpush1.bf16.msra.mxu0 0
      %1969 = vmatprep.subr.bf16.mxu0 0
      %1970 = vmatpush1.bf16.msra.mxu0 0
      %1971 = vmatprep.subr.bf16.mxu0 0
      %1972 = vmatpush1.bf16.msra.mxu0 0
      %1973 = vmatprep.subr.bf16.mxu0 0
      %1974 = vmatpush1.bf16.msra.mxu0 0
      %1975 = vmatprep.subr.bf16.mxu0 0
      %1976 = vmatpush1.bf16.msra.mxu0 0
      %1977 = vmatprep.subr.bf16.mxu0 0
      %1978 = vmatpush1.bf16.msra.mxu0 0
      %1979 = vmatprep.subr.bf16.mxu0 0
      %1980 = vmatpush1.bf16.msra.mxu0 0
      %1981 = vmatprep.subr.bf16.mxu0 0
      %1982 = vmatpush1.bf16.msra.mxu0 0
      %1983 = vmatprep.subr.bf16.mxu0 0
      %1984 = vmatpush1.bf16.msra.mxu0 0
      %1985 = vmatprep.mubr.bf16.mxu0 0
      %1986 = vmatmul.mubr.bf16.gmra.mrb[0].mxu0 %v1951
      %v1987 = vpop.f32.mrb[0].mxu0
      %v1988 = vadd.f32 %v1924, %v1987
      %v1989 = vpop.f32.mrb[0].mxu0
      %v1990 = vpop.f32.mrb[0].mxu0
      %v1991 = vpop.f32.mrb[0].mxu0
      %1992 = vdwg.mxu0
      %v1993 = vadd.f32 %v1834, %v1988
      %v1994 = vld [vmem:[%s13] sm:$0x1]
      %v1995 = vld [vmem:[%s14] sm:$0x1]
      %v1996 = vsel %vm654, %v1993, 0.0
      %1997 = vadd.xlane.f32.xlu0 %v1996
      %v1998 = vpop.xlane.xlu0 %1997
      %v1999 = vmul.f32 %v1998, %v1810
      %v2000 = vsub.f32 %v1993, %v1999
      %v2001 = vmul.f32 %v2000, %v2000
      %v2002 = vsel %vm654, %v2001, 0.0
      %2003 = vadd.xlane.f32.xlu0 %v2002
      %v2004 = vpop.xlane.xlu0 %2003
      %v2005 = vmul.f32 %v2004, %v1810
      %v2006 = vadd.f32 %v2005, 1e-05
      %v2007 = vrsqrt.pop %v2006
      %v2008 = vmul.f32 %v2000, %v2007
      %v2010 = vlaneseq
      %v2011 = vshrl.u32 %v2010, 7
      %v2012 = vsub.s32 0, %v2011
      %v2013 = vrot.slane %v1994, %v2012
      %v2015 = vmul.f32 %v2008, %v2013
      %v2017 = vlaneseq
      %v2018 = vshrl.u32 %v2017, 7
      %v2019 = vsub.s32 0, %v2018
      %v2020 = vrot.slane %v1995, %v2019
      %v2022 = vadd.f32 %v2015, %v2020
      %v2023 = vpack.c.bf16 %v2022, %v2022
      %v2024 = vld [vmem:[%s15] sm:$0xf]
      %v2025 = vld [vmem:[%s15 + $0x4] sm:$0xf]
      %v2026 = vld [vmem:[%s15 + $0x8] sm:$0xf]
      %v2027 = vld [vmem:[%s15 + $0xc] sm:$0xf]
      %v2028 = vld [vmem:[%s16] sm:$0x1]
      %v2029 = vunpack.c.l.bf16 %v2028
      %v2030 = vlaneseq
      %v2031 = vshrl.u32 %v2030, 7
      %v2032 = vsub.s32 0, %v2031
      %v2033 = vrot.slane %v2029, %v2032
      %v2038 = vunpack.c.l.b16 %v2024
      %v2039 = vunpack.c.l.b16 %v2025
      %v2040 = vunpack.c.l.b16 %v2026
      %v2041 = vunpack.c.l.b16 %v2027
      %v2042 = vpack.c.b16 %v2039, %v2038
      %v2043 = vpack.c.b16 %v2041, %v2040
      %v2047 = vsel %vm654, %v2023, 0
      %2049 = vmatprep.subr.bf16.mxu0 0
      %2050 = vmatpush1.bf16.msra.mxu0 %v2042
      %2051 = vmatprep.subr.bf16.mxu0 0
      %2052 = vmatpush1.bf16.msra.mxu0 %v2043
      %2053 = vmatprep.subr.bf16.mxu0 0
      %2054 = vmatpush1.bf16.msra.mxu0 0
      %2055 = vmatprep.subr.bf16.mxu0 0
      %2056 = vmatpush1.bf16.msra.mxu0 0
      %2057 = vmatprep.subr.bf16.mxu0 0
      %2058 = vmatpush1.bf16.msra.mxu0 0
      %2059 = vmatprep.subr.bf16.mxu0 0
      %2060 = vmatpush1.bf16.msra.mxu0 0
      %2061 = vmatprep.subr.bf16.mxu0 0
      %2062 = vmatpush1.bf16.msra.mxu0 0
      %2063 = vmatprep.subr.bf16.mxu0 0
      %2064 = vmatpush1.bf16.msra.mxu0 0
      %2065 = vmatprep.subr.bf16.mxu0 0
      %2066 = vmatpush1.bf16.msra.mxu0 0
      %2067 = vmatprep.subr.bf16.mxu0 0
      %2068 = vmatpush1.bf16.msra.mxu0 0
      %2069 = vmatprep.subr.bf16.mxu0 0
      %2070 = vmatpush1.bf16.msra.mxu0 0
      %2071 = vmatprep.subr.bf16.mxu0 0
      %2072 = vmatpush1.bf16.msra.mxu0 0
      %2073 = vmatprep.subr.bf16.mxu0 0
      %2074 = vmatpush1.bf16.msra.mxu0 0
      %2075 = vmatprep.subr.bf16.mxu0 0
      %2076 = vmatpush1.bf16.msra.mxu0 0
      %2077 = vmatprep.subr.bf16.mxu0 0
      %2078 = vmatpush1.bf16.msra.mxu0 0
      %2079 = vmatprep.subr.bf16.mxu0 0
      %2080 = vmatpush1.bf16.msra.mxu0 0
      %2081 = vmatprep.mubr.bf16.mxu0 0
      %2082 = vmatmul.mubr.bf16.gmra.mrb[0].mxu0 %v2047
      %v2083 = vpop.f32.mrb[0].mxu0
      %v2084 = vadd.f32 %v2033, %v2083
      %v2085 = vpop.f32.mrb[0].mxu0
      %v2086 = vpop.f32.mrb[0].mxu0
      %v2087 = vpop.f32.mrb[0].mxu0
      %2088 = vdwg.mxu0
      %v2089 = vmax.f32 %v2084, 0.0
      %v2090 = vpack.c.bf16 %v2089, %v2089
      %v2091 = vld [vmem:[%s17] sm:$0xf]
      %v2092 = vld [vmem:[%s17 + $0x4] sm:$0xf]
      %v2093 = vld [vmem:[%s17 + $0x8] sm:$0xf]
      %v2094 = vld [vmem:[%s17 + $0xc] sm:$0xf]
      %v2095 = vld [vmem:[%s18] sm:$0x1]
      %v2096 = vunpack.c.l.bf16 %v2095
      %v2097 = vlaneseq
      %v2098 = vshrl.u32 %v2097, 7
      %v2099 = vsub.s32 0, %v2098
      %v2100 = vrot.slane %v2096, %v2099
      %v2105 = vunpack.c.l.b16 %v2091
      %v2106 = vunpack.c.l.b16 %v2092
      %v2107 = vunpack.c.l.b16 %v2093
      %v2108 = vunpack.c.l.b16 %v2094
      %v2109 = vpack.c.b16 %v2106, %v2105
      %v2110 = vpack.c.b16 %v2108, %v2107
      %v2114 = vsel %vm654, %v2090, 0
      %2116 = vmatprep.subr.bf16.mxu0 0
      %2117 = vmatpush1.bf16.msra.mxu0 %v2109
      %2118 = vmatprep.subr.bf16.mxu0 0
      %2119 = vmatpush1.bf16.msra.mxu0 %v2110
      %2120 = vmatprep.subr.bf16.mxu0 0
      %2121 = vmatpush1.bf16.msra.mxu0 0
      %2122 = vmatprep.subr.bf16.mxu0 0
      %2123 = vmatpush1.bf16.msra.mxu0 0
      %2124 = vmatprep.subr.bf16.mxu0 0
      %2125 = vmatpush1.bf16.msra.mxu0 0
      %2126 = vmatprep.subr.bf16.mxu0 0
      %2127 = vmatpush1.bf16.msra.mxu0 0
      %2128 = vmatprep.subr.bf16.mxu0 0
      %2129 = vmatpush1.bf16.msra.mxu0 0
      %2130 = vmatprep.subr.bf16.mxu0 0
      %2131 = vmatpush1.bf16.msra.mxu0 0
      %2132 = vmatprep.subr.bf16.mxu0 0
      %2133 = vmatpush1.bf16.msra.mxu0 0
      %2134 = vmatprep.subr.bf16.mxu0 0
      %2135 = vmatpush1.bf16.msra.mxu0 0
      %2136 = vmatprep.subr.bf16.mxu0 0
      %2137 = vmatpush1.bf16.msra.mxu0 0
      %2138 = vmatprep.subr.bf16.mxu0 0
      %2139 = vmatpush1.bf16.msra.mxu0 0
      %2140 = vmatprep.subr.bf16.mxu0 0
      %2141 = vmatpush1.bf16.msra.mxu0 0
      %2142 = vmatprep.subr.bf16.mxu0 0
      %2143 = vmatpush1.bf16.msra.mxu0 0
      %2144 = vmatprep.subr.bf16.mxu0 0
      %2145 = vmatpush1.bf16.msra.mxu0 0
      %2146 = vmatprep.subr.bf16.mxu0 0
      %2147 = vmatpush1.bf16.msra.mxu0 0
      %2148 = vmatprep.mubr.bf16.mxu0 0
      %2149 = vmatmul.mubr.bf16.gmra.mrb[0].mxu0 %v2114
      %v2150 = vpop.f32.mrb[0].mxu0
      %v2151 = vadd.f32 %v2100, %v2150
      %v2152 = vpop.f32.mrb[0].mxu0
      %v2153 = vpop.f32.mrb[0].mxu0
      %v2154 = vpop.f32.mrb[0].mxu0
      %2155 = vdwg.mxu0
      %v2156 = vld [vmem:[%s624] sm:$0xff]
      %2158 = vset.pattern.permute.xlu0 0
      %2159 = vperm.xlu0 %2158, %v2156
      %v2160 = vpop.permute.xlu0 %2159
      %v2162 = vmul.f32 %v2151, %v2160
      %vm2163 = vcmask 31744
      %2164 = vst.msk [vmem:[%s628] sm:$0xff] %vm2163, %v2162
      %p2165 = scmp.lt.s32.totalorder %s30, 1
      %s2166 = scalar_select %p2165, %s30, 1
      %s2167 = smul.addr %s2166, 8
      %s2168 = scalar_lea.vmem %s19, %s2167
      // Predicated region
      $region97: #{forward.5} parent=95 // pred_check
        %p2169 = pneg %p462
      $region98: #{forward.5} parent=95 // pred_check_branch
        %2171 = sbr.rel (%p2169) target = $region100
      $region99: #{forward.5} parent=95 // pred_region
        _
      $region100: #{forward.5} parent=95 // pred_fallthru
        _
    $region96: #{forward.5} parent=5 // pred_fallthru
      _
    %p2172 = scmp.le.s32.totalorder 2, %s25
    // Predicated region
    $region101: #{forward.5} parent=5 // pred_check
      %p2173 = pneg %p2172
    $region102: #{forward.5} parent=5 // pred_check_branch
      %2175 = sbr.rel (%p2173) target = $region104
    $region103: #{forward.5} parent=5 // pred_region
      %s2176 = ssub.s32 %s25, 2
      // Predicated region
      $region105: #{forward.5} parent=103 // pred_check
        %p2177 = pneg %p468
      $region106: #{forward.5} parent=103 // pred_check_branch
        %2179 = sbr.rel (%p2177) target = $region108
      $region107: #{forward.5} parent=103 // pred_region
        %p2180 = scmp.lt.s32.totalorder %s31, 1
        %s2181 = scalar_select %p2180, %s31, 1
        %s2182 = smul.addr %s2181, 8
        %s2183 = scalar_lea.vmem %s19, %s2182
      $region108: #{forward.5} parent=103 // pred_fallthru
        _
    $region104: #{forward.5} parent=5 // pred_fallthru
      _
  $region6: #{forward.5} parent=0 // loop_footer
    %s29 = sadd.s32 1, %s25
  $region7: #{forward.5} parent=0 // loop_footer_branch
    %24 = sbr.rel target = $region3
  $region8: #{forward.5} parent=0 // loop_exit
    _

</llo_original>
